<compile_context>
chip_gen: v6e
topology: v6e:2x2x1
jax: 0.10.0
libtpu: 0.0.40
codegen_flags: <defaults>
</compile_context>

<pallas_src>
import functools

import jax
import jax.numpy as jnp
from jax.experimental import pallas as pl
from jax.experimental.pallas import tpu as pltpu


def _round_up(x, m):
    return ((x + m - 1) // m) * m


def _pad_gates(w, h, h_pad, axis):
    """Zero-pad each of the 4 stacked gate blocks (size h) along `axis` to h_pad."""
    if h_pad == h:
        return w
    blocks = jnp.split(w, 4, axis=axis)
    pads = [(0, 0)] * w.ndim
    pads[axis] = (0, h_pad - h)
    return jnp.concatenate([jnp.pad(b, pads) for b in blocks], axis=axis)


def lstm_sentiment_kernel(x_ref, wih_ref, whh_ref, b_ref, wout_ref, bout_ref,
                          out_ref, gx_ref, h_ref, c_ref,
                          *, t_chunk, b_tile, seq_len, h_pad, unroll):
    """One (batch_tile, time_chunk) grid step.

    x_ref    : (T_CHUNK, B_TILE, E)       bf16  embedded inputs for this chunk
    wih_ref  : (E, 4*H_pad)               bf16  W_ih^T (gate blocks padded to H_pad)
    whh_ref  : (H_pad, 4*H_pad)           bf16  W_hh^T
    b_ref    : (1, 4*H_pad)               f32   b_ih + b_hh
    wout_ref : (H_pad, L)                 f32   W_out^T
    bout_ref : (1, L)                     f32   b_out
    out_ref  : (B_TILE, L)                f32   logits for this batch tile
    gx_ref   : (T_CHUNK*B_TILE, 4*H_pad)  bf16  per-chunk hoisted input projection
    h_ref/c_ref : (B_TILE, H_pad)         f32   recurrent state (persists across chunks)
    """
    tc = pl.program_id(1)

    @pl.when(tc == 0)
    def _():
        h_ref[...] = jnp.zeros_like(h_ref)
        c_ref[...] = jnp.zeros_like(c_ref)

    # Hoisted, time-parallel input projection for this chunk: one MXU matmul.
    e = x_ref.shape[-1]
    x2 = x_ref[...].reshape(t_chunk * b_tile, e)
    gx_ref[...] = jnp.dot(x2, wih_ref[...],
                          preferred_element_type=jnp.float32).astype(gx_ref.dtype)

    bias = b_ref[...]                                   # (1, 4*H_pad) f32
    H = h_pad

    def step(t, carry):
        h_prev = h_ref[...]
        c_prev = c_ref[...]
        row = pl.multiple_of(t * b_tile, b_tile)        # sublane-aligned chunk row
        gates = (gx_ref[pl.ds(row, b_tile), :].astype(jnp.float32)
                 + bias
                 + jnp.dot(h_prev.astype(whh_ref.dtype), whh_ref[...],
                           preferred_element_type=jnp.float32))
        # PyTorch gate order [i, f, g, o]; every slice is a full 128-lane block.
        i_g = jax.nn.sigmoid(gates[:, 0 * H:1 * H])
        f_g = jax.nn.sigmoid(gates[:, 1 * H:2 * H])
        g_g = jnp.tanh(gates[:, 2 * H:3 * H])
        o_g = jax.nn.sigmoid(gates[:, 3 * H:4 * H])
        c_new = f_g * c_prev + i_g * g_g
        h_new = o_g * jnp.tanh(c_new)
        if seq_len % t_chunk != 0:                      # static: mask padded tail steps
            m = ((tc * t_chunk + t) < seq_len).astype(h_new.dtype)
            h_new = m * h_new + (1.0 - m) * h_prev      # bit-exact blend (m is 0 or 1)
            c_new = m * c_new + (1.0 - m) * c_prev
        h_ref[...] = h_new
        c_ref[...] = c_new
        return carry

    jax.lax.fori_loop(0, t_chunk, step, 0, unroll=unroll)

    # hidden_to_label on lstm_out[-1]; written once per batch tile.
    @pl.when(tc == pl.num_programs(1) - 1)
    def _():
        out_ref[...] = (jnp.dot(h_ref[...], wout_ref[...],
                                preferred_element_type=jnp.float32)
                        + bout_ref[...])


def lstm_sentiment_forward(tokens, embed_table, w_ih, w_hh, b_ih, b_hh,
                           w_out, b_out):
    """tokens (T, B) int32; params in PyTorch layout. Returns (B, num_labels) f32."""
    T, B = tokens.shape
    E = embed_table.shape[1]
    H = w_hh.shape[1]
    L = w_out.shape[0]

    # --- Parameter prep: transpose to (in, out), zero-pad each gate block of the
    #     hidden dim to a lane-dense multiple of 128, cast MXU operands to bf16.
    #     Padded columns/rows are zero, so padded state stays exactly zero. ---
    H_pad = _round_up(max(H, 128), 128)
    w_ih_p = _pad_gates(w_ih.T, H, H_pad, axis=1).astype(jnp.bfloat16)        # (E, 4H_pad)
    w_hh_p = _pad_gates(w_hh.T, H, H_pad, axis=1)                             # (H, 4H_pad)
    w_hh_p = jnp.pad(w_hh_p, ((0, H_pad - H), (0, 0))).astype(jnp.bfloat16)   # (H_pad, 4H_pad)
    b_p = _pad_gates((b_ih + b_hh).reshape(1, 4 * H), H, H_pad,
                     axis=1).astype(jnp.float32)                              # (1, 4H_pad)
    w_out_p = jnp.pad(w_out.T.astype(jnp.float32), ((0, H_pad - H), (0, 0)))  # (H_pad, L)
    b_out_p = b_out.reshape(1, L).astype(jnp.float32)

    # --- Embedding lookup (padding_idx=1 row is zero in the table). ---
    # TODO(synk): fuse this gather into the kernel (scalar-prefetched token ids +
    # per-chunk DMA gather) to drop the T*B*E HBM round-trip.
    vecs = jnp.take(embed_table, tokens, axis=0).astype(jnp.bfloat16)         # (T, B, E)

    # --- Tiling: batch tiles (parallel, feeds v7x's 2 TCs) x time chunks (arbitrary).
    B_pad8 = max(8, _round_up(B, 8))
    B_TILE = min(B_pad8, 64)
    B_pad = _round_up(B_pad8, B_TILE)

    # Size T_CHUNK so per-chunk activations (double-buffered bf16 x + bf16 gx)
    # stay around <= 8 MiB: fits v7x's 64 MiB physical VMEM with margin.
    per_step_bytes = B_TILE * (2 * 2 * E + 2 * 4 * H_pad)
    T_CHUNK = max(1, min(T, 64, (8 << 20) // max(per_step_bytes, 1)))
    T_pad = _round_up(T, T_CHUNK)

    # Pad: extra batch rows are zero inputs (sliced off below); extra tail
    # timesteps are masked inside the kernel so they never touch h/c.
    vecs = jnp.pad(vecs, ((0, T_pad - T), (0, B_pad - B), (0, 0)))

    num_bt = B_pad // B_TILE
    num_tc = T_pad // T_CHUNK

    # Scoped-VMEM limit from the actual footprint (+headroom); defaults are 16/32 MiB.
    weight_bytes = 2 * ((E + H_pad) * 4 * H_pad * 2 + 4 * H_pad * 4
                        + H_pad * L * 4 + L * 4)
    act_bytes = 2 * T_CHUNK * B_TILE * E * 2 + T_CHUNK * B_TILE * 4 * H_pad * 2
    state_bytes = 2 * B_TILE * H_pad * 4 + 2 * B_TILE * L * 4
    footprint = weight_bytes + act_bytes + state_bytes
    vmem_limit = int(min(max(footprint + (8 << 20), 32 << 20), 56 << 20))

    kernel = functools.partial(
        lstm_sentiment_kernel, t_chunk=T_CHUNK, b_tile=B_TILE, seq_len=T,
        h_pad=H_pad, unroll=(T_CHUNK if T_CHUNK <= 8 else 4))

    const = lambda bt, tc: (0, 0)
    logits_pad = pl.pallas_call(
        kernel,
        out_shape=jax.ShapeDtypeStruct((B_pad, L), jnp.float32),
        grid_spec=pltpu.PrefetchScalarGridSpec(
            num_scalar_prefetch=0,
            grid=(num_bt, num_tc),
            in_specs=[
                pl.BlockSpec((T_CHUNK, B_TILE, E), lambda bt, tc: (tc, bt, 0)),
                pl.BlockSpec((E, 4 * H_pad), const),        # weights: constant maps,
                pl.BlockSpec((H_pad, 4 * H_pad), const),    # DMA'd once, stay resident
                pl.BlockSpec((1, 4 * H_pad), const),
                pl.BlockSpec((H_pad, L), const),
                pl.BlockSpec((1, L), const),
            ],
            out_specs=pl.BlockSpec((B_TILE, L), lambda bt, tc: (bt, 0)),
            scratch_shapes=[
                pltpu.VMEM((T_CHUNK * B_TILE, 4 * H_pad), jnp.bfloat16),  # gx
                pltpu.VMEM((B_TILE, H_pad), jnp.float32),                 # h
                pltpu.VMEM((B_TILE, H_pad), jnp.float32),                 # c
            ],
        ),
        compiler_params=pltpu.CompilerParams(
            dimension_semantics=("parallel", "arbitrary"),
            vmem_limit_bytes=vmem_limit,
        ),
    )(vecs, w_ih_p, w_hh_p, b_p, w_out_p, b_out_p)

    return logits_pad[:B]


if __name__ == "__main__":
    # Small config consistent with LSTMSentiment.__init__
    vocab_size = 50        # config.n_embed
    emb_dim = 32           # config.d_embed
    hidden_dim = 32        # config.d_hidden
    num_labels = 2         # config.d_out
    seq_len = 8
    batch = 2

    key = jax.random.PRNGKey(0)
    k_emb, k_wih, k_whh, k_bih, k_bhh, k_wo, k_bo, k_tok = jax.random.split(key, 8)

    # Embedding table with padding_idx=1 row zeroed (as nn.Embedding does).
    embed_table = 0.1 * jax.random.normal(k_emb, (vocab_size, emb_dim), jnp.float32)
    embed_table = embed_table.at[1].set(0.0)

    # LSTM parameters, PyTorch layout (4H, E) / (4H, H), gate order [i, f, g, o].
    w_ih = 0.1 * jax.random.normal(k_wih, (4 * hidden_dim, emb_dim), jnp.float32)
    w_hh = 0.1 * jax.random.normal(k_whh, (4 * hidden_dim, hidden_dim), jnp.float32)
    b_ih = 0.1 * jax.random.normal(k_bih, (4 * hidden_dim,), jnp.float32)
    b_hh = 0.1 * jax.random.normal(k_bhh, (4 * hidden_dim,), jnp.float32)

    # hidden_to_label Linear: weight (L, H), bias (L,)
    w_out = 0.1 * jax.random.normal(k_wo, (num_labels, hidden_dim), jnp.float32)
    b_out = 0.1 * jax.random.normal(k_bo, (num_labels,), jnp.float32)

    # Token ids (T, B), include some padding_idx=1 tokens.
    tokens = jax.random.randint(k_tok, (seq_len, batch), 0, vocab_size, jnp.int32)
    tokens = tokens.at[0, 0].set(1)

    logits = lstm_sentiment_forward(tokens, embed_table, w_ih, w_hh, b_ih, b_hh,
                                    w_out, b_out)
    jax.block_until_ready(logits)
    assert logits.shape == (batch, num_labels)
    assert bool(jnp.all(jnp.isfinite(logits)))
    print("KERNEL_OK")
</pallas_src>

<mosaic_0001>
module attributes {stable_mosaic.version = 11 : i64} {
  func.func @lstm_sentiment_kernel(%arg0: i32, %arg1: i32, %arg2: memref<8x8x32xbf16, #tpu.memory_space<vmem>>, %arg3: memref<32x512xbf16, #tpu.memory_space<vmem>>, %arg4: memref<128x512xbf16, #tpu.memory_space<vmem>>, %arg5: memref<1x512xf32, #tpu.memory_space<vmem>>, %arg6: memref<128x2xf32, #tpu.memory_space<vmem>>, %arg7: memref<1x2xf32, #tpu.memory_space<vmem>>, %arg8: memref<8x2xf32, #tpu.memory_space<vmem>>, %arg9: memref<64x512xbf16, #tpu.memory_space<vmem>>, %arg10: memref<8x128xf32, #tpu.memory_space<vmem>>, %arg11: memref<8x128xf32, #tpu.memory_space<vmem>>) attributes {dimension_semantics = [#tpu.dimension_semantics<parallel>, #tpu.dimension_semantics<arbitrary>], iteration_bounds = array<i64: 1, 1>, scalar_prefetch = 0 : i64, scratch_operands = 3 : i64, tpu.core_type = #tpu.core_type<tc>, window_params = [{transform_indices = @transform_0, window_bounds = array<i64: 8, 8, 32>}, {pipeline_mode = #tpu.pipeline_mode<synchronous>, transform_indices = @transform_1, window_bounds = array<i64: 32, 512>}, {pipeline_mode = #tpu.pipeline_mode<synchronous>, transform_indices = @transform_2, window_bounds = array<i64: 128, 512>}, {pipeline_mode = #tpu.pipeline_mode<synchronous>, transform_indices = @transform_3, window_bounds = array<i64: 1, 512>}, {pipeline_mode = #tpu.pipeline_mode<synchronous>, transform_indices = @transform_4, window_bounds = array<i64: 128, 2>}, {pipeline_mode = #tpu.pipeline_mode<synchronous>, transform_indices = @transform_5, window_bounds = array<i64: 1, 2>}, {transform_indices = @transform_6, window_bounds = array<i64: 8, 2>}]} {
    %c0_i32 = arith.constant 0 : i32
    %0 = arith.cmpi eq, %arg1, %c0_i32 : i32
    %1 = arith.extui %0 : i1 to i32
    %c0_i32_0 = arith.constant 0 : i32
    %2 = arith.cmpi ne, %1, %c0_i32_0 : i32
    scf.if %2 {
      %cst_140 = arith.constant 0.000000e+00 : f32
      %333 = vector.broadcast %cst_140 : f32 to vector<8x128xf32>
      %c0_141 = arith.constant 0 : index
      %c0_142 = arith.constant 0 : index
      %334 = vector.load %arg10[%c0_141, %c0_142] : memref<8x128xf32, #tpu.memory_space<vmem>>, vector<8x128xf32>
      tpu.vector_store %arg10[%c0_141, %c0_142], %333 {strides = array<i32>} : memref<8x128xf32, #tpu.memory_space<vmem>>, vector<8x128xf32>,
      %cst_143 = arith.constant 0.000000e+00 : f32
      %335 = vector.broadcast %cst_143 : f32 to vector<8x128xf32>
      %c0_144 = arith.constant 0 : index
      %c0_145 = arith.constant 0 : index
      %336 = vector.load %arg11[%c0_144, %c0_145] : memref<8x128xf32, #tpu.memory_space<vmem>>, vector<8x128xf32>
      tpu.vector_store %arg11[%c0_144, %c0_145], %335 {strides = array<i32>} : memref<8x128xf32, #tpu.memory_space<vmem>>, vector<8x128xf32>,
    } else {
    }
    %c0 = arith.constant 0 : index
    %c0_1 = arith.constant 0 : index
    %c0_2 = arith.constant 0 : index
    %3 = vector.load %arg2[%c0, %c0_1, %c0_2] : memref<8x8x32xbf16, #tpu.memory_space<vmem>>, vector<8x8x32xbf16>
    %4 = vector.shape_cast %3 : vector<8x8x32xbf16> to vector<64x32xbf16>
    %c0_3 = arith.constant 0 : index
    %c0_4 = arith.constant 0 : index
    %5 = vector.load %arg3[%c0_3, %c0_4] : memref<32x512xbf16, #tpu.memory_space<vmem>>, vector<32x512xbf16>
    %cst = arith.constant dense<0.000000e+00> : vector<64x512xf32>
    %6 = tpu.matmul %4, %5, %cst {dimension_numbers = #tpu.dot_dimension_numbers<[1], [0], [0], [1], [0, 0, 1, 1], [], []>} : vector<64x32xbf16>, vector<32x512xbf16>, vector<64x512xf32> -> vector<64x512xf32>
    %7 = arith.truncf %6 : vector<64x512xf32> to vector<64x512xbf16>
    %c0_5 = arith.constant 0 : index
    %c0_6 = arith.constant 0 : index
    %8 = vector.load %arg9[%c0_5, %c0_6] : memref<64x512xbf16, #tpu.memory_space<vmem>>, vector<64x512xbf16>
    tpu.vector_store %arg9[%c0_5, %c0_6], %7 {strides = array<i32>} : memref<64x512xbf16, #tpu.memory_space<vmem>>, vector<64x512xbf16>,
    %c0_7 = arith.constant 0 : index
    %c0_8 = arith.constant 0 : index
    %9 = vector.load %arg5[%c0_7, %c0_8] : memref<1x512xf32, #tpu.memory_space<vmem>>, vector<1x512xf32>
    %c0_i32_9 = arith.constant 0 : i32
    %c0_10 = arith.constant 0 : index
    %c0_11 = arith.constant 0 : index
    %10 = vector.load %arg10[%c0_10, %c0_11] : memref<8x128xf32, #tpu.memory_space<vmem>>, vector<8x128xf32>
    %c0_12 = arith.constant 0 : index
    %c0_13 = arith.constant 0 : index
    %11 = vector.load %arg11[%c0_12, %c0_13] : memref<8x128xf32, #tpu.memory_space<vmem>>, vector<8x128xf32>
    %c8_i32 = arith.constant 8 : i32
    %12 = arith.muli %c0_i32_9, %c8_i32 : i32
    %13 = tpu.assume_multiple %12, 8 : i32
    %14 = arith.index_cast %13 : i32 to index
    %c0_14 = arith.constant 0 : index
    %15 = vector.load %arg9[%14, %c0_14] : memref<64x512xbf16, #tpu.memory_space<vmem>>, vector<8x512xbf16>
    %16 = arith.extf %15 : vector<8x512xbf16> to vector<8x512xf32>
    %17 = vector.broadcast %9 : vector<1x512xf32> to vector<8x512xf32>
    %18 = arith.addf %16, %17 : vector<8x512xf32>
    %19 = arith.truncf %10 : vector<8x128xf32> to vector<8x128xbf16>
    %c0_15 = arith.constant 0 : index
    %c0_16 = arith.constant 0 : index
    %20 = vector.load %arg4[%c0_15, %c0_16] : memref<128x512xbf16, #tpu.memory_space<vmem>>, vector<128x512xbf16>
    %cst_17 = arith.constant dense<0.000000e+00> : vector<8x512xf32>
    %21 = tpu.matmul %19, %20, %cst_17 {dimension_numbers = #tpu.dot_dimension_numbers<[1], [0], [0], [1], [0, 0, 1, 1], [], []>} : vector<8x128xbf16>, vector<128x512xbf16>, vector<8x512xf32> -> vector<8x512xf32>
    %22 = arith.addf %18, %21 : vector<8x512xf32>
    %23 = vector.extract_strided_slice %22 {offsets = [0, 0], sizes = [8, 128], strides = [1, 1]} : vector<8x512xf32> to vector<8x128xf32>
    %24 = arith.negf %23 : vector<8x128xf32>
    %25 = math.exp %24 : vector<8x128xf32>
    %cst_18 = arith.constant 1.000000e+00 : f32
    %26 = vector.broadcast %cst_18 : f32 to vector<8x128xf32>
    %27 = arith.addf %26, %25 : vector<8x128xf32>
    %28 = arith.divf %26, %27 : vector<8x128xf32>
    %29 = vector.extract_strided_slice %22 {offsets = [0, 128], sizes = [8, 128], strides = [1, 1]} : vector<8x512xf32> to vector<8x128xf32>
    %30 = arith.negf %29 : vector<8x128xf32>
    %31 = math.exp %30 : vector<8x128xf32>
    %cst_19 = arith.constant 1.000000e+00 : f32
    %32 = vector.broadcast %cst_19 : f32 to vector<8x128xf32>
    %33 = arith.addf %32, %31 : vector<8x128xf32>
    %34 = arith.divf %32, %33 : vector<8x128xf32>
    %35 = vector.extract_strided_slice %22 {offsets = [0, 256], sizes = [8, 128], strides = [1, 1]} : vector<8x512xf32> to vector<8x128xf32>
    %36 = math.tanh %35 : vector<8x128xf32>
    %37 = vector.extract_strided_slice %22 {offsets = [0, 384], sizes = [8, 128], strides = [1, 1]} : vector<8x512xf32> to vector<8x128xf32>
    %38 = arith.negf %37 : vector<8x128xf32>
    %39 = math.exp %38 : vector<8x128xf32>
    %cst_20 = arith.constant 1.000000e+00 : f32
    %40 = vector.broadcast %cst_20 : f32 to vector<8x128xf32>
    %41 = arith.addf %40, %39 : vector<8x128xf32>
    %42 = arith.divf %40, %41 : vector<8x128xf32>
    %43 = arith.mulf %34, %11 : vector<8x128xf32>
    %44 = arith.mulf %28, %36 : vector<8x128xf32>
    %45 = arith.addf %43, %44 : vector<8x128xf32>
    %46 = math.tanh %45 : vector<8x128xf32>
    %47 = arith.mulf %42, %46 : vector<8x128xf32>
    %c0_21 = arith.constant 0 : index
    %c0_22 = arith.constant 0 : index
    %48 = vector.load %arg10[%c0_21, %c0_22] : memref<8x128xf32, #tpu.memory_space<vmem>>, vector<8x128xf32>
    tpu.vector_store %arg10[%c0_21, %c0_22], %47 {strides = array<i32>} : memref<8x128xf32, #tpu.memory_space<vmem>>, vector<8x128xf32>,
    %c0_23 = arith.constant 0 : index
    %c0_24 = arith.constant 0 : index
    %49 = vector.load %arg11[%c0_23, %c0_24] : memref<8x128xf32, #tpu.memory_space<vmem>>, vector<8x128xf32>
    tpu.vector_store %arg11[%c0_23, %c0_24], %45 {strides = array<i32>} : memref<8x128xf32, #tpu.memory_space<vmem>>, vector<8x128xf32>,
    %c1_i32 = arith.constant 1 : i32
    %c0_25 = arith.constant 0 : index
    %c0_26 = arith.constant 0 : index
    %50 = vector.load %arg10[%c0_25, %c0_26] : memref<8x128xf32, #tpu.memory_space<vmem>>, vector<8x128xf32>
    %c0_27 = arith.constant 0 : index
    %c0_28 = arith.constant 0 : index
    %51 = vector.load %arg11[%c0_27, %c0_28] : memref<8x128xf32, #tpu.memory_space<vmem>>, vector<8x128xf32>
    %c8_i32_29 = arith.constant 8 : i32
    %52 = arith.muli %c1_i32, %c8_i32_29 : i32
    %53 = tpu.assume_multiple %52, 8 : i32
    %54 = arith.index_cast %53 : i32 to index
    %c0_30 = arith.constant 0 : index
    %55 = vector.load %arg9[%54, %c0_30] : memref<64x512xbf16, #tpu.memory_space<vmem>>, vector<8x512xbf16>
    %56 = arith.extf %55 : vector<8x512xbf16> to vector<8x512xf32>
    %57 = vector.broadcast %9 : vector<1x512xf32> to vector<8x512xf32>
    %58 = arith.addf %56, %57 : vector<8x512xf32>
    %59 = arith.truncf %50 : vector<8x128xf32> to vector<8x128xbf16>
    %c0_31 = arith.constant 0 : index
    %c0_32 = arith.constant 0 : index
    %60 = vector.load %arg4[%c0_31, %c0_32] : memref<128x512xbf16, #tpu.memory_space<vmem>>, vector<128x512xbf16>
    %cst_33 = arith.constant dense<0.000000e+00> : vector<8x512xf32>
    %61 = tpu.matmul %59, %60, %cst_33 {dimension_numbers = #tpu.dot_dimension_numbers<[1], [0], [0], [1], [0, 0, 1, 1], [], []>} : vector<8x128xbf16>, vector<128x512xbf16>, vector<8x512xf32> -> vector<8x512xf32>
    %62 = arith.addf %58, %61 : vector<8x512xf32>
    %63 = vector.extract_strided_slice %62 {offsets = [0, 0], sizes = [8, 128], strides = [1, 1]} : vector<8x512xf32> to vector<8x128xf32>
    %64 = arith.negf %63 : vector<8x128xf32>
    %65 = math.exp %64 : vector<8x128xf32>
    %cst_34 = arith.constant 1.000000e+00 : f32
    %66 = vector.broadcast %cst_34 : f32 to vector<8x128xf32>
    %67 = arith.addf %66, %65 : vector<8x128xf32>
    %68 = arith.divf %66, %67 : vector<8x128xf32>
    %69 = vector.extract_strided_slice %62 {offsets = [0, 128], sizes = [8, 128], strides = [1, 1]} : vector<8x512xf32> to vector<8x128xf32>
    %70 = arith.negf %69 : vector<8x128xf32>
    %71 = math.exp %70 : vector<8x128xf32>
    %cst_35 = arith.constant 1.000000e+00 : f32
    %72 = vector.broadcast %cst_35 : f32 to vector<8x128xf32>
    %73 = arith.addf %72, %71 : vector<8x128xf32>
    %74 = arith.divf %72, %73 : vector<8x128xf32>
    %75 = vector.extract_strided_slice %62 {offsets = [0, 256], sizes = [8, 128], strides = [1, 1]} : vector<8x512xf32> to vector<8x128xf32>
    %76 = math.tanh %75 : vector<8x128xf32>
    %77 = vector.extract_strided_slice %62 {offsets = [0, 384], sizes = [8, 128], strides = [1, 1]} : vector<8x512xf32> to vector<8x128xf32>
    %78 = arith.negf %77 : vector<8x128xf32>
    %79 = math.exp %78 : vector<8x128xf32>
    %cst_36 = arith.constant 1.000000e+00 : f32
    %80 = vector.broadcast %cst_36 : f32 to vector<8x128xf32>
    %81 = arith.addf %80, %79 : vector<8x128xf32>
    %82 = arith.divf %80, %81 : vector<8x128xf32>
    %83 = arith.mulf %74, %51 : vector<8x128xf32>
    %84 = arith.mulf %68, %76 : vector<8x128xf32>
    %85 = arith.addf %83, %84 : vector<8x128xf32>
    %86 = math.tanh %85 : vector<8x128xf32>
    %87 = arith.mulf %82, %86 : vector<8x128xf32>
    %c0_37 = arith.constant 0 : index
    %c0_38 = arith.constant 0 : index
    %88 = vector.load %arg10[%c0_37, %c0_38] : memref<8x128xf32, #tpu.memory_space<vmem>>, vector<8x128xf32>
    tpu.vector_store %arg10[%c0_37, %c0_38], %87 {strides = array<i32>} : memref<8x128xf32, #tpu.memory_space<vmem>>, vector<8x128xf32>,
    %c0_39 = arith.constant 0 : index
    %c0_40 = arith.constant 0 : index
    %89 = vector.load %arg11[%c0_39, %c0_40] : memref<8x128xf32, #tpu.memory_space<vmem>>, vector<8x128xf32>
    tpu.vector_store %arg11[%c0_39, %c0_40], %85 {strides = array<i32>} : memref<8x128xf32, #tpu.memory_space<vmem>>, vector<8x128xf32>,
    %c2_i32 = arith.constant 2 : i32
    %c0_41 = arith.constant 0 : index
    %c0_42 = arith.constant 0 : index
    %90 = vector.load %arg10[%c0_41, %c0_42] : memref<8x128xf32, #tpu.memory_space<vmem>>, vector<8x128xf32>
    %c0_43 = arith.constant 0 : index
    %c0_44 = arith.constant 0 : index
    %91 = vector.load %arg11[%c0_43, %c0_44] : memref<8x128xf32, #tpu.memory_space<vmem>>, vector<8x128xf32>
    %c8_i32_45 = arith.constant 8 : i32
    %92 = arith.muli %c2_i32, %c8_i32_45 : i32
    %93 = tpu.assume_multiple %92, 8 : i32
    %94 = arith.index_cast %93 : i32 to index
    %c0_46 = arith.constant 0 : index
    %95 = vector.load %arg9[%94, %c0_46] : memref<64x512xbf16, #tpu.memory_space<vmem>>, vector<8x512xbf16>
    %96 = arith.extf %95 : vector<8x512xbf16> to vector<8x512xf32>
    %97 = vector.broadcast %9 : vector<1x512xf32> to vector<8x512xf32>
    %98 = arith.addf %96, %97 : vector<8x512xf32>
    %99 = arith.truncf %90 : vector<8x128xf32> to vector<8x128xbf16>
    %c0_47 = arith.constant 0 : index
    %c0_48 = arith.constant 0 : index
    %100 = vector.load %arg4[%c0_47, %c0_48] : memref<128x512xbf16, #tpu.memory_space<vmem>>, vector<128x512xbf16>
    %cst_49 = arith.constant dense<0.000000e+00> : vector<8x512xf32>
    %101 = tpu.matmul %99, %100, %cst_49 {dimension_numbers = #tpu.dot_dimension_numbers<[1], [0], [0], [1], [0, 0, 1, 1], [], []>} : vector<8x128xbf16>, vector<128x512xbf16>, vector<8x512xf32> -> vector<8x512xf32>
    %102 = arith.addf %98, %101 : vector<8x512xf32>
    %103 = vector.extract_strided_slice %102 {offsets = [0, 0], sizes = [8, 128], strides = [1, 1]} : vector<8x512xf32> to vector<8x128xf32>
    %104 = arith.negf %103 : vector<8x128xf32>
    %105 = math.exp %104 : vector<8x128xf32>
    %cst_50 = arith.constant 1.000000e+00 : f32
    %106 = vector.broadcast %cst_50 : f32 to vector<8x128xf32>
    %107 = arith.addf %106, %105 : vector<8x128xf32>
    %108 = arith.divf %106, %107 : vector<8x128xf32>
    %109 = vector.extract_strided_slice %102 {offsets = [0, 128], sizes = [8, 128], strides = [1, 1]} : vector<8x512xf32> to vector<8x128xf32>
    %110 = arith.negf %109 : vector<8x128xf32>
    %111 = math.exp %110 : vector<8x128xf32>
    %cst_51 = arith.constant 1.000000e+00 : f32
    %112 = vector.broadcast %cst_51 : f32 to vector<8x128xf32>
    %113 = arith.addf %112, %111 : vector<8x128xf32>
    %114 = arith.divf %112, %113 : vector<8x128xf32>
    %115 = vector.extract_strided_slice %102 {offsets = [0, 256], sizes = [8, 128], strides = [1, 1]} : vector<8x512xf32> to vector<8x128xf32>
    %116 = math.tanh %115 : vector<8x128xf32>
    %117 = vector.extract_strided_slice %102 {offsets = [0, 384], sizes = [8, 128], strides = [1, 1]} : vector<8x512xf32> to vector<8x128xf32>
    %118 = arith.negf %117 : vector<8x128xf32>
    %119 = math.exp %118 : vector<8x128xf32>
    %cst_52 = arith.constant 1.000000e+00 : f32
    %120 = vector.broadcast %cst_52 : f32 to vector<8x128xf32>
    %121 = arith.addf %120, %119 : vector<8x128xf32>
    %122 = arith.divf %120, %121 : vector<8x128xf32>
    %123 = arith.mulf %114, %91 : vector<8x128xf32>
    %124 = arith.mulf %108, %116 : vector<8x128xf32>
    %125 = arith.addf %123, %124 : vector<8x128xf32>
    %126 = math.tanh %125 : vector<8x128xf32>
    %127 = arith.mulf %122, %126 : vector<8x128xf32>
    %c0_53 = arith.constant 0 : index
    %c0_54 = arith.constant 0 : index
    %128 = vector.load %arg10[%c0_53, %c0_54] : memref<8x128xf32, #tpu.memory_space<vmem>>, vector<8x128xf32>
    tpu.vector_store %arg10[%c0_53, %c0_54], %127 {strides = array<i32>} : memref<8x128xf32, #tpu.memory_space<vmem>>, vector<8x128xf32>,
    %c0_55 = arith.constant 0 : index
    %c0_56 = arith.constant 0 : index
    %129 = vector.load %arg11[%c0_55, %c0_56] : memref<8x128xf32, #tpu.memory_space<vmem>>, vector<8x128xf32>
    tpu.vector_store %arg11[%c0_55, %c0_56], %125 {strides = array<i32>} : memref<8x128xf32, #tpu.memory_space<vmem>>, vector<8x128xf32>,
    %c3_i32 = arith.constant 3 : i32
    %c0_57 = arith.constant 0 : index
    %c0_58 = arith.constant 0 : index
    %130 = vector.load %arg10[%c0_57, %c0_58] : memref<8x128xf32, #tpu.memory_space<vmem>>, vector<8x128xf32>
    %c0_59 = arith.constant 0 : index
    %c0_60 = arith.constant 0 : index
    %131 = vector.load %arg11[%c0_59, %c0_60] : memref<8x128xf32, #tpu.memory_space<vmem>>, vector<8x128xf32>
    %c8_i32_61 = arith.constant 8 : i32
    %132 = arith.muli %c3_i32, %c8_i32_61 : i32
    %133 = tpu.assume_multiple %132, 8 : i32
    %134 = arith.index_cast %133 : i32 to index
    %c0_62 = arith.constant 0 : index
    %135 = vector.load %arg9[%134, %c0_62] : memref<64x512xbf16, #tpu.memory_space<vmem>>, vector<8x512xbf16>
    %136 = arith.extf %135 : vector<8x512xbf16> to vector<8x512xf32>
    %137 = vector.broadcast %9 : vector<1x512xf32> to vector<8x512xf32>
    %138 = arith.addf %136, %137 : vector<8x512xf32>
    %139 = arith.truncf %130 : vector<8x128xf32> to vector<8x128xbf16>
    %c0_63 = arith.constant 0 : index
    %c0_64 = arith.constant 0 : index
    %140 = vector.load %arg4[%c0_63, %c0_64] : memref<128x512xbf16, #tpu.memory_space<vmem>>, vector<128x512xbf16>
    %cst_65 = arith.constant dense<0.000000e+00> : vector<8x512xf32>
    %141 = tpu.matmul %139, %140, %cst_65 {dimension_numbers = #tpu.dot_dimension_numbers<[1], [0], [0], [1], [0, 0, 1, 1], [], []>} : vector<8x128xbf16>, vector<128x512xbf16>, vector<8x512xf32> -> vector<8x512xf32>
    %142 = arith.addf %138, %141 : vector<8x512xf32>
    %143 = vector.extract_strided_slice %142 {offsets = [0, 0], sizes = [8, 128], strides = [1, 1]} : vector<8x512xf32> to vector<8x128xf32>
    %144 = arith.negf %143 : vector<8x128xf32>
    %145 = math.exp %144 : vector<8x128xf32>
    %cst_66 = arith.constant 1.000000e+00 : f32
    %146 = vector.broadcast %cst_66 : f32 to vector<8x128xf32>
    %147 = arith.addf %146, %145 : vector<8x128xf32>
    %148 = arith.divf %146, %147 : vector<8x128xf32>
    %149 = vector.extract_strided_slice %142 {offsets = [0, 128], sizes = [8, 128], strides = [1, 1]} : vector<8x512xf32> to vector<8x128xf32>
    %150 = arith.negf %149 : vector<8x128xf32>
    %151 = math.exp %150 : vector<8x128xf32>
    %cst_67 = arith.constant 1.000000e+00 : f32
    %152 = vector.broadcast %cst_67 : f32 to vector<8x128xf32>
    %153 = arith.addf %152, %151 : vector<8x128xf32>
    %154 = arith.divf %152, %153 : vector<8x128xf32>
    %155 = vector.extract_strided_slice %142 {offsets = [0, 256], sizes = [8, 128], strides = [1, 1]} : vector<8x512xf32> to vector<8x128xf32>
    %156 = math.tanh %155 : vector<8x128xf32>
    %157 = vector.extract_strided_slice %142 {offsets = [0, 384], sizes = [8, 128], strides = [1, 1]} : vector<8x512xf32> to vector<8x128xf32>
    %158 = arith.negf %157 : vector<8x128xf32>
    %159 = math.exp %158 : vector<8x128xf32>
    %cst_68 = arith.constant 1.000000e+00 : f32
    %160 = vector.broadcast %cst_68 : f32 to vector<8x128xf32>
    %161 = arith.addf %160, %159 : vector<8x128xf32>
    %162 = arith.divf %160, %161 : vector<8x128xf32>
    %163 = arith.mulf %154, %131 : vector<8x128xf32>
    %164 = arith.mulf %148, %156 : vector<8x128xf32>
    %165 = arith.addf %163, %164 : vector<8x128xf32>
    %166 = math.tanh %165 : vector<8x128xf32>
    %167 = arith.mulf %162, %166 : vector<8x128xf32>
    %c0_69 = arith.constant 0 : index
    %c0_70 = arith.constant 0 : index
    %168 = vector.load %arg10[%c0_69, %c0_70] : memref<8x128xf32, #tpu.memory_space<vmem>>, vector<8x128xf32>
    tpu.vector_store %arg10[%c0_69, %c0_70], %167 {strides = array<i32>} : memref<8x128xf32, #tpu.memory_space<vmem>>, vector<8x128xf32>,
    %c0_71 = arith.constant 0 : index
    %c0_72 = arith.constant 0 : index
    %169 = vector.load %arg11[%c0_71, %c0_72] : memref<8x128xf32, #tpu.memory_space<vmem>>, vector<8x128xf32>
    tpu.vector_store %arg11[%c0_71, %c0_72], %165 {strides = array<i32>} : memref<8x128xf32, #tpu.memory_space<vmem>>, vector<8x128xf32>,
    %c4_i32 = arith.constant 4 : i32
    %c0_73 = arith.constant 0 : index
    %c0_74 = arith.constant 0 : index
    %170 = vector.load %arg10[%c0_73, %c0_74] : memref<8x128xf32, #tpu.memory_space<vmem>>, vector<8x128xf32>
    %c0_75 = arith.constant 0 : index
    %c0_76 = arith.constant 0 : index
    %171 = vector.load %arg11[%c0_75, %c0_76] : memref<8x128xf32, #tpu.memory_space<vmem>>, vector<8x128xf32>
    %c8_i32_77 = arith.constant 8 : i32
    %172 = arith.muli %c4_i32, %c8_i32_77 : i32
    %173 = tpu.assume_multiple %172, 8 : i32
    %174 = arith.index_cast %173 : i32 to index
    %c0_78 = arith.constant 0 : index
    %175 = vector.load %arg9[%174, %c0_78] : memref<64x512xbf16, #tpu.memory_space<vmem>>, vector<8x512xbf16>
    %176 = arith.extf %175 : vector<8x512xbf16> to vector<8x512xf32>
    %177 = vector.broadcast %9 : vector<1x512xf32> to vector<8x512xf32>
    %178 = arith.addf %176, %177 : vector<8x512xf32>
    %179 = arith.truncf %170 : vector<8x128xf32> to vector<8x128xbf16>
    %c0_79 = arith.constant 0 : index
    %c0_80 = arith.constant 0 : index
    %180 = vector.load %arg4[%c0_79, %c0_80] : memref<128x512xbf16, #tpu.memory_space<vmem>>, vector<128x512xbf16>
    %cst_81 = arith.constant dense<0.000000e+00> : vector<8x512xf32>
    %181 = tpu.matmul %179, %180, %cst_81 {dimension_numbers = #tpu.dot_dimension_numbers<[1], [0], [0], [1], [0, 0, 1, 1], [], []>} : vector<8x128xbf16>, vector<128x512xbf16>, vector<8x512xf32> -> vector<8x512xf32>
    %182 = arith.addf %178, %181 : vector<8x512xf32>
    %183 = vector.extract_strided_slice %182 {offsets = [0, 0], sizes = [8, 128], strides = [1, 1]} : vector<8x512xf32> to vector<8x128xf32>
    %184 = arith.negf %183 : vector<8x128xf32>
    %185 = math.exp %184 : vector<8x128xf32>
    %cst_82 = arith.constant 1.000000e+00 : f32
    %186 = vector.broadcast %cst_82 : f32 to vector<8x128xf32>
    %187 = arith.addf %186, %185 : vector<8x128xf32>
    %188 = arith.divf %186, %187 : vector<8x128xf32>
    %189 = vector.extract_strided_slice %182 {offsets = [0, 128], sizes = [8, 128], strides = [1, 1]} : vector<8x512xf32> to vector<8x128xf32>
    %190 = arith.negf %189 : vector<8x128xf32>
    %191 = math.exp %190 : vector<8x128xf32>
    %cst_83 = arith.constant 1.000000e+00 : f32
    %192 = vector.broadcast %cst_83 : f32 to vector<8x128xf32>
    %193 = arith.addf %192, %191 : vector<8x128xf32>
    %194 = arith.divf %192, %193 : vector<8x128xf32>
    %195 = vector.extract_strided_slice %182 {offsets = [0, 256], sizes = [8, 128], strides = [1, 1]} : vector<8x512xf32> to vector<8x128xf32>
    %196 = math.tanh %195 : vector<8x128xf32>
    %197 = vector.extract_strided_slice %182 {offsets = [0, 384], sizes = [8, 128], strides = [1, 1]} : vector<8x512xf32> to vector<8x128xf32>
    %198 = arith.negf %197 : vector<8x128xf32>
    %199 = math.exp %198 : vector<8x128xf32>
    %cst_84 = arith.constant 1.000000e+00 : f32
    %200 = vector.broadcast %cst_84 : f32 to vector<8x128xf32>
    %201 = arith.addf %200, %199 : vector<8x128xf32>
    %202 = arith.divf %200, %201 : vector<8x128xf32>
    %203 = arith.mulf %194, %171 : vector<8x128xf32>
    %204 = arith.mulf %188, %196 : vector<8x128xf32>
    %205 = arith.addf %203, %204 : vector<8x128xf32>
    %206 = math.tanh %205 : vector<8x128xf32>
    %207 = arith.mulf %202, %206 : vector<8x128xf32>
    %c0_85 = arith.constant 0 : index
    %c0_86 = arith.constant 0 : index
    %208 = vector.load %arg10[%c0_85, %c0_86] : memref<8x128xf32, #tpu.memory_space<vmem>>, vector<8x128xf32>
    tpu.vector_store %arg10[%c0_85, %c0_86], %207 {strides = array<i32>} : memref<8x128xf32, #tpu.memory_space<vmem>>, vector<8x128xf32>,
    %c0_87 = arith.constant 0 : index
    %c0_88 = arith.constant 0 : index
    %209 = vector.load %arg11[%c0_87, %c0_88] : memref<8x128xf32, #tpu.memory_space<vmem>>, vector<8x128xf32>
    tpu.vector_store %arg11[%c0_87, %c0_88], %205 {strides = array<i32>} : memref<8x128xf32, #tpu.memory_space<vmem>>, vector<8x128xf32>,
    %c5_i32 = arith.constant 5 : i32
    %c0_89 = arith.constant 0 : index
    %c0_90 = arith.constant 0 : index
    %210 = vector.load %arg10[%c0_89, %c0_90] : memref<8x128xf32, #tpu.memory_space<vmem>>, vector<8x128xf32>
    %c0_91 = arith.constant 0 : index
    %c0_92 = arith.constant 0 : index
    %211 = vector.load %arg11[%c0_91, %c0_92] : memref<8x128xf32, #tpu.memory_space<vmem>>, vector<8x128xf32>
    %c8_i32_93 = arith.constant 8 : i32
    %212 = arith.muli %c5_i32, %c8_i32_93 : i32
    %213 = tpu.assume_multiple %212, 8 : i32
    %214 = arith.index_cast %213 : i32 to index
    %c0_94 = arith.constant 0 : index
    %215 = vector.load %arg9[%214, %c0_94] : memref<64x512xbf16, #tpu.memory_space<vmem>>, vector<8x512xbf16>
    %216 = arith.extf %215 : vector<8x512xbf16> to vector<8x512xf32>
    %217 = vector.broadcast %9 : vector<1x512xf32> to vector<8x512xf32>
    %218 = arith.addf %216, %217 : vector<8x512xf32>
    %219 = arith.truncf %210 : vector<8x128xf32> to vector<8x128xbf16>
    %c0_95 = arith.constant 0 : index
    %c0_96 = arith.constant 0 : index
    %220 = vector.load %arg4[%c0_95, %c0_96] : memref<128x512xbf16, #tpu.memory_space<vmem>>, vector<128x512xbf16>
    %cst_97 = arith.constant dense<0.000000e+00> : vector<8x512xf32>
    %221 = tpu.matmul %219, %220, %cst_97 {dimension_numbers = #tpu.dot_dimension_numbers<[1], [0], [0], [1], [0, 0, 1, 1], [], []>} : vector<8x128xbf16>, vector<128x512xbf16>, vector<8x512xf32> -> vector<8x512xf32>
    %222 = arith.addf %218, %221 : vector<8x512xf32>
    %223 = vector.extract_strided_slice %222 {offsets = [0, 0], sizes = [8, 128], strides = [1, 1]} : vector<8x512xf32> to vector<8x128xf32>
    %224 = arith.negf %223 : vector<8x128xf32>
    %225 = math.exp %224 : vector<8x128xf32>
    %cst_98 = arith.constant 1.000000e+00 : f32
    %226 = vector.broadcast %cst_98 : f32 to vector<8x128xf32>
    %227 = arith.addf %226, %225 : vector<8x128xf32>
    %228 = arith.divf %226, %227 : vector<8x128xf32>
    %229 = vector.extract_strided_slice %222 {offsets = [0, 128], sizes = [8, 128], strides = [1, 1]} : vector<8x512xf32> to vector<8x128xf32>
    %230 = arith.negf %229 : vector<8x128xf32>
    %231 = math.exp %230 : vector<8x128xf32>
    %cst_99 = arith.constant 1.000000e+00 : f32
    %232 = vector.broadcast %cst_99 : f32 to vector<8x128xf32>
    %233 = arith.addf %232, %231 : vector<8x128xf32>
    %234 = arith.divf %232, %233 : vector<8x128xf32>
    %235 = vector.extract_strided_slice %222 {offsets = [0, 256], sizes = [8, 128], strides = [1, 1]} : vector<8x512xf32> to vector<8x128xf32>
    %236 = math.tanh %235 : vector<8x128xf32>
    %237 = vector.extract_strided_slice %222 {offsets = [0, 384], sizes = [8, 128], strides = [1, 1]} : vector<8x512xf32> to vector<8x128xf32>
    %238 = arith.negf %237 : vector<8x128xf32>
    %239 = math.exp %238 : vector<8x128xf32>
    %cst_100 = arith.constant 1.000000e+00 : f32
    %240 = vector.broadcast %cst_100 : f32 to vector<8x128xf32>
    %241 = arith.addf %240, %239 : vector<8x128xf32>
    %242 = arith.divf %240, %241 : vector<8x128xf32>
    %243 = arith.mulf %234, %211 : vector<8x128xf32>
    %244 = arith.mulf %228, %236 : vector<8x128xf32>
    %245 = arith.addf %243, %244 : vector<8x128xf32>
    %246 = math.tanh %245 : vector<8x128xf32>
    %247 = arith.mulf %242, %246 : vector<8x128xf32>
    %c0_101 = arith.constant 0 : index
    %c0_102 = arith.constant 0 : index
    %248 = vector.load %arg10[%c0_101, %c0_102] : memref<8x128xf32, #tpu.memory_space<vmem>>, vector<8x128xf32>
    tpu.vector_store %arg10[%c0_101, %c0_102], %247 {strides = array<i32>} : memref<8x128xf32, #tpu.memory_space<vmem>>, vector<8x128xf32>,
    %c0_103 = arith.constant 0 : index
    %c0_104 = arith.constant 0 : index
    %249 = vector.load %arg11[%c0_103, %c0_104] : memref<8x128xf32, #tpu.memory_space<vmem>>, vector<8x128xf32>
    tpu.vector_store %arg11[%c0_103, %c0_104], %245 {strides = array<i32>} : memref<8x128xf32, #tpu.memory_space<vmem>>, vector<8x128xf32>,
    %c6_i32 = arith.constant 6 : i32
    %c0_105 = arith.constant 0 : index
    %c0_106 = arith.constant 0 : index
    %250 = vector.load %arg10[%c0_105, %c0_106] : memref<8x128xf32, #tpu.memory_space<vmem>>, vector<8x128xf32>
    %c0_107 = arith.constant 0 : index
    %c0_108 = arith.constant 0 : index
    %251 = vector.load %arg11[%c0_107, %c0_108] : memref<8x128xf32, #tpu.memory_space<vmem>>, vector<8x128xf32>
    %c8_i32_109 = arith.constant 8 : i32
    %252 = arith.muli %c6_i32, %c8_i32_109 : i32
    %253 = tpu.assume_multiple %252, 8 : i32
    %254 = arith.index_cast %253 : i32 to index
    %c0_110 = arith.constant 0 : index
    %255 = vector.load %arg9[%254, %c0_110] : memref<64x512xbf16, #tpu.memory_space<vmem>>, vector<8x512xbf16>
    %256 = arith.extf %255 : vector<8x512xbf16> to vector<8x512xf32>
    %257 = vector.broadcast %9 : vector<1x512xf32> to vector<8x512xf32>
    %258 = arith.addf %256, %257 : vector<8x512xf32>
    %259 = arith.truncf %250 : vector<8x128xf32> to vector<8x128xbf16>
    %c0_111 = arith.constant 0 : index
    %c0_112 = arith.constant 0 : index
    %260 = vector.load %arg4[%c0_111, %c0_112] : memref<128x512xbf16, #tpu.memory_space<vmem>>, vector<128x512xbf16>
    %cst_113 = arith.constant dense<0.000000e+00> : vector<8x512xf32>
    %261 = tpu.matmul %259, %260, %cst_113 {dimension_numbers = #tpu.dot_dimension_numbers<[1], [0], [0], [1], [0, 0, 1, 1], [], []>} : vector<8x128xbf16>, vector<128x512xbf16>, vector<8x512xf32> -> vector<8x512xf32>
    %262 = arith.addf %258, %261 : vector<8x512xf32>
    %263 = vector.extract_strided_slice %262 {offsets = [0, 0], sizes = [8, 128], strides = [1, 1]} : vector<8x512xf32> to vector<8x128xf32>
    %264 = arith.negf %263 : vector<8x128xf32>
    %265 = math.exp %264 : vector<8x128xf32>
    %cst_114 = arith.constant 1.000000e+00 : f32
    %266 = vector.broadcast %cst_114 : f32 to vector<8x128xf32>
    %267 = arith.addf %266, %265 : vector<8x128xf32>
    %268 = arith.divf %266, %267 : vector<8x128xf32>
    %269 = vector.extract_strided_slice %262 {offsets = [0, 128], sizes = [8, 128], strides = [1, 1]} : vector<8x512xf32> to vector<8x128xf32>
    %270 = arith.negf %269 : vector<8x128xf32>
    %271 = math.exp %270 : vector<8x128xf32>
    %cst_115 = arith.constant 1.000000e+00 : f32
    %272 = vector.broadcast %cst_115 : f32 to vector<8x128xf32>
    %273 = arith.addf %272, %271 : vector<8x128xf32>
    %274 = arith.divf %272, %273 : vector<8x128xf32>
    %275 = vector.extract_strided_slice %262 {offsets = [0, 256], sizes = [8, 128], strides = [1, 1]} : vector<8x512xf32> to vector<8x128xf32>
    %276 = math.tanh %275 : vector<8x128xf32>
    %277 = vector.extract_strided_slice %262 {offsets = [0, 384], sizes = [8, 128], strides = [1, 1]} : vector<8x512xf32> to vector<8x128xf32>
    %278 = arith.negf %277 : vector<8x128xf32>
    %279 = math.exp %278 : vector<8x128xf32>
    %cst_116 = arith.constant 1.000000e+00 : f32
    %280 = vector.broadcast %cst_116 : f32 to vector<8x128xf32>
    %281 = arith.addf %280, %279 : vector<8x128xf32>
    %282 = arith.divf %280, %281 : vector<8x128xf32>
    %283 = arith.mulf %274, %251 : vector<8x128xf32>
    %284 = arith.mulf %268, %276 : vector<8x128xf32>
    %285 = arith.addf %283, %284 : vector<8x128xf32>
    %286 = math.tanh %285 : vector<8x128xf32>
    %287 = arith.mulf %282, %286 : vector<8x128xf32>
    %c0_117 = arith.constant 0 : index
    %c0_118 = arith.constant 0 : index
    %288 = vector.load %arg10[%c0_117, %c0_118] : memref<8x128xf32, #tpu.memory_space<vmem>>, vector<8x128xf32>
    tpu.vector_store %arg10[%c0_117, %c0_118], %287 {strides = array<i32>} : memref<8x128xf32, #tpu.memory_space<vmem>>, vector<8x128xf32>,
    %c0_119 = arith.constant 0 : index
    %c0_120 = arith.constant 0 : index
    %289 = vector.load %arg11[%c0_119, %c0_120] : memref<8x128xf32, #tpu.memory_space<vmem>>, vector<8x128xf32>
    tpu.vector_store %arg11[%c0_119, %c0_120], %285 {strides = array<i32>} : memref<8x128xf32, #tpu.memory_space<vmem>>, vector<8x128xf32>,
    %c7_i32 = arith.constant 7 : i32
    %c0_121 = arith.constant 0 : index
    %c0_122 = arith.constant 0 : index
    %290 = vector.load %arg10[%c0_121, %c0_122] : memref<8x128xf32, #tpu.memory_space<vmem>>, vector<8x128xf32>
    %c0_123 = arith.constant 0 : index
    %c0_124 = arith.constant 0 : index
    %291 = vector.load %arg11[%c0_123, %c0_124] : memref<8x128xf32, #tpu.memory_space<vmem>>, vector<8x128xf32>
    %c8_i32_125 = arith.constant 8 : i32
    %292 = arith.muli %c7_i32, %c8_i32_125 : i32
    %293 = tpu.assume_multiple %292, 8 : i32
    %294 = arith.index_cast %293 : i32 to index
    %c0_126 = arith.constant 0 : index
    %295 = vector.load %arg9[%294, %c0_126] : memref<64x512xbf16, #tpu.memory_space<vmem>>, vector<8x512xbf16>
    %296 = arith.extf %295 : vector<8x512xbf16> to vector<8x512xf32>
    %297 = vector.broadcast %9 : vector<1x512xf32> to vector<8x512xf32>
    %298 = arith.addf %296, %297 : vector<8x512xf32>
    %299 = arith.truncf %290 : vector<8x128xf32> to vector<8x128xbf16>
    %c0_127 = arith.constant 0 : index
    %c0_128 = arith.constant 0 : index
    %300 = vector.load %arg4[%c0_127, %c0_128] : memref<128x512xbf16, #tpu.memory_space<vmem>>, vector<128x512xbf16>
    %cst_129 = arith.constant dense<0.000000e+00> : vector<8x512xf32>
    %301 = tpu.matmul %299, %300, %cst_129 {dimension_numbers = #tpu.dot_dimension_numbers<[1], [0], [0], [1], [0, 0, 1, 1], [], []>} : vector<8x128xbf16>, vector<128x512xbf16>, vector<8x512xf32> -> vector<8x512xf32>
    %302 = arith.addf %298, %301 : vector<8x512xf32>
    %303 = vector.extract_strided_slice %302 {offsets = [0, 0], sizes = [8, 128], strides = [1, 1]} : vector<8x512xf32> to vector<8x128xf32>
    %304 = arith.negf %303 : vector<8x128xf32>
    %305 = math.exp %304 : vector<8x128xf32>
    %cst_130 = arith.constant 1.000000e+00 : f32
    %306 = vector.broadcast %cst_130 : f32 to vector<8x128xf32>
    %307 = arith.addf %306, %305 : vector<8x128xf32>
    %308 = arith.divf %306, %307 : vector<8x128xf32>
    %309 = vector.extract_strided_slice %302 {offsets = [0, 128], sizes = [8, 128], strides = [1, 1]} : vector<8x512xf32> to vector<8x128xf32>
    %310 = arith.negf %309 : vector<8x128xf32>
    %311 = math.exp %310 : vector<8x128xf32>
    %cst_131 = arith.constant 1.000000e+00 : f32
    %312 = vector.broadcast %cst_131 : f32 to vector<8x128xf32>
    %313 = arith.addf %312, %311 : vector<8x128xf32>
    %314 = arith.divf %312, %313 : vector<8x128xf32>
    %315 = vector.extract_strided_slice %302 {offsets = [0, 256], sizes = [8, 128], strides = [1, 1]} : vector<8x512xf32> to vector<8x128xf32>
    %316 = math.tanh %315 : vector<8x128xf32>
    %317 = vector.extract_strided_slice %302 {offsets = [0, 384], sizes = [8, 128], strides = [1, 1]} : vector<8x512xf32> to vector<8x128xf32>
    %318 = arith.negf %317 : vector<8x128xf32>
    %319 = math.exp %318 : vector<8x128xf32>
    %cst_132 = arith.constant 1.000000e+00 : f32
    %320 = vector.broadcast %cst_132 : f32 to vector<8x128xf32>
    %321 = arith.addf %320, %319 : vector<8x128xf32>
    %322 = arith.divf %320, %321 : vector<8x128xf32>
    %323 = arith.mulf %314, %291 : vector<8x128xf32>
    %324 = arith.mulf %308, %316 : vector<8x128xf32>
    %325 = arith.addf %323, %324 : vector<8x128xf32>
    %326 = math.tanh %325 : vector<8x128xf32>
    %327 = arith.mulf %322, %326 : vector<8x128xf32>
    %c0_133 = arith.constant 0 : index
    %c0_134 = arith.constant 0 : index
    %328 = vector.load %arg10[%c0_133, %c0_134] : memref<8x128xf32, #tpu.memory_space<vmem>>, vector<8x128xf32>
    tpu.vector_store %arg10[%c0_133, %c0_134], %327 {strides = array<i32>} : memref<8x128xf32, #tpu.memory_space<vmem>>, vector<8x128xf32>,
    %c0_135 = arith.constant 0 : index
    %c0_136 = arith.constant 0 : index
    %329 = vector.load %arg11[%c0_135, %c0_136] : memref<8x128xf32, #tpu.memory_space<vmem>>, vector<8x128xf32>
    tpu.vector_store %arg11[%c0_135, %c0_136], %325 {strides = array<i32>} : memref<8x128xf32, #tpu.memory_space<vmem>>, vector<8x128xf32>,
    %c8_i32_137 = arith.constant 8 : i32
    %c0_i32_138 = arith.constant 0 : i32
    %330 = arith.cmpi eq, %arg1, %c0_i32_138 : i32
    %331 = arith.extui %330 : i1 to i32
    %c0_i32_139 = arith.constant 0 : i32
    %332 = arith.cmpi ne, %331, %c0_i32_139 : i32
    scf.if %332 {
      %c0_140 = arith.constant 0 : index
      %c0_141 = arith.constant 0 : index
      %333 = vector.load %arg10[%c0_140, %c0_141] : memref<8x128xf32, #tpu.memory_space<vmem>>, vector<8x128xf32>
      %c0_142 = arith.constant 0 : index
      %c0_143 = arith.constant 0 : index
      %334 = vector.load %arg6[%c0_142, %c0_143] : memref<128x2xf32, #tpu.memory_space<vmem>>, vector<128x2xf32>
      %cst_144 = arith.constant dense<0.000000e+00> : vector<8x2xf32>
      %335 = tpu.matmul %333, %334, %cst_144 {dimension_numbers = #tpu.dot_dimension_numbers<[1], [0], [0], [1], [0, 0, 1, 1], [], []>} : vector<8x128xf32>, vector<128x2xf32>, vector<8x2xf32> -> vector<8x2xf32>
      %c0_145 = arith.constant 0 : index
      %c0_146 = arith.constant 0 : index
      %336 = vector.load %arg7[%c0_145, %c0_146] : memref<1x2xf32, #tpu.memory_space<vmem>>, vector<1x2xf32>
      %337 = vector.broadcast %336 : vector<1x2xf32> to vector<8x2xf32>
      %338 = arith.addf %335, %337 : vector<8x2xf32>
      %c0_147 = arith.constant 0 : index
      %c0_148 = arith.constant 0 : index
      %339 = vector.load %arg8[%c0_147, %c0_148] : memref<8x2xf32, #tpu.memory_space<vmem>>, vector<8x2xf32>
      tpu.vector_store %arg8[%c0_147, %c0_148], %338 {strides = array<i32>} : memref<8x2xf32, #tpu.memory_space<vmem>>, vector<8x2xf32>,
    } else {
    }
    return
  }
  func.func @transform_0(%arg0: i32, %arg1: i32) -> (i32, i32, i32) {
    %c0_i32 = arith.constant 0 : i32
    %c0_i32_0 = arith.constant 0 : i32
    return %arg1, %arg0, %c0_i32 : i32, i32, i32
  }
  func.func @transform_1(%arg0: i32, %arg1: i32) -> (i32, i32) {
    %c0_i32 = arith.constant 0 : i32
    %c0_i32_0 = arith.constant 0 : i32
    %c0_i32_1 = arith.constant 0 : i32
    return %c0_i32, %c0_i32_0 : i32, i32
  }
  func.func @transform_2(%arg0: i32, %arg1: i32) -> (i32, i32) {
    %c0_i32 = arith.constant 0 : i32
    %c0_i32_0 = arith.constant 0 : i32
    %c0_i32_1 = arith.constant 0 : i32
    return %c0_i32, %c0_i32_0 : i32, i32
  }
  func.func @transform_3(%arg0: i32, %arg1: i32) -> (i32, i32) {
    %c0_i32 = arith.constant 0 : i32
    %c0_i32_0 = arith.constant 0 : i32
    %c0_i32_1 = arith.constant 0 : i32
    return %c0_i32, %c0_i32_0 : i32, i32
  }
  func.func @transform_4(%arg0: i32, %arg1: i32) -> (i32, i32) {
    %c0_i32 = arith.constant 0 : i32
    %c0_i32_0 = arith.constant 0 : i32
    %c0_i32_1 = arith.constant 0 : i32
    return %c0_i32, %c0_i32_0 : i32, i32
  }
  func.func @transform_5(%arg0: i32, %arg1: i32) -> (i32, i32) {
    %c0_i32 = arith.constant 0 : i32
    %c0_i32_0 = arith.constant 0 : i32
    %c0_i32_1 = arith.constant 0 : i32
    return %c0_i32, %c0_i32_0 : i32, i32
  }
  func.func @transform_6(%arg0: i32, %arg1: i32) -> (i32, i32) {
    %c0_i32 = arith.constant 0 : i32
    %c0_i32_0 = arith.constant 0 : i32
    return %arg0, %c0_i32 : i32, i32
  }
}

</mosaic_0001>

<llo_original>
// kernel: tpu_custom_call.1
$region0: #{tpu_custom_call.1}
  #allocation0 [shape = 'u32[]', space=smem, size = 0x4, offset = 0x4, fixed_abs, tag = 'smem constant byte address 0x4 - core index']
  #allocation1 [shape = 'u32[144,128]{1,0:T(1,128)}', space=vmem, size = 0x12000, scoped, tag = 'internal scratch']
  #allocation2 [shape = 'bf16[64,512]{1,0:T(8,128)(2,1)}', space=vmem, size = 0x10000, scoped, tag = 'scratch operand']
  #allocation3 [shape = 'f32[8,128]{1,0:T(8,128)}', space=vmem, size = 0x1000, scoped, tag = 'scratch operand']
  #allocation4 [shape = 'f32[8,128]{1,0:T(8,128)}', space=vmem, size = 0x1000, scoped, tag = 'scratch operand']
  %s0 = inlined_call_operand.vmem [shape: bf16[8,8,32], index: 0, kind: input, shape index: {}]
  %s1 = inlined_call_operand.vmem [shape: bf16[32,512], index: 1, kind: input, shape index: {}]
  %s2 = inlined_call_operand.hbm [shape: bf16[128,512], index: 2, kind: input, shape index: {}]
  %s3 = inlined_call_operand.vmem [shape: f32[1,512], index: 3, kind: input, shape index: {}]
  %s4 = inlined_call_operand.vmem [shape: f32[128,2], index: 4, kind: input, shape index: {}]
  %s5 = inlined_call_operand.vmem [shape: f32[1,2], index: 5, kind: input, shape index: {}]
  %s6 = inlined_call_operand.vmem [shape: f32[8,2], index: 6, kind: output, shape index: {}]
  %s7 = sld [smem:[#allocation0]]
  $region46: #{tpu_custom_call.1} parent=0
    _
  %s9 = ssub.s32 1, %s7
  %s10 = scalar_select 0, %s9, %s7
  $region1: #{tpu_custom_call.1} parent=0
    #allocation5 [shape = 'u8[131072]{0}', space=vmem, size = 0x20000, scoped, tag = 'input window, operand 2, single buffered']
    #allocation6 [shape = 's32[1]{0}', space=sflag, size = 0x4, scoped, tag = 'scoped memory for tpu_custom_call.1']
    %11 = vsyncpa [#allocation6], 0
    // Predicated region
    $region2: #{tpu_custom_call.1} parent=1 // pred_check
      _
    $region3: #{tpu_custom_call.1} parent=1 // pred_check_branch
      %13 = sbr.rel (0) target = $region5
    $region4: #{tpu_custom_call.1} parent=1 // pred_region
      _
    $region5: #{tpu_custom_call.1} parent=1 // pred_fallthru
      _
    // Predicated region
    $region6: #{tpu_custom_call.1} parent=1 // pred_check
      _
    $region7: #{tpu_custom_call.1} parent=1 // pred_check_branch
      %15 = sbr.rel (0) target = $region9
    $region8: #{tpu_custom_call.1} parent=1 // pred_region
      _
    $region9: #{tpu_custom_call.1} parent=1 // pred_fallthru
      _
    // Predicated region
    $region10: #{tpu_custom_call.1} parent=1 // pred_check
      _
    $region11: #{tpu_custom_call.1} parent=1 // pred_check_branch
      %17 = sbr.rel (0) target = $region13
    $region12: #{tpu_custom_call.1} parent=1 // pred_region
      %s19 = ssub.s32 4096, 4096
      %20 = vsyncadd [#allocation6], %s19
      %s21 = sshll.u32 [#allocation5], 4
      %s22 = int_to_ptr.vmem [resolvable:$true] %s21
      %27 = dma.hbm_to_vmem [thread:$0]  %s2, 4096, %s22, [#allocation6], 256, 256, 16
    $region13: #{tpu_custom_call.1} parent=1 // pred_fallthru
      _
    // Predicated region
    $region14: #{tpu_custom_call.1} parent=1 // pred_check
      _
    $region15: #{tpu_custom_call.1} parent=1 // pred_check_branch
      %29 = sbr.rel (0) target = $region17
    $region16: #{tpu_custom_call.1} parent=1 // pred_region
      _
    $region17: #{tpu_custom_call.1} parent=1 // pred_fallthru
      _
    // Predicated region
    $region18: #{tpu_custom_call.1} parent=1 // pred_check
      _
    $region19: #{tpu_custom_call.1} parent=1 // pred_check_branch
      %31 = sbr.rel (0) target = $region21
    $region20: #{tpu_custom_call.1} parent=1 // pred_region
      _
    $region21: #{tpu_custom_call.1} parent=1 // pred_fallthru
      _
    // Predicated region
    $region22: #{tpu_custom_call.1} parent=1 // pred_check
      _
    $region23: #{tpu_custom_call.1} parent=1 // pred_check_branch
      %33 = sbr.rel (0) target = $region25
    $region24: #{tpu_custom_call.1} parent=1 // pred_region
      _
    $region25: #{tpu_custom_call.1} parent=1 // pred_fallthru
      _
    // Predicated region
    $region26: #{tpu_custom_call.1} parent=1 // pred_check
      _
    $region27: #{tpu_custom_call.1} parent=1 // pred_check_branch
      %35 = sbr.rel (0) target = $region29
    $region28: #{tpu_custom_call.1} parent=1 // pred_region
      %36 = dma.done [#allocation6], 4096
    $region29: #{tpu_custom_call.1} parent=1 // pred_fallthru
      _
    %p38 = scmp.eq.s32.totalorder 0, 0
    // Predicated region
    $region30: #{tpu_custom_call.1} parent=1 // pred_check
      %p39 = pneg %p38
    $region31: #{tpu_custom_call.1} parent=1 // pred_check_branch
      %41 = sbr.rel (%p39) target = $region33
    $region32: #{tpu_custom_call.1} parent=1 // pred_region
      %42 = vst [vmem:[#allocation3] sm:$0xff] 0.0
      %43 = vst [vmem:[#allocation4] sm:$0xff] 0.0
    $region33: #{tpu_custom_call.1} parent=1 // pred_fallthru
      _
    %v44 = vld [vmem:[%s0] sm:$0xf]
    %v45 = vld [vmem:[%s0 + $0x4] sm:$0xf]
    %v46 = vld [vmem:[%s0 + $0x8] sm:$0xf]
    %v47 = vld [vmem:[%s0 + $0xc] sm:$0xf]
    %v48 = vld [vmem:[%s0 + $0x10] sm:$0xf]
    %v49 = vld [vmem:[%s0 + $0x14] sm:$0xf]
    %v50 = vld [vmem:[%s0 + $0x18] sm:$0xf]
    %v51 = vld [vmem:[%s0 + $0x1c] sm:$0xf]
    %v52 = vld [vmem:[%s1] sm:$0xff]
    %v53 = vld [vmem:[%s1 + $0x8] sm:$0xff]
    %v54 = vld [vmem:[%s1 + $0x10] sm:$0xff]
    %v55 = vld [vmem:[%s1 + $0x18] sm:$0xff]
    %v56 = vld [vmem:[%s1 + $0x20] sm:$0xff]
    %v57 = vld [vmem:[%s1 + $0x28] sm:$0xff]
    %v58 = vld [vmem:[%s1 + $0x30] sm:$0xff]
    %v59 = vld [vmem:[%s1 + $0x38] sm:$0xff]
    %v68 = vunpack.c.l.b16 %v44
    %v69 = vunpack.c.l.b16 %v45
    %v70 = vunpack.c.l.b16 %v46
    %v71 = vunpack.c.l.b16 %v47
    %v72 = vunpack.c.l.b16 %v48
    %v73 = vunpack.c.l.b16 %v49
    %v74 = vunpack.c.l.b16 %v50
    %v75 = vunpack.c.l.b16 %v51
    %v76 = vpack.c.b16 %v69, %v68
    %v77 = vpack.c.b16 %v71, %v70
    %v78 = vpack.c.b16 %v73, %v72
    %v79 = vpack.c.b16 %v75, %v74
    %v88 = vunpack.c.l.b16 %v52
    %v89 = vunpack.c.h.b16 %v52
    %v90 = vunpack.c.l.b16 %v53
    %v91 = vunpack.c.h.b16 %v53
    %v92 = vunpack.c.l.b16 %v54
    %v93 = vunpack.c.h.b16 %v54
    %v94 = vunpack.c.l.b16 %v55
    %v95 = vunpack.c.h.b16 %v55
    %v96 = vunpack.c.l.b16 %v56
    %v97 = vunpack.c.h.b16 %v56
    %v98 = vunpack.c.l.b16 %v57
    %v99 = vunpack.c.h.b16 %v57
    %v100 = vunpack.c.l.b16 %v58
    %v101 = vunpack.c.h.b16 %v58
    %v102 = vunpack.c.l.b16 %v59
    %v103 = vunpack.c.h.b16 %v59
    %v104 = vpack.c.b16 %v92, %v88
    %v105 = vpack.c.b16 %v93, %v89
    %v106 = vpack.c.b16 %v94, %v90
    %v107 = vpack.c.b16 %v95, %v91
    %v108 = vpack.c.b16 %v100, %v96
    %v109 = vpack.c.b16 %v101, %v97
    %v110 = vpack.c.b16 %v102, %v98
    %v111 = vpack.c.b16 %v103, %v99
    %vm120 = vcmask 261120
    %v122 = vsel %vm120, %v76, 0
    %v125 = vsel %vm120, %v77, 0
    %v128 = vsel %vm120, %v78, 0
    %v131 = vsel %vm120, %v79, 0
    %133 = vmatprep.subr.bf16.mxu0 0
    %134 = vmatpush1.bf16.msra.mxu0 0
    %135 = vmatprep.subr.bf16.mxu0 0
    %136 = vmatpush1.bf16.msra.mxu0 0
    %137 = vmatprep.subr.bf16.mxu0 0
    %138 = vmatpush1.bf16.msra.mxu0 0
    %139 = vmatprep.subr.bf16.mxu0 0
    %140 = vmatpush1.bf16.msra.mxu0 0
    %141 = vmatprep.subr.bf16.mxu0 0
    %142 = vmatpush1.bf16.msra.mxu0 0
    %143 = vmatprep.subr.bf16.mxu0 0
    %144 = vmatpush1.bf16.msra.mxu0 0
    %145 = vmatprep.subr.bf16.mxu0 %v109
    %146 = vmatpush1.bf16.msra.mxu0 %v108
    %147 = vmatprep.subr.bf16.mxu0 %v105
    %148 = vmatpush1.bf16.msra.mxu0 %v104
    %149 = vmatprep.subr.bf16.mxu0 0
    %150 = vmatpush2.bf16.msra.mxu0 0
    %151 = vmatprep.subr.bf16.mxu0 0
    %152 = vmatpush2.bf16.msra.mxu0 0
    %153 = vmatprep.subr.bf16.mxu0 0
    %154 = vmatpush2.bf16.msra.mxu0 0
    %155 = vmatprep.subr.bf16.mxu0 0
    %156 = vmatpush2.bf16.msra.mxu0 0
    %157 = vmatprep.subr.bf16.mxu0 0
    %158 = vmatpush2.bf16.msra.mxu0 0
    %159 = vmatprep.subr.bf16.mxu0 0
    %160 = vmatpush2.bf16.msra.mxu0 0
    %161 = vmatprep.subr.bf16.mxu0 0
    %162 = vmatpush2.bf16.msra.mxu0 0
    %163 = vmatprep.subr.bf16.mxu0 0
    %164 = vmatpush2.bf16.msra.mxu0 0
    %165 = vmatprep.mubr.bf16.mxu0 0
    %166 = vmatmul.mubr.bf16.gmra.mxu0 %v122
    %v167 = vpop.f32.mrf.mxu0
    %v168 = vadd.f32 0.0, %v167
    %v169 = vpop.f32.mrf.mxu0
    %v170 = vadd.f32 0.0, %v169
    %v171 = vpop.f32.mrf.mxu0
    %v172 = vadd.f32 0.0, %v171
    %v173 = vpop.f32.mrf.mxu0
    %v174 = vadd.f32 0.0, %v173
    %175 = vmatprep.mubr.bf16.mxu0 0
    %176 = vmatmul.mubr.bf16.gmra.mxu0 %v125
    %v177 = vpop.f32.mrf.mxu0
    %v178 = vadd.f32 0.0, %v177
    %v179 = vpop.f32.mrf.mxu0
    %v180 = vadd.f32 0.0, %v179
    %v181 = vpop.f32.mrf.mxu0
    %v182 = vadd.f32 0.0, %v181
    %v183 = vpop.f32.mrf.mxu0
    %v184 = vadd.f32 0.0, %v183
    %185 = vmatprep.mubr.bf16.mxu0 0
    %186 = vmatmul.mubr.bf16.gmra.mxu0 %v128
    %v187 = vpop.f32.mrf.mxu0
    %v188 = vadd.f32 0.0, %v187
    %v189 = vpop.f32.mrf.mxu0
    %v190 = vadd.f32 0.0, %v189
    %v191 = vpop.f32.mrf.mxu0
    %v192 = vadd.f32 0.0, %v191
    %v193 = vpop.f32.mrf.mxu0
    %v194 = vadd.f32 0.0, %v193
    %195 = vmatprep.mubr.bf16.mxu0 0
    %196 = vmatmul.mubr.bf16.gmra.mxu0 %v131
    %v197 = vpop.f32.mrf.mxu0
    %v198 = vadd.f32 0.0, %v197
    %v199 = vpop.f32.mrf.mxu0
    %v200 = vadd.f32 0.0, %v199
    %v201 = vpop.f32.mrf.mxu0
    %v202 = vadd.f32 0.0, %v201
    %v203 = vpop.f32.mrf.mxu0
    %v204 = vadd.f32 0.0, %v203
    %205 = vdwg.mxu0
    %206 = vmatprep.subr.bf16.mxu0 0
    %207 = vmatpush1.bf16.msra.mxu0 0
    %208 = vmatprep.subr.bf16.mxu0 0
    %209 = vmatpush1.bf16.msra.mxu0 0
    %210 = vmatprep.subr.bf16.mxu0 0
    %211 = vmatpush1.bf16.msra.mxu0 0
    %212 = vmatprep.subr.bf16.mxu0 0
    %213 = vmatpush1.bf16.msra.mxu0 0
    %214 = vmatprep.subr.bf16.mxu0 0
    %215 = vmatpush1.bf16.msra.mxu0 0
    %216 = vmatprep.subr.bf16.mxu0 0
    %217 = vmatpush1.bf16.msra.mxu0 0
    %218 = vmatprep.subr.bf16.mxu0 %v111
    %219 = vmatpush1.bf16.msra.mxu0 %v110
    %220 = vmatprep.subr.bf16.mxu0 %v107
    %221 = vmatpush1.bf16.msra.mxu0 %v106
    %222 = vmatprep.subr.bf16.mxu0 0
    %223 = vmatpush2.bf16.msra.mxu0 0
    %224 = vmatprep.subr.bf16.mxu0 0
    %225 = vmatpush2.bf16.msra.mxu0 0
    %226 = vmatprep.subr.bf16.mxu0 0
    %227 = vmatpush2.bf16.msra.mxu0 0
    %228 = vmatprep.subr.bf16.mxu0 0
    %229 = vmatpush2.bf16.msra.mxu0 0
    %230 = vmatprep.subr.bf16.mxu0 0
    %231 = vmatpush2.bf16.msra.mxu0 0
    %232 = vmatprep.subr.bf16.mxu0 0
    %233 = vmatpush2.bf16.msra.mxu0 0
    %234 = vmatprep.subr.bf16.mxu0 0
    %235 = vmatpush2.bf16.msra.mxu0 0
    %236 = vmatprep.subr.bf16.mxu0 0
    %237 = vmatpush2.bf16.msra.mxu0 0
    %238 = vmatprep.mubr.bf16.mxu0 0
    %239 = vmatmul.mubr.bf16.gmra.mxu0 %v122
    %v240 = vpop.f32.mrf.mxu0
    %v241 = vadd.f32 0.0, %v240
    %v242 = vpop.f32.mrf.mxu0
    %v243 = vadd.f32 0.0, %v242
    %v244 = vpop.f32.mrf.mxu0
    %v245 = vadd.f32 0.0, %v244
    %v246 = vpop.f32.mrf.mxu0
    %v247 = vadd.f32 0.0, %v246
    %248 = vmatprep.mubr.bf16.mxu0 0
    %249 = vmatmul.mubr.bf16.gmra.mxu0 %v125
    %v250 = vpop.f32.mrf.mxu0
    %v251 = vadd.f32 0.0, %v250
    %v252 = vpop.f32.mrf.mxu0
    %v253 = vadd.f32 0.0, %v252
    %v254 = vpop.f32.mrf.mxu0
    %v255 = vadd.f32 0.0, %v254
    %v256 = vpop.f32.mrf.mxu0
    %v257 = vadd.f32 0.0, %v256
    %258 = vmatprep.mubr.bf16.mxu0 0
    %259 = vmatmul.mubr.bf16.gmra.mxu0 %v128
    %v260 = vpop.f32.mrf.mxu0
    %v261 = vadd.f32 0.0, %v260
    %v262 = vpop.f32.mrf.mxu0
    %v263 = vadd.f32 0.0, %v262
    %v264 = vpop.f32.mrf.mxu0
    %v265 = vadd.f32 0.0, %v264
    %v266 = vpop.f32.mrf.mxu0
    %v267 = vadd.f32 0.0, %v266
    %268 = vmatprep.mubr.bf16.mxu0 0
    %269 = vmatmul.mubr.bf16.gmra.mxu0 %v131
    %v270 = vpop.f32.mrf.mxu0
    %v271 = vadd.f32 0.0, %v270
    %v272 = vpop.f32.mrf.mxu0
    %v273 = vadd.f32 0.0, %v272
    %v274 = vpop.f32.mrf.mxu0
    %v275 = vadd.f32 0.0, %v274
    %v276 = vpop.f32.mrf.mxu0
    %v277 = vadd.f32 0.0, %v276
    %278 = vdwg.mxu0
    %v279 = vpack.c.bf16 %v172, %v168
    %v280 = vpack.c.bf16 %v174, %v170
    %v281 = vpack.c.bf16 %v245, %v241
    %v282 = vpack.c.bf16 %v247, %v243
    %v283 = vpack.c.bf16 %v182, %v178
    %v284 = vpack.c.bf16 %v184, %v180
    %v285 = vpack.c.bf16 %v255, %v251
    %v286 = vpack.c.bf16 %v257, %v253
    %v287 = vpack.c.bf16 %v192, %v188
    %v288 = vpack.c.bf16 %v194, %v190
    %v289 = vpack.c.bf16 %v265, %v261
    %v290 = vpack.c.bf16 %v267, %v263
    %v291 = vpack.c.bf16 %v202, %v198
    %v292 = vpack.c.bf16 %v204, %v200
    %v293 = vpack.c.bf16 %v275, %v271
    %v294 = vpack.c.bf16 %v277, %v273
    %v311 = vunpack.c.l.b16 %v279
    %v312 = vunpack.c.l.b16 %v280
    %v313 = vunpack.c.l.b16 %v281
    %v314 = vunpack.c.l.b16 %v282
    %v315 = vunpack.c.h.b16 %v279
    %v316 = vunpack.c.h.b16 %v280
    %v317 = vunpack.c.h.b16 %v281
    %v318 = vunpack.c.h.b16 %v282
    %v319 = vunpack.c.l.b16 %v283
    %v320 = vunpack.c.l.b16 %v284
    %v321 = vunpack.c.l.b16 %v285
    %v322 = vunpack.c.l.b16 %v286
    %v323 = vunpack.c.h.b16 %v283
    %v324 = vunpack.c.h.b16 %v284
    %v325 = vunpack.c.h.b16 %v285
    %v326 = vunpack.c.h.b16 %v286
    %v327 = vunpack.c.l.b16 %v287
    %v328 = vunpack.c.l.b16 %v288
    %v329 = vunpack.c.l.b16 %v289
    %v330 = vunpack.c.l.b16 %v290
    %v331 = vunpack.c.h.b16 %v287
    %v332 = vunpack.c.h.b16 %v288
    %v333 = vunpack.c.h.b16 %v289
    %v334 = vunpack.c.h.b16 %v290
    %v335 = vunpack.c.l.b16 %v291
    %v336 = vunpack.c.l.b16 %v292
    %v337 = vunpack.c.l.b16 %v293
    %v338 = vunpack.c.l.b16 %v294
    %v339 = vunpack.c.h.b16 %v291
    %v340 = vunpack.c.h.b16 %v292
    %v341 = vunpack.c.h.b16 %v293
    %v342 = vunpack.c.h.b16 %v294
    %v343 = vpack.c.b16 %v312, %v311
    %v344 = vpack.c.b16 %v314, %v313
    %v345 = vpack.c.b16 %v316, %v315
    %v346 = vpack.c.b16 %v318, %v317
    %v347 = vpack.c.b16 %v320, %v319
    %v348 = vpack.c.b16 %v322, %v321
    %v349 = vpack.c.b16 %v324, %v323
    %v350 = vpack.c.b16 %v326, %v325
    %v351 = vpack.c.b16 %v328, %v327
    %v352 = vpack.c.b16 %v330, %v329
    %v353 = vpack.c.b16 %v332, %v331
    %v354 = vpack.c.b16 %v334, %v333
    %v355 = vpack.c.b16 %v336, %v335
    %v356 = vpack.c.b16 %v338, %v337
    %v357 = vpack.c.b16 %v340, %v339
    %v358 = vpack.c.b16 %v342, %v341
    %375 = vst [vmem:[#allocation2] sm:$0xff] %v343
    %376 = vst [vmem:[#allocation2 + $0x8] sm:$0xff] %v344
    %377 = vst [vmem:[#allocation2 + $0x10] sm:$0xff] %v345
    %378 = vst [vmem:[#allocation2 + $0x18] sm:$0xff] %v346
    %379 = vst [vmem:[#allocation2 + $0x20] sm:$0xff] %v347
    %380 = vst [vmem:[#allocation2 + $0x28] sm:$0xff] %v348
    %381 = vst [vmem:[#allocation2 + $0x30] sm:$0xff] %v349
    %382 = vst [vmem:[#allocation2 + $0x38] sm:$0xff] %v350
    %383 = vst [vmem:[#allocation2 + $0x40] sm:$0xff] %v351
    %384 = vst [vmem:[#allocation2 + $0x48] sm:$0xff] %v352
    %385 = vst [vmem:[#allocation2 + $0x50] sm:$0xff] %v353
    %386 = vst [vmem:[#allocation2 + $0x58] sm:$0xff] %v354
    %387 = vst [vmem:[#allocation2 + $0x60] sm:$0xff] %v355
    %388 = vst [vmem:[#allocation2 + $0x68] sm:$0xff] %v356
    %389 = vst [vmem:[#allocation2 + $0x70] sm:$0xff] %v357
    %390 = vst [vmem:[#allocation2 + $0x78] sm:$0xff] %v358
    %v391 = vld [vmem:[%s3] sm:$0xf]
    %v392 = vld [vmem:[#allocation3] sm:$0xff]
    %v393 = vld [vmem:[#allocation4] sm:$0xff]
    %s394 = smul.u32 0, 4
    %s395 = smul.addr %s394, 4
    %s396 = scalar_lea.vmem [#allocation2], %s395
    %v397 = vld [vmem:[%s396] sm:$0xff]
    %v398 = vld [vmem:[%s396 + $0x8] sm:$0xff]
    %v399 = vunpack.c.l.bf16 %v397
    %v400 = vunpack.c.h.bf16 %v397
    %v401 = vunpack.c.l.bf16 %v398
    %v402 = vunpack.c.h.bf16 %v398
    %v404 = vlaneseq
    %v405 = vshrl.u32 %v404, 7
    %v406 = vsub.s32 0, %v405
    %v407 = vrot.slane %v391, %v406
    %v408 = vlaneseq
    %v409 = vshrl.u32 %v408, 7
    %v410 = vsub.s32 1, %v409
    %v411 = vrot.slane %v391, %v410
    %v412 = vlaneseq
    %v413 = vshrl.u32 %v412, 7
    %v414 = vsub.s32 2, %v413
    %v415 = vrot.slane %v391, %v414
    %v416 = vlaneseq
    %v417 = vshrl.u32 %v416, 7
    %v418 = vsub.s32 3, %v417
    %v419 = vrot.slane %v391, %v418
    %v424 = vadd.f32 %v399, %v407
    %v425 = vadd.f32 %v400, %v411
    %v426 = vadd.f32 %v401, %v415
    %v427 = vadd.f32 %v402, %v419
    %v428 = vpack.c.bf16 %v392, %v392
    %v429 = vld [vmem:[#allocation5] sm:$0xff]
    %v430 = vld [vmem:[#allocation5 + $0x8] sm:$0xff]
    %v431 = vld [vmem:[#allocation5 + $0x10] sm:$0xff]
    %v432 = vld [vmem:[#allocation5 + $0x18] sm:$0xff]
    %v433 = vld [vmem:[#allocation5 + $0x20] sm:$0xff]
    %v434 = vld [vmem:[#allocation5 + $0x28] sm:$0xff]
    %v435 = vld [vmem:[#allocation5 + $0x30] sm:$0xff]
    %v436 = vld [vmem:[#allocation5 + $0x38] sm:$0xff]
    %v437 = vld [vmem:[#allocation5 + $0x40] sm:$0xff]
    %v438 = vld [vmem:[#allocation5 + $0x48] sm:$0xff]
    %v439 = vld [vmem:[#allocation5 + $0x50] sm:$0xff]
    %v440 = vld [vmem:[#allocation5 + $0x58] sm:$0xff]
    %v441 = vld [vmem:[#allocation5 + $0x60] sm:$0xff]
    %v442 = vld [vmem:[#allocation5 + $0x68] sm:$0xff]
    %v443 = vld [vmem:[#allocation5 + $0x70] sm:$0xff]
    %v444 = vld [vmem:[#allocation5 + $0x78] sm:$0xff]
    %v445 = vld [vmem:[#allocation5 + $0x80] sm:$0xff]
    %v446 = vld [vmem:[#allocation5 + $0x88] sm:$0xff]
    %v447 = vld [vmem:[#allocation5 + $0x90] sm:$0xff]
    %v448 = vld [vmem:[#allocation5 + $0x98] sm:$0xff]
    %v449 = vld [vmem:[#allocation5 + $0xa0] sm:$0xff]
    %v450 = vld [vmem:[#allocation5 + $0xa8] sm:$0xff]
    %v451 = vld [vmem:[#allocation5 + $0xb0] sm:$0xff]
    %v452 = vld [vmem:[#allocation5 + $0xb8] sm:$0xff]
    %v453 = vld [vmem:[#allocation5 + $0xc0] sm:$0xff]
    %v454 = vld [vmem:[#allocation5 + $0xc8] sm:$0xff]
    %v455 = vld [vmem:[#allocation5 + $0xd0] sm:$0xff]
    %v456 = vld [vmem:[#allocation5 + $0xd8] sm:$0xff]
    %v457 = vld [vmem:[#allocation5 + $0xe0] sm:$0xff]
    %v458 = vld [vmem:[#allocation5 + $0xe8] sm:$0xff]
    %v459 = vld [vmem:[#allocation5 + $0xf0] sm:$0xff]
    %v460 = vld [vmem:[#allocation5 + $0xf8] sm:$0xff]
    %v493 = vunpack.c.l.b16 %v429
    %v494 = vunpack.c.h.b16 %v429
    %v495 = vunpack.c.l.b16 %v430
    %v496 = vunpack.c.h.b16 %v430
    %v497 = vunpack.c.l.b16 %v431
    %v498 = vunpack.c.h.b16 %v431
    %v499 = vunpack.c.l.b16 %v432
    %v500 = vunpack.c.h.b16 %v432
    %v501 = vunpack.c.l.b16 %v433
    %v502 = vunpack.c.h.b16 %v433
    %v503 = vunpack.c.l.b16 %v434
    %v504 = vunpack.c.h.b16 %v434
    %v505 = vunpack.c.l.b16 %v435
    %v506 = vunpack.c.h.b16 %v435
    %v507 = vunpack.c.l.b16 %v436
    %v508 = vunpack.c.h.b16 %v436
    %v509 = vunpack.c.l.b16 %v437
    %v510 = vunpack.c.h.b16 %v437
    %v511 = vunpack.c.l.b16 %v438
    %v512 = vunpack.c.h.b16 %v438
    %v513 = vunpack.c.l.b16 %v439
    %v514 = vunpack.c.h.b16 %v439
    %v515 = vunpack.c.l.b16 %v440
    %v516 = vunpack.c.h.b16 %v440
    %v517 = vunpack.c.l.b16 %v441
    %v518 = vunpack.c.h.b16 %v441
    %v519 = vunpack.c.l.b16 %v442
    %v520 = vunpack.c.h.b16 %v442
    %v521 = vunpack.c.l.b16 %v443
    %v522 = vunpack.c.h.b16 %v443
    %v523 = vunpack.c.l.b16 %v444
    %v524 = vunpack.c.h.b16 %v444
    %v525 = vunpack.c.l.b16 %v445
    %v526 = vunpack.c.h.b16 %v445
    %v527 = vunpack.c.l.b16 %v446
    %v528 = vunpack.c.h.b16 %v446
    %v529 = vunpack.c.l.b16 %v447
    %v530 = vunpack.c.h.b16 %v447
    %v531 = vunpack.c.l.b16 %v448
    %v532 = vunpack.c.h.b16 %v448
    %v533 = vunpack.c.l.b16 %v449
    %v534 = vunpack.c.h.b16 %v449
    %v535 = vunpack.c.l.b16 %v450
    %v536 = vunpack.c.h.b16 %v450
    %v537 = vunpack.c.l.b16 %v451
    %v538 = vunpack.c.h.b16 %v451
    %v539 = vunpack.c.l.b16 %v452
    %v540 = vunpack.c.h.b16 %v452
    %v541 = vunpack.c.l.b16 %v453
    %v542 = vunpack.c.h.b16 %v453
    %v543 = vunpack.c.l.b16 %v454
    %v544 = vunpack.c.h.b16 %v454
    %v545 = vunpack.c.l.b16 %v455
    %v546 = vunpack.c.h.b16 %v455
    %v547 = vunpack.c.l.b16 %v456
    %v548 = vunpack.c.h.b16 %v456
    %v549 = vunpack.c.l.b16 %v457
    %v550 = vunpack.c.h.b16 %v457
    %v551 = vunpack.c.l.b16 %v458
    %v552 = vunpack.c.h.b16 %v458
    %v553 = vunpack.c.l.b16 %v459
    %v554 = vunpack.c.h.b16 %v459
    %v555 = vunpack.c.l.b16 %v460
    %v556 = vunpack.c.h.b16 %v460
    %v557 = vpack.c.b16 %v497, %v493
    %v558 = vpack.c.b16 %v498, %v494
    %v559 = vpack.c.b16 %v499, %v495
    %v560 = vpack.c.b16 %v500, %v496
    %v561 = vpack.c.b16 %v505, %v501
    %v562 = vpack.c.b16 %v506, %v502
    %v563 = vpack.c.b16 %v507, %v503
    %v564 = vpack.c.b16 %v508, %v504
    %v565 = vpack.c.b16 %v513, %v509
    %v566 = vpack.c.b16 %v514, %v510
    %v567 = vpack.c.b16 %v515, %v511
    %v568 = vpack.c.b16 %v516, %v512
    %v569 = vpack.c.b16 %v521, %v517
    %v570 = vpack.c.b16 %v522, %v518
    %v571 = vpack.c.b16 %v523, %v519
    %v572 = vpack.c.b16 %v524, %v520
    %v573 = vpack.c.b16 %v529, %v525
    %v574 = vpack.c.b16 %v530, %v526
    %v575 = vpack.c.b16 %v531, %v527
    %v576 = vpack.c.b16 %v532, %v528
    %v577 = vpack.c.b16 %v537, %v533
    %v578 = vpack.c.b16 %v538, %v534
    %v579 = vpack.c.b16 %v539, %v535
    %v580 = vpack.c.b16 %v540, %v536
    %v581 = vpack.c.b16 %v545, %v541
    %v582 = vpack.c.b16 %v546, %v542
    %v583 = vpack.c.b16 %v547, %v543
    %v584 = vpack.c.b16 %v548, %v544
    %v585 = vpack.c.b16 %v553, %v549
    %v586 = vpack.c.b16 %v554, %v550
    %v587 = vpack.c.b16 %v555, %v551
    %v588 = vpack.c.b16 %v556, %v552
    %621 = vmatprep.subr.bf16.mxu0 %v586
    %622 = vmatpush1.bf16.msra.mxu0 %v585
    %623 = vmatprep.subr.bf16.mxu0 %v582
    %624 = vmatpush1.bf16.msra.mxu0 %v581
    %625 = vmatprep.subr.bf16.mxu0 %v578
    %626 = vmatpush1.bf16.msra.mxu0 %v577
    %627 = vmatprep.subr.bf16.mxu0 %v574
    %628 = vmatpush1.bf16.msra.mxu0 %v573
    %629 = vmatprep.subr.bf16.mxu0 %v570
    %630 = vmatpush1.bf16.msra.mxu0 %v569
    %631 = vmatprep.subr.bf16.mxu0 %v566
    %632 = vmatpush1.bf16.msra.mxu0 %v565
    %633 = vmatprep.subr.bf16.mxu0 %v562
    %634 = vmatpush1.bf16.msra.mxu0 %v561
    %635 = vmatprep.subr.bf16.mxu0 %v558
    %636 = vmatpush1.bf16.msra.mxu0 %v557
    %637 = vmatprep.subr.bf16.mxu0 0
    %638 = vmatpush2.bf16.msra.mxu0 0
    %639 = vmatprep.subr.bf16.mxu0 0
    %640 = vmatpush2.bf16.msra.mxu0 0
    %641 = vmatprep.subr.bf16.mxu0 0
    %642 = vmatpush2.bf16.msra.mxu0 0
    %643 = vmatprep.subr.bf16.mxu0 0
    %644 = vmatpush2.bf16.msra.mxu0 0
    %645 = vmatprep.subr.bf16.mxu0 0
    %646 = vmatpush2.bf16.msra.mxu0 0
    %647 = vmatprep.subr.bf16.mxu0 0
    %648 = vmatpush2.bf16.msra.mxu0 0
    %649 = vmatprep.subr.bf16.mxu0 0
    %650 = vmatpush2.bf16.msra.mxu0 0
    %651 = vmatprep.subr.bf16.mxu0 0
    %652 = vmatpush2.bf16.msra.mxu0 0
    %653 = vmatprep.mubr.bf16.mxu0 0
    %654 = vmatmul.mubr.bf16.gmra.mxu0 %v428
    %v655 = vpop.f32.mrf.mxu0
    %v656 = vadd.f32 0.0, %v655
    %v657 = vpop.f32.mrf.mxu0
    %v658 = vadd.f32 0.0, %v657
    %v659 = vpop.f32.mrf.mxu0
    %v660 = vpop.f32.mrf.mxu0
    %661 = vdwg.mxu0
    %662 = vmatprep.subr.bf16.mxu0 %v588
    %663 = vmatpush1.bf16.msra.mxu0 %v587
    %664 = vmatprep.subr.bf16.mxu0 %v584
    %665 = vmatpush1.bf16.msra.mxu0 %v583
    %666 = vmatprep.subr.bf16.mxu0 %v580
    %667 = vmatpush1.bf16.msra.mxu0 %v579
    %668 = vmatprep.subr.bf16.mxu0 %v576
    %669 = vmatpush1.bf16.msra.mxu0 %v575
    %670 = vmatprep.subr.bf16.mxu0 %v572
    %671 = vmatpush1.bf16.msra.mxu0 %v571
    %672 = vmatprep.subr.bf16.mxu0 %v568
    %673 = vmatpush1.bf16.msra.mxu0 %v567
    %674 = vmatprep.subr.bf16.mxu0 %v564
    %675 = vmatpush1.bf16.msra.mxu0 %v563
    %676 = vmatprep.subr.bf16.mxu0 %v560
    %677 = vmatpush1.bf16.msra.mxu0 %v559
    %678 = vmatprep.subr.bf16.mxu0 0
    %679 = vmatpush2.bf16.msra.mxu0 0
    %680 = vmatprep.subr.bf16.mxu0 0
    %681 = vmatpush2.bf16.msra.mxu0 0
    %682 = vmatprep.subr.bf16.mxu0 0
    %683 = vmatpush2.bf16.msra.mxu0 0
    %684 = vmatprep.subr.bf16.mxu0 0
    %685 = vmatpush2.bf16.msra.mxu0 0
    %686 = vmatprep.subr.bf16.mxu0 0
    %687 = vmatpush2.bf16.msra.mxu0 0
    %688 = vmatprep.subr.bf16.mxu0 0
    %689 = vmatpush2.bf16.msra.mxu0 0
    %690 = vmatprep.subr.bf16.mxu0 0
    %691 = vmatpush2.bf16.msra.mxu0 0
    %692 = vmatprep.subr.bf16.mxu0 0
    %693 = vmatpush2.bf16.msra.mxu0 0
    %694 = vmatprep.mubr.bf16.mxu0 0
    %695 = vmatmul.mubr.bf16.gmra.mxu0 %v428
    %v696 = vpop.f32.mrf.mxu0
    %v697 = vadd.f32 0.0, %v696
    %v698 = vpop.f32.mrf.mxu0
    %v699 = vadd.f32 0.0, %v698
    %v700 = vpop.f32.mrf.mxu0
    %v701 = vpop.f32.mrf.mxu0
    %702 = vdwg.mxu0
    %v703 = vadd.f32 %v424, %v656
    %v704 = vadd.f32 %v425, %v658
    %v705 = vadd.f32 %v426, %v697
    %v706 = vadd.f32 %v427, %v699
    %v707 = vxor.u32 %v703, 2147483648
    %v708 = vmul.f32 %v707, 1.442695
    %v709 = vpow.pop %v708
    %v710 = vadd.f32 %v709, 1.0
    %v711 = vrcp.pop %v710
    %v712 = vmul.f32 1.0, %v711
    %v713 = vxor.u32 %v704, 2147483648
    %v714 = vmul.f32 %v713, 1.442695
    %v715 = vpow.pop %v714
    %v716 = vadd.f32 %v715, 1.0
    %v717 = vrcp.pop %v716
    %v718 = vmul.f32 1.0, %v717
    %v719 = vtanh.pop %v705
    %v720 = vxor.u32 %v706, 2147483648
    %v721 = vmul.f32 %v720, 1.442695
    %v722 = vpow.pop %v721
    %v723 = vadd.f32 %v722, 1.0
    %v724 = vrcp.pop %v723
    %v725 = vmul.f32 1.0, %v724
    %v726 = vmul.f32 %v718, %v393
    %v727 = vmul.f32 %v712, %v719
    %v728 = vadd.f32 %v726, %v727
    %v729 = vtanh.pop %v728
    %v730 = vmul.f32 %v725, %v729
    %731 = vst [vmem:[#allocation3] sm:$0xff] %v730
    %732 = vst [vmem:[#allocation4] sm:$0xff] %v728
    %v733 = vld [vmem:[#allocation3] sm:$0xff]
    %v734 = vld [vmem:[#allocation4] sm:$0xff]
    %s735 = smul.u32 1, 4
    %s736 = smul.addr %s735, 4
    %s737 = scalar_lea.vmem [#allocation2], %s736
    %v738 = vld [vmem:[%s737] sm:$0xff]
    %v739 = vld [vmem:[%s737 + $0x8] sm:$0xff]
    %v740 = vunpack.c.l.bf16 %v738
    %v741 = vunpack.c.h.bf16 %v738
    %v742 = vunpack.c.l.bf16 %v739
    %v743 = vunpack.c.h.bf16 %v739
    %v744 = vadd.f32 %v740, %v407
    %v745 = vadd.f32 %v741, %v411
    %v746 = vadd.f32 %v742, %v415
    %v747 = vadd.f32 %v743, %v419
    %v748 = vpack.c.bf16 %v733, %v733
    %v749 = vld [vmem:[#allocation5] sm:$0xff]
    %v750 = vld [vmem:[#allocation5 + $0x8] sm:$0xff]
    %v751 = vld [vmem:[#allocation5 + $0x10] sm:$0xff]
    %v752 = vld [vmem:[#allocation5 + $0x18] sm:$0xff]
    %v753 = vld [vmem:[#allocation5 + $0x20] sm:$0xff]
    %v754 = vld [vmem:[#allocation5 + $0x28] sm:$0xff]
    %v755 = vld [vmem:[#allocation5 + $0x30] sm:$0xff]
    %v756 = vld [vmem:[#allocation5 + $0x38] sm:$0xff]
    %v757 = vld [vmem:[#allocation5 + $0x40] sm:$0xff]
    %v758 = vld [vmem:[#allocation5 + $0x48] sm:$0xff]
    %v759 = vld [vmem:[#allocation5 + $0x50] sm:$0xff]
    %v760 = vld [vmem:[#allocation5 + $0x58] sm:$0xff]
    %v761 = vld [vmem:[#allocation5 + $0x60] sm:$0xff]
    %v762 = vld [vmem:[#allocation5 + $0x68] sm:$0xff]
    %v763 = vld [vmem:[#allocation5 + $0x70] sm:$0xff]
    %v764 = vld [vmem:[#allocation5 + $0x78] sm:$0xff]
    %v765 = vld [vmem:[#allocation5 + $0x80] sm:$0xff]
    %v766 = vld [vmem:[#allocation5 + $0x88] sm:$0xff]
    %v767 = vld [vmem:[#allocation5 + $0x90] sm:$0xff]
    %v768 = vld [vmem:[#allocation5 + $0x98] sm:$0xff]
    %v769 = vld [vmem:[#allocation5 + $0xa0] sm:$0xff]
    %v770 = vld [vmem:[#allocation5 + $0xa8] sm:$0xff]
    %v771 = vld [vmem:[#allocation5 + $0xb0] sm:$0xff]
    %v772 = vld [vmem:[#allocation5 + $0xb8] sm:$0xff]
    %v773 = vld [vmem:[#allocation5 + $0xc0] sm:$0xff]
    %v774 = vld [vmem:[#allocation5 + $0xc8] sm:$0xff]
    %v775 = vld [vmem:[#allocation5 + $0xd0] sm:$0xff]
    %v776 = vld [vmem:[#allocation5 + $0xd8] sm:$0xff]
    %v777 = vld [vmem:[#allocation5 + $0xe0] sm:$0xff]
    %v778 = vld [vmem:[#allocation5 + $0xe8] sm:$0xff]
    %v779 = vld [vmem:[#allocation5 + $0xf0] sm:$0xff]
    %v780 = vld [vmem:[#allocation5 + $0xf8] sm:$0xff]
    %v813 = vunpack.c.l.b16 %v749
    %v814 = vunpack.c.h.b16 %v749
    %v815 = vunpack.c.l.b16 %v750
    %v816 = vunpack.c.h.b16 %v750
    %v817 = vunpack.c.l.b16 %v751
    %v818 = vunpack.c.h.b16 %v751
    %v819 = vunpack.c.l.b16 %v752
    %v820 = vunpack.c.h.b16 %v752
    %v821 = vunpack.c.l.b16 %v753
    %v822 = vunpack.c.h.b16 %v753
    %v823 = vunpack.c.l.b16 %v754
    %v824 = vunpack.c.h.b16 %v754
    %v825 = vunpack.c.l.b16 %v755
    %v826 = vunpack.c.h.b16 %v755
    %v827 = vunpack.c.l.b16 %v756
    %v828 = vunpack.c.h.b16 %v756
    %v829 = vunpack.c.l.b16 %v757
    %v830 = vunpack.c.h.b16 %v757
    %v831 = vunpack.c.l.b16 %v758
    %v832 = vunpack.c.h.b16 %v758
    %v833 = vunpack.c.l.b16 %v759
    %v834 = vunpack.c.h.b16 %v759
    %v835 = vunpack.c.l.b16 %v760
    %v836 = vunpack.c.h.b16 %v760
    %v837 = vunpack.c.l.b16 %v761
    %v838 = vunpack.c.h.b16 %v761
    %v839 = vunpack.c.l.b16 %v762
    %v840 = vunpack.c.h.b16 %v762
    %v841 = vunpack.c.l.b16 %v763
    %v842 = vunpack.c.h.b16 %v763
    %v843 = vunpack.c.l.b16 %v764
    %v844 = vunpack.c.h.b16 %v764
    %v845 = vunpack.c.l.b16 %v765
    %v846 = vunpack.c.h.b16 %v765
    %v847 = vunpack.c.l.b16 %v766
    %v848 = vunpack.c.h.b16 %v766
    %v849 = vunpack.c.l.b16 %v767
    %v850 = vunpack.c.h.b16 %v767
    %v851 = vunpack.c.l.b16 %v768
    %v852 = vunpack.c.h.b16 %v768
    %v853 = vunpack.c.l.b16 %v769
    %v854 = vunpack.c.h.b16 %v769
    %v855 = vunpack.c.l.b16 %v770
    %v856 = vunpack.c.h.b16 %v770
    %v857 = vunpack.c.l.b16 %v771
    %v858 = vunpack.c.h.b16 %v771
    %v859 = vunpack.c.l.b16 %v772
    %v860 = vunpack.c.h.b16 %v772
    %v861 = vunpack.c.l.b16 %v773
    %v862 = vunpack.c.h.b16 %v773
    %v863 = vunpack.c.l.b16 %v774
    %v864 = vunpack.c.h.b16 %v774
    %v865 = vunpack.c.l.b16 %v775
    %v866 = vunpack.c.h.b16 %v775
    %v867 = vunpack.c.l.b16 %v776
    %v868 = vunpack.c.h.b16 %v776
    %v869 = vunpack.c.l.b16 %v777
    %v870 = vunpack.c.h.b16 %v777
    %v871 = vunpack.c.l.b16 %v778
    %v872 = vunpack.c.h.b16 %v778
    %v873 = vunpack.c.l.b16 %v779
    %v874 = vunpack.c.h.b16 %v779
    %v875 = vunpack.c.l.b16 %v780
    %v876 = vunpack.c.h.b16 %v780
    %v877 = vpack.c.b16 %v817, %v813
    %v878 = vpack.c.b16 %v818, %v814
    %v879 = vpack.c.b16 %v819, %v815
    %v880 = vpack.c.b16 %v820, %v816
    %v881 = vpack.c.b16 %v825, %v821
    %v882 = vpack.c.b16 %v826, %v822
    %v883 = vpack.c.b16 %v827, %v823
    %v884 = vpack.c.b16 %v828, %v824
    %v885 = vpack.c.b16 %v833, %v829
    %v886 = vpack.c.b16 %v834, %v830
    %v887 = vpack.c.b16 %v835, %v831
    %v888 = vpack.c.b16 %v836, %v832
    %v889 = vpack.c.b16 %v841, %v837
    %v890 = vpack.c.b16 %v842, %v838
    %v891 = vpack.c.b16 %v843, %v839
    %v892 = vpack.c.b16 %v844, %v840
    %v893 = vpack.c.b16 %v849, %v845
    %v894 = vpack.c.b16 %v850, %v846
    %v895 = vpack.c.b16 %v851, %v847
    %v896 = vpack.c.b16 %v852, %v848
    %v897 = vpack.c.b16 %v857, %v853
    %v898 = vpack.c.b16 %v858, %v854
    %v899 = vpack.c.b16 %v859, %v855
    %v900 = vpack.c.b16 %v860, %v856
    %v901 = vpack.c.b16 %v865, %v861
    %v902 = vpack.c.b16 %v866, %v862
    %v903 = vpack.c.b16 %v867, %v863
    %v904 = vpack.c.b16 %v868, %v864
    %v905 = vpack.c.b16 %v873, %v869
    %v906 = vpack.c.b16 %v874, %v870
    %v907 = vpack.c.b16 %v875, %v871
    %v908 = vpack.c.b16 %v876, %v872
    %941 = vmatprep.subr.bf16.mxu0 %v906
    %942 = vmatpush1.bf16.msra.mxu0 %v905
    %943 = vmatprep.subr.bf16.mxu0 %v902
    %944 = vmatpush1.bf16.msra.mxu0 %v901
    %945 = vmatprep.subr.bf16.mxu0 %v898
    %946 = vmatpush1.bf16.msra.mxu0 %v897
    %947 = vmatprep.subr.bf16.mxu0 %v894
    %948 = vmatpush1.bf16.msra.mxu0 %v893
    %949 = vmatprep.subr.bf16.mxu0 %v890
    %950 = vmatpush1.bf16.msra.mxu0 %v889
    %951 = vmatprep.subr.bf16.mxu0 %v886
    %952 = vmatpush1.bf16.msra.mxu0 %v885
    %953 = vmatprep.subr.bf16.mxu0 %v882
    %954 = vmatpush1.bf16.msra.mxu0 %v881
    %955 = vmatprep.subr.bf16.mxu0 %v878
    %956 = vmatpush1.bf16.msra.mxu0 %v877
    %957 = vmatprep.subr.bf16.mxu0 0
    %958 = vmatpush2.bf16.msra.mxu0 0
    %959 = vmatprep.subr.bf16.mxu0 0
    %960 = vmatpush2.bf16.msra.mxu0 0
    %961 = vmatprep.subr.bf16.mxu0 0
    %962 = vmatpush2.bf16.msra.mxu0 0
    %963 = vmatprep.subr.bf16.mxu0 0
    %964 = vmatpush2.bf16.msra.mxu0 0
    %965 = vmatprep.subr.bf16.mxu0 0
    %966 = vmatpush2.bf16.msra.mxu0 0
    %967 = vmatprep.subr.bf16.mxu0 0
    %968 = vmatpush2.bf16.msra.mxu0 0
    %969 = vmatprep.subr.bf16.mxu0 0
    %970 = vmatpush2.bf16.msra.mxu0 0
    %971 = vmatprep.subr.bf16.mxu0 0
    %972 = vmatpush2.bf16.msra.mxu0 0
    %973 = vmatprep.mubr.bf16.mxu0 0
    %974 = vmatmul.mubr.bf16.gmra.mxu0 %v748
    %v975 = vpop.f32.mrf.mxu0
    %v976 = vadd.f32 0.0, %v975
    %v977 = vpop.f32.mrf.mxu0
    %v978 = vadd.f32 0.0, %v977
    %v979 = vpop.f32.mrf.mxu0
    %v980 = vpop.f32.mrf.mxu0
    %981 = vdwg.mxu0
    %982 = vmatprep.subr.bf16.mxu0 %v908
    %983 = vmatpush1.bf16.msra.mxu0 %v907
    %984 = vmatprep.subr.bf16.mxu0 %v904
    %985 = vmatpush1.bf16.msra.mxu0 %v903
    %986 = vmatprep.subr.bf16.mxu0 %v900
    %987 = vmatpush1.bf16.msra.mxu0 %v899
    %988 = vmatprep.subr.bf16.mxu0 %v896
    %989 = vmatpush1.bf16.msra.mxu0 %v895
    %990 = vmatprep.subr.bf16.mxu0 %v892
    %991 = vmatpush1.bf16.msra.mxu0 %v891
    %992 = vmatprep.subr.bf16.mxu0 %v888
    %993 = vmatpush1.bf16.msra.mxu0 %v887
    %994 = vmatprep.subr.bf16.mxu0 %v884
    %995 = vmatpush1.bf16.msra.mxu0 %v883
    %996 = vmatprep.subr.bf16.mxu0 %v880
    %997 = vmatpush1.bf16.msra.mxu0 %v879
    %998 = vmatprep.subr.bf16.mxu0 0
    %999 = vmatpush2.bf16.msra.mxu0 0
    %1000 = vmatprep.subr.bf16.mxu0 0
    %1001 = vmatpush2.bf16.msra.mxu0 0
    %1002 = vmatprep.subr.bf16.mxu0 0
    %1003 = vmatpush2.bf16.msra.mxu0 0
    %1004 = vmatprep.subr.bf16.mxu0 0
    %1005 = vmatpush2.bf16.msra.mxu0 0
    %1006 = vmatprep.subr.bf16.mxu0 0
    %1007 = vmatpush2.bf16.msra.mxu0 0
    %1008 = vmatprep.subr.bf16.mxu0 0
    %1009 = vmatpush2.bf16.msra.mxu0 0
    %1010 = vmatprep.subr.bf16.mxu0 0
    %1011 = vmatpush2.bf16.msra.mxu0 0
    %1012 = vmatprep.subr.bf16.mxu0 0
    %1013 = vmatpush2.bf16.msra.mxu0 0
    %1014 = vmatprep.mubr.bf16.mxu0 0
    %1015 = vmatmul.mubr.bf16.gmra.mxu0 %v748
    %v1016 = vpop.f32.mrf.mxu0
    %v1017 = vadd.f32 0.0, %v1016
    %v1018 = vpop.f32.mrf.mxu0
    %v1019 = vadd.f32 0.0, %v1018
    %v1020 = vpop.f32.mrf.mxu0
    %v1021 = vpop.f32.mrf.mxu0
    %1022 = vdwg.mxu0
    %v1023 = vadd.f32 %v744, %v976
    %v1024 = vadd.f32 %v745, %v978
    %v1025 = vadd.f32 %v746, %v1017
    %v1026 = vadd.f32 %v747, %v1019
    %v1027 = vxor.u32 %v1023, 2147483648
    %v1028 = vmul.f32 %v1027, 1.442695
    %v1029 = vpow.pop %v1028
    %v1030 = vadd.f32 %v1029, 1.0
    %v1031 = vrcp.pop %v1030
    %v1032 = vmul.f32 1.0, %v1031
    %v1033 = vxor.u32 %v1024, 2147483648
    %v1034 = vmul.f32 %v1033, 1.442695
    %v1035 = vpow.pop %v1034
    %v1036 = vadd.f32 %v1035, 1.0
    %v1037 = vrcp.pop %v1036
    %v1038 = vmul.f32 1.0, %v1037
    %v1039 = vtanh.pop %v1025
    %v1040 = vxor.u32 %v1026, 2147483648
    %v1041 = vmul.f32 %v1040, 1.442695
    %v1042 = vpow.pop %v1041
    %v1043 = vadd.f32 %v1042, 1.0
    %v1044 = vrcp.pop %v1043
    %v1045 = vmul.f32 1.0, %v1044
    %v1046 = vmul.f32 %v1038, %v734
    %v1047 = vmul.f32 %v1032, %v1039
    %v1048 = vadd.f32 %v1046, %v1047
    %v1049 = vtanh.pop %v1048
    %v1050 = vmul.f32 %v1045, %v1049
    %1051 = vst [vmem:[#allocation3] sm:$0xff] %v1050
    %1052 = vst [vmem:[#allocation4] sm:$0xff] %v1048
    %v1053 = vld [vmem:[#allocation3] sm:$0xff]
    %v1054 = vld [vmem:[#allocation4] sm:$0xff]
    %s1055 = smul.u32 2, 4
    %s1056 = smul.addr %s1055, 4
    %s1057 = scalar_lea.vmem [#allocation2], %s1056
    %v1058 = vld [vmem:[%s1057] sm:$0xff]
    %v1059 = vld [vmem:[%s1057 + $0x8] sm:$0xff]
    %v1060 = vunpack.c.l.bf16 %v1058
    %v1061 = vunpack.c.h.bf16 %v1058
    %v1062 = vunpack.c.l.bf16 %v1059
    %v1063 = vunpack.c.h.bf16 %v1059
    %v1064 = vadd.f32 %v1060, %v407
    %v1065 = vadd.f32 %v1061, %v411
    %v1066 = vadd.f32 %v1062, %v415
    %v1067 = vadd.f32 %v1063, %v419
    %v1068 = vpack.c.bf16 %v1053, %v1053
    %v1069 = vld [vmem:[#allocation5] sm:$0xff]
    %v1070 = vld [vmem:[#allocation5 + $0x8] sm:$0xff]
    %v1071 = vld [vmem:[#allocation5 + $0x10] sm:$0xff]
    %v1072 = vld [vmem:[#allocation5 + $0x18] sm:$0xff]
    %v1073 = vld [vmem:[#allocation5 + $0x20] sm:$0xff]
    %v1074 = vld [vmem:[#allocation5 + $0x28] sm:$0xff]
    %v1075 = vld [vmem:[#allocation5 + $0x30] sm:$0xff]
    %v1076 = vld [vmem:[#allocation5 + $0x38] sm:$0xff]
    %v1077 = vld [vmem:[#allocation5 + $0x40] sm:$0xff]
    %v1078 = vld [vmem:[#allocation5 + $0x48] sm:$0xff]
    %v1079 = vld [vmem:[#allocation5 + $0x50] sm:$0xff]
    %v1080 = vld [vmem:[#allocation5 + $0x58] sm:$0xff]
    %v1081 = vld [vmem:[#allocation5 + $0x60] sm:$0xff]
    %v1082 = vld [vmem:[#allocation5 + $0x68] sm:$0xff]
    %v1083 = vld [vmem:[#allocation5 + $0x70] sm:$0xff]
    %v1084 = vld [vmem:[#allocation5 + $0x78] sm:$0xff]
    %v1085 = vld [vmem:[#allocation5 + $0x80] sm:$0xff]
    %v1086 = vld [vmem:[#allocation5 + $0x88] sm:$0xff]
    %v1087 = vld [vmem:[#allocation5 + $0x90] sm:$0xff]
    %v1088 = vld [vmem:[#allocation5 + $0x98] sm:$0xff]
    %v1089 = vld [vmem:[#allocation5 + $0xa0] sm:$0xff]
    %v1090 = vld [vmem:[#allocation5 + $0xa8] sm:$0xff]
    %v1091 = vld [vmem:[#allocation5 + $0xb0] sm:$0xff]
    %v1092 = vld [vmem:[#allocation5 + $0xb8] sm:$0xff]
    %v1093 = vld [vmem:[#allocation5 + $0xc0] sm:$0xff]
    %v1094 = vld [vmem:[#allocation5 + $0xc8] sm:$0xff]
    %v1095 = vld [vmem:[#allocation5 + $0xd0] sm:$0xff]
    %v1096 = vld [vmem:[#allocation5 + $0xd8] sm:$0xff]
    %v1097 = vld [vmem:[#allocation5 + $0xe0] sm:$0xff]
    %v1098 = vld [vmem:[#allocation5 + $0xe8] sm:$0xff]
    %v1099 = vld [vmem:[#allocation5 + $0xf0] sm:$0xff]
    %v1100 = vld [vmem:[#allocation5 + $0xf8] sm:$0xff]
    %v1133 = vunpack.c.l.b16 %v1069
    %v1134 = vunpack.c.h.b16 %v1069
    %v1135 = vunpack.c.l.b16 %v1070
    %v1136 = vunpack.c.h.b16 %v1070
    %v1137 = vunpack.c.l.b16 %v1071
    %v1138 = vunpack.c.h.b16 %v1071
    %v1139 = vunpack.c.l.b16 %v1072
    %v1140 = vunpack.c.h.b16 %v1072
    %v1141 = vunpack.c.l.b16 %v1073
    %v1142 = vunpack.c.h.b16 %v1073
    %v1143 = vunpack.c.l.b16 %v1074
    %v1144 = vunpack.c.h.b16 %v1074
    %v1145 = vunpack.c.l.b16 %v1075
    %v1146 = vunpack.c.h.b16 %v1075
    %v1147 = vunpack.c.l.b16 %v1076
    %v1148 = vunpack.c.h.b16 %v1076
    %v1149 = vunpack.c.l.b16 %v1077
    %v1150 = vunpack.c.h.b16 %v1077
    %v1151 = vunpack.c.l.b16 %v1078
    %v1152 = vunpack.c.h.b16 %v1078
    %v1153 = vunpack.c.l.b16 %v1079
    %v1154 = vunpack.c.h.b16 %v1079
    %v1155 = vunpack.c.l.b16 %v1080
    %v1156 = vunpack.c.h.b16 %v1080
    %v1157 = vunpack.c.l.b16 %v1081
    %v1158 = vunpack.c.h.b16 %v1081
    %v1159 = vunpack.c.l.b16 %v1082
    %v1160 = vunpack.c.h.b16 %v1082
    %v1161 = vunpack.c.l.b16 %v1083
    %v1162 = vunpack.c.h.b16 %v1083
    %v1163 = vunpack.c.l.b16 %v1084
    %v1164 = vunpack.c.h.b16 %v1084
    %v1165 = vunpack.c.l.b16 %v1085
    %v1166 = vunpack.c.h.b16 %v1085
    %v1167 = vunpack.c.l.b16 %v1086
    %v1168 = vunpack.c.h.b16 %v1086
    %v1169 = vunpack.c.l.b16 %v1087
    %v1170 = vunpack.c.h.b16 %v1087
    %v1171 = vunpack.c.l.b16 %v1088
    %v1172 = vunpack.c.h.b16 %v1088
    %v1173 = vunpack.c.l.b16 %v1089
    %v1174 = vunpack.c.h.b16 %v1089
    %v1175 = vunpack.c.l.b16 %v1090
    %v1176 = vunpack.c.h.b16 %v1090
    %v1177 = vunpack.c.l.b16 %v1091
    %v1178 = vunpack.c.h.b16 %v1091
    %v1179 = vunpack.c.l.b16 %v1092
    %v1180 = vunpack.c.h.b16 %v1092
    %v1181 = vunpack.c.l.b16 %v1093
    %v1182 = vunpack.c.h.b16 %v1093
    %v1183 = vunpack.c.l.b16 %v1094
    %v1184 = vunpack.c.h.b16 %v1094
    %v1185 = vunpack.c.l.b16 %v1095
    %v1186 = vunpack.c.h.b16 %v1095
    %v1187 = vunpack.c.l.b16 %v1096
    %v1188 = vunpack.c.h.b16 %v1096
    %v1189 = vunpack.c.l.b16 %v1097
    %v1190 = vunpack.c.h.b16 %v1097
    %v1191 = vunpack.c.l.b16 %v1098
    %v1192 = vunpack.c.h.b16 %v1098
    %v1193 = vunpack.c.l.b16 %v1099
    %v1194 = vunpack.c.h.b16 %v1099
    %v1195 = vunpack.c.l.b16 %v1100
    %v1196 = vunpack.c.h.b16 %v1100
    %v1197 = vpack.c.b16 %v1137, %v1133
    %v1198 = vpack.c.b16 %v1138, %v1134
    %v1199 = vpack.c.b16 %v1139, %v1135
    %v1200 = vpack.c.b16 %v1140, %v1136
    %v1201 = vpack.c.b16 %v1145, %v1141
    %v1202 = vpack.c.b16 %v1146, %v1142
    %v1203 = vpack.c.b16 %v1147, %v1143
    %v1204 = vpack.c.b16 %v1148, %v1144
    %v1205 = vpack.c.b16 %v1153, %v1149
    %v1206 = vpack.c.b16 %v1154, %v1150
    %v1207 = vpack.c.b16 %v1155, %v1151
    %v1208 = vpack.c.b16 %v1156, %v1152
    %v1209 = vpack.c.b16 %v1161, %v1157
    %v1210 = vpack.c.b16 %v1162, %v1158
    %v1211 = vpack.c.b16 %v1163, %v1159
    %v1212 = vpack.c.b16 %v1164, %v1160
    %v1213 = vpack.c.b16 %v1169, %v1165
    %v1214 = vpack.c.b16 %v1170, %v1166
    %v1215 = vpack.c.b16 %v1171, %v1167
    %v1216 = vpack.c.b16 %v1172, %v1168
    %v1217 = vpack.c.b16 %v1177, %v1173
    %v1218 = vpack.c.b16 %v1178, %v1174
    %v1219 = vpack.c.b16 %v1179, %v1175
    %v1220 = vpack.c.b16 %v1180, %v1176
    %v1221 = vpack.c.b16 %v1185, %v1181
    %v1222 = vpack.c.b16 %v1186, %v1182
    %v1223 = vpack.c.b16 %v1187, %v1183
    %v1224 = vpack.c.b16 %v1188, %v1184
    %v1225 = vpack.c.b16 %v1193, %v1189
    %v1226 = vpack.c.b16 %v1194, %v1190
    %v1227 = vpack.c.b16 %v1195, %v1191
    %v1228 = vpack.c.b16 %v1196, %v1192
    %1261 = vmatprep.subr.bf16.mxu0 %v1226
    %1262 = vmatpush1.bf16.msra.mxu0 %v1225
    %1263 = vmatprep.subr.bf16.mxu0 %v1222
    %1264 = vmatpush1.bf16.msra.mxu0 %v1221
    %1265 = vmatprep.subr.bf16.mxu0 %v1218
    %1266 = vmatpush1.bf16.msra.mxu0 %v1217
    %1267 = vmatprep.subr.bf16.mxu0 %v1214
    %1268 = vmatpush1.bf16.msra.mxu0 %v1213
    %1269 = vmatprep.subr.bf16.mxu0 %v1210
    %1270 = vmatpush1.bf16.msra.mxu0 %v1209
    %1271 = vmatprep.subr.bf16.mxu0 %v1206
    %1272 = vmatpush1.bf16.msra.mxu0 %v1205
    %1273 = vmatprep.subr.bf16.mxu0 %v1202
    %1274 = vmatpush1.bf16.msra.mxu0 %v1201
    %1275 = vmatprep.subr.bf16.mxu0 %v1198
    %1276 = vmatpush1.bf16.msra.mxu0 %v1197
    %1277 = vmatprep.subr.bf16.mxu0 0
    %1278 = vmatpush2.bf16.msra.mxu0 0
    %1279 = vmatprep.subr.bf16.mxu0 0
    %1280 = vmatpush2.bf16.msra.mxu0 0
    %1281 = vmatprep.subr.bf16.mxu0 0
    %1282 = vmatpush2.bf16.msra.mxu0 0
    %1283 = vmatprep.subr.bf16.mxu0 0
    %1284 = vmatpush2.bf16.msra.mxu0 0
    %1285 = vmatprep.subr.bf16.mxu0 0
    %1286 = vmatpush2.bf16.msra.mxu0 0
    %1287 = vmatprep.subr.bf16.mxu0 0
    %1288 = vmatpush2.bf16.msra.mxu0 0
    %1289 = vmatprep.subr.bf16.mxu0 0
    %1290 = vmatpush2.bf16.msra.mxu0 0
    %1291 = vmatprep.subr.bf16.mxu0 0
    %1292 = vmatpush2.bf16.msra.mxu0 0
    %1293 = vmatprep.mubr.bf16.mxu0 0
    %1294 = vmatmul.mubr.bf16.gmra.mxu0 %v1068
    %v1295 = vpop.f32.mrf.mxu0
    %v1296 = vadd.f32 0.0, %v1295
    %v1297 = vpop.f32.mrf.mxu0
    %v1298 = vadd.f32 0.0, %v1297
    %v1299 = vpop.f32.mrf.mxu0
    %v1300 = vpop.f32.mrf.mxu0
    %1301 = vdwg.mxu0
    %1302 = vmatprep.subr.bf16.mxu0 %v1228
    %1303 = vmatpush1.bf16.msra.mxu0 %v1227
    %1304 = vmatprep.subr.bf16.mxu0 %v1224
    %1305 = vmatpush1.bf16.msra.mxu0 %v1223
    %1306 = vmatprep.subr.bf16.mxu0 %v1220
    %1307 = vmatpush1.bf16.msra.mxu0 %v1219
    %1308 = vmatprep.subr.bf16.mxu0 %v1216
    %1309 = vmatpush1.bf16.msra.mxu0 %v1215
    %1310 = vmatprep.subr.bf16.mxu0 %v1212
    %1311 = vmatpush1.bf16.msra.mxu0 %v1211
    %1312 = vmatprep.subr.bf16.mxu0 %v1208
    %1313 = vmatpush1.bf16.msra.mxu0 %v1207
    %1314 = vmatprep.subr.bf16.mxu0 %v1204
    %1315 = vmatpush1.bf16.msra.mxu0 %v1203
    %1316 = vmatprep.subr.bf16.mxu0 %v1200
    %1317 = vmatpush1.bf16.msra.mxu0 %v1199
    %1318 = vmatprep.subr.bf16.mxu0 0
    %1319 = vmatpush2.bf16.msra.mxu0 0
    %1320 = vmatprep.subr.bf16.mxu0 0
    %1321 = vmatpush2.bf16.msra.mxu0 0
    %1322 = vmatprep.subr.bf16.mxu0 0
    %1323 = vmatpush2.bf16.msra.mxu0 0
    %1324 = vmatprep.subr.bf16.mxu0 0
    %1325 = vmatpush2.bf16.msra.mxu0 0
    %1326 = vmatprep.subr.bf16.mxu0 0
    %1327 = vmatpush2.bf16.msra.mxu0 0
    %1328 = vmatprep.subr.bf16.mxu0 0
    %1329 = vmatpush2.bf16.msra.mxu0 0
    %1330 = vmatprep.subr.bf16.mxu0 0
    %1331 = vmatpush2.bf16.msra.mxu0 0
    %1332 = vmatprep.subr.bf16.mxu0 0
    %1333 = vmatpush2.bf16.msra.mxu0 0
    %1334 = vmatprep.mubr.bf16.mxu0 0
    %1335 = vmatmul.mubr.bf16.gmra.mxu0 %v1068
    %v1336 = vpop.f32.mrf.mxu0
    %v1337 = vadd.f32 0.0, %v1336
    %v1338 = vpop.f32.mrf.mxu0
    %v1339 = vadd.f32 0.0, %v1338
    %v1340 = vpop.f32.mrf.mxu0
    %v1341 = vpop.f32.mrf.mxu0
    %1342 = vdwg.mxu0
    %v1343 = vadd.f32 %v1064, %v1296
    %v1344 = vadd.f32 %v1065, %v1298
    %v1345 = vadd.f32 %v1066, %v1337
    %v1346 = vadd.f32 %v1067, %v1339
    %v1347 = vxor.u32 %v1343, 2147483648
    %v1348 = vmul.f32 %v1347, 1.442695
    %v1349 = vpow.pop %v1348
    %v1350 = vadd.f32 %v1349, 1.0
    %v1351 = vrcp.pop %v1350
    %v1352 = vmul.f32 1.0, %v1351
    %v1353 = vxor.u32 %v1344, 2147483648
    %v1354 = vmul.f32 %v1353, 1.442695
    %v1355 = vpow.pop %v1354
    %v1356 = vadd.f32 %v1355, 1.0
    %v1357 = vrcp.pop %v1356
    %v1358 = vmul.f32 1.0, %v1357
    %v1359 = vtanh.pop %v1345
    %v1360 = vxor.u32 %v1346, 2147483648
    %v1361 = vmul.f32 %v1360, 1.442695
    %v1362 = vpow.pop %v1361
    %v1363 = vadd.f32 %v1362, 1.0
    %v1364 = vrcp.pop %v1363
    %v1365 = vmul.f32 1.0, %v1364
    %v1366 = vmul.f32 %v1358, %v1054
    %v1367 = vmul.f32 %v1352, %v1359
    %v1368 = vadd.f32 %v1366, %v1367
    %v1369 = vtanh.pop %v1368
    %v1370 = vmul.f32 %v1365, %v1369
    %1371 = vst [vmem:[#allocation3] sm:$0xff] %v1370
    %1372 = vst [vmem:[#allocation4] sm:$0xff] %v1368
    %v1373 = vld [vmem:[#allocation3] sm:$0xff]
    %v1374 = vld [vmem:[#allocation4] sm:$0xff]
    %s1375 = smul.u32 3, 4
    %s1376 = smul.addr %s1375, 4
    %s1377 = scalar_lea.vmem [#allocation2], %s1376
    %v1378 = vld [vmem:[%s1377] sm:$0xff]
    %v1379 = vld [vmem:[%s1377 + $0x8] sm:$0xff]
    %v1380 = vunpack.c.l.bf16 %v1378
    %v1381 = vunpack.c.h.bf16 %v1378
    %v1382 = vunpack.c.l.bf16 %v1379
    %v1383 = vunpack.c.h.bf16 %v1379
    %v1384 = vadd.f32 %v1380, %v407
    %v1385 = vadd.f32 %v1381, %v411
    %v1386 = vadd.f32 %v1382, %v415
    %v1387 = vadd.f32 %v1383, %v419
    %v1388 = vpack.c.bf16 %v1373, %v1373
    %v1389 = vld [vmem:[#allocation5] sm:$0xff]
    %v1390 = vld [vmem:[#allocation5 + $0x8] sm:$0xff]
    %v1391 = vld [vmem:[#allocation5 + $0x10] sm:$0xff]
    %v1392 = vld [vmem:[#allocation5 + $0x18] sm:$0xff]
    %v1393 = vld [vmem:[#allocation5 + $0x20] sm:$0xff]
    %v1394 = vld [vmem:[#allocation5 + $0x28] sm:$0xff]
    %v1395 = vld [vmem:[#allocation5 + $0x30] sm:$0xff]
    %v1396 = vld [vmem:[#allocation5 + $0x38] sm:$0xff]
    %v1397 = vld [vmem:[#allocation5 + $0x40] sm:$0xff]
    %v1398 = vld [vmem:[#allocation5 + $0x48] sm:$0xff]
    %v1399 = vld [vmem:[#allocation5 + $0x50] sm:$0xff]
    %v1400 = vld [vmem:[#allocation5 + $0x58] sm:$0xff]
    %v1401 = vld [vmem:[#allocation5 + $0x60] sm:$0xff]
    %v1402 = vld [vmem:[#allocation5 + $0x68] sm:$0xff]
    %v1403 = vld [vmem:[#allocation5 + $0x70] sm:$0xff]
    %v1404 = vld [vmem:[#allocation5 + $0x78] sm:$0xff]
    %v1405 = vld [vmem:[#allocation5 + $0x80] sm:$0xff]
    %v1406 = vld [vmem:[#allocation5 + $0x88] sm:$0xff]
    %v1407 = vld [vmem:[#allocation5 + $0x90] sm:$0xff]
    %v1408 = vld [vmem:[#allocation5 + $0x98] sm:$0xff]
    %v1409 = vld [vmem:[#allocation5 + $0xa0] sm:$0xff]
    %v1410 = vld [vmem:[#allocation5 + $0xa8] sm:$0xff]
    %v1411 = vld [vmem:[#allocation5 + $0xb0] sm:$0xff]
    %v1412 = vld [vmem:[#allocation5 + $0xb8] sm:$0xff]
    %v1413 = vld [vmem:[#allocation5 + $0xc0] sm:$0xff]
    %v1414 = vld [vmem:[#allocation5 + $0xc8] sm:$0xff]
    %v1415 = vld [vmem:[#allocation5 + $0xd0] sm:$0xff]
    %v1416 = vld [vmem:[#allocation5 + $0xd8] sm:$0xff]
    %v1417 = vld [vmem:[#allocation5 + $0xe0] sm:$0xff]
    %v1418 = vld [vmem:[#allocation5 + $0xe8] sm:$0xff]
    %v1419 = vld [vmem:[#allocation5 + $0xf0] sm:$0xff]
    %v1420 = vld [vmem:[#allocation5 + $0xf8] sm:$0xff]
    %v1453 = vunpack.c.l.b16 %v1389
    %v1454 = vunpack.c.h.b16 %v1389
    %v1455 = vunpack.c.l.b16 %v1390
    %v1456 = vunpack.c.h.b16 %v1390
    %v1457 = vunpack.c.l.b16 %v1391
    %v1458 = vunpack.c.h.b16 %v1391
    %v1459 = vunpack.c.l.b16 %v1392
    %v1460 = vunpack.c.h.b16 %v1392
    %v1461 = vunpack.c.l.b16 %v1393
    %v1462 = vunpack.c.h.b16 %v1393
    %v1463 = vunpack.c.l.b16 %v1394
    %v1464 = vunpack.c.h.b16 %v1394
    %v1465 = vunpack.c.l.b16 %v1395
    %v1466 = vunpack.c.h.b16 %v1395
    %v1467 = vunpack.c.l.b16 %v1396
    %v1468 = vunpack.c.h.b16 %v1396
    %v1469 = vunpack.c.l.b16 %v1397
    %v1470 = vunpack.c.h.b16 %v1397
    %v1471 = vunpack.c.l.b16 %v1398
    %v1472 = vunpack.c.h.b16 %v1398
    %v1473 = vunpack.c.l.b16 %v1399
    %v1474 = vunpack.c.h.b16 %v1399
    %v1475 = vunpack.c.l.b16 %v1400
    %v1476 = vunpack.c.h.b16 %v1400
    %v1477 = vunpack.c.l.b16 %v1401
    %v1478 = vunpack.c.h.b16 %v1401
    %v1479 = vunpack.c.l.b16 %v1402
    %v1480 = vunpack.c.h.b16 %v1402
    %v1481 = vunpack.c.l.b16 %v1403
    %v1482 = vunpack.c.h.b16 %v1403
    %v1483 = vunpack.c.l.b16 %v1404
    %v1484 = vunpack.c.h.b16 %v1404
    %v1485 = vunpack.c.l.b16 %v1405
    %v1486 = vunpack.c.h.b16 %v1405
    %v1487 = vunpack.c.l.b16 %v1406
    %v1488 = vunpack.c.h.b16 %v1406
    %v1489 = vunpack.c.l.b16 %v1407
    %v1490 = vunpack.c.h.b16 %v1407
    %v1491 = vunpack.c.l.b16 %v1408
    %v1492 = vunpack.c.h.b16 %v1408
    %v1493 = vunpack.c.l.b16 %v1409
    %v1494 = vunpack.c.h.b16 %v1409
    %v1495 = vunpack.c.l.b16 %v1410
    %v1496 = vunpack.c.h.b16 %v1410
    %v1497 = vunpack.c.l.b16 %v1411
    %v1498 = vunpack.c.h.b16 %v1411
    %v1499 = vunpack.c.l.b16 %v1412
    %v1500 = vunpack.c.h.b16 %v1412
    %v1501 = vunpack.c.l.b16 %v1413
    %v1502 = vunpack.c.h.b16 %v1413
    %v1503 = vunpack.c.l.b16 %v1414
    %v1504 = vunpack.c.h.b16 %v1414
    %v1505 = vunpack.c.l.b16 %v1415
    %v1506 = vunpack.c.h.b16 %v1415
    %v1507 = vunpack.c.l.b16 %v1416
    %v1508 = vunpack.c.h.b16 %v1416
    %v1509 = vunpack.c.l.b16 %v1417
    %v1510 = vunpack.c.h.b16 %v1417
    %v1511 = vunpack.c.l.b16 %v1418
    %v1512 = vunpack.c.h.b16 %v1418
    %v1513 = vunpack.c.l.b16 %v1419
    %v1514 = vunpack.c.h.b16 %v1419
    %v1515 = vunpack.c.l.b16 %v1420
    %v1516 = vunpack.c.h.b16 %v1420
    %v1517 = vpack.c.b16 %v1457, %v1453
    %v1518 = vpack.c.b16 %v1458, %v1454
    %v1519 = vpack.c.b16 %v1459, %v1455
    %v1520 = vpack.c.b16 %v1460, %v1456
    %v1521 = vpack.c.b16 %v1465, %v1461
    %v1522 = vpack.c.b16 %v1466, %v1462
    %v1523 = vpack.c.b16 %v1467, %v1463
    %v1524 = vpack.c.b16 %v1468, %v1464
    %v1525 = vpack.c.b16 %v1473, %v1469
    %v1526 = vpack.c.b16 %v1474, %v1470
    %v1527 = vpack.c.b16 %v1475, %v1471
    %v1528 = vpack.c.b16 %v1476, %v1472
    %v1529 = vpack.c.b16 %v1481, %v1477
    %v1530 = vpack.c.b16 %v1482, %v1478
    %v1531 = vpack.c.b16 %v1483, %v1479
    %v1532 = vpack.c.b16 %v1484, %v1480
    %v1533 = vpack.c.b16 %v1489, %v1485
    %v1534 = vpack.c.b16 %v1490, %v1486
    %v1535 = vpack.c.b16 %v1491, %v1487
    %v1536 = vpack.c.b16 %v1492, %v1488
    %v1537 = vpack.c.b16 %v1497, %v1493
    %v1538 = vpack.c.b16 %v1498, %v1494
    %v1539 = vpack.c.b16 %v1499, %v1495
    %v1540 = vpack.c.b16 %v1500, %v1496
    %v1541 = vpack.c.b16 %v1505, %v1501
    %v1542 = vpack.c.b16 %v1506, %v1502
    %v1543 = vpack.c.b16 %v1507, %v1503
    %v1544 = vpack.c.b16 %v1508, %v1504
    %v1545 = vpack.c.b16 %v1513, %v1509
    %v1546 = vpack.c.b16 %v1514, %v1510
    %v1547 = vpack.c.b16 %v1515, %v1511
    %v1548 = vpack.c.b16 %v1516, %v1512
    %1581 = vmatprep.subr.bf16.mxu0 %v1546
    %1582 = vmatpush1.bf16.msra.mxu0 %v1545
    %1583 = vmatprep.subr.bf16.mxu0 %v1542
    %1584 = vmatpush1.bf16.msra.mxu0 %v1541
    %1585 = vmatprep.subr.bf16.mxu0 %v1538
    %1586 = vmatpush1.bf16.msra.mxu0 %v1537
    %1587 = vmatprep.subr.bf16.mxu0 %v1534
    %1588 = vmatpush1.bf16.msra.mxu0 %v1533
    %1589 = vmatprep.subr.bf16.mxu0 %v1530
    %1590 = vmatpush1.bf16.msra.mxu0 %v1529
    %1591 = vmatprep.subr.bf16.mxu0 %v1526
    %1592 = vmatpush1.bf16.msra.mxu0 %v1525
    %1593 = vmatprep.subr.bf16.mxu0 %v1522
    %1594 = vmatpush1.bf16.msra.mxu0 %v1521
    %1595 = vmatprep.subr.bf16.mxu0 %v1518
    %1596 = vmatpush1.bf16.msra.mxu0 %v1517
    %1597 = vmatprep.subr.bf16.mxu0 0
    %1598 = vmatpush2.bf16.msra.mxu0 0
    %1599 = vmatprep.subr.bf16.mxu0 0
    %1600 = vmatpush2.bf16.msra.mxu0 0
    %1601 = vmatprep.subr.bf16.mxu0 0
    %1602 = vmatpush2.bf16.msra.mxu0 0
    %1603 = vmatprep.subr.bf16.mxu0 0
    %1604 = vmatpush2.bf16.msra.mxu0 0
    %1605 = vmatprep.subr.bf16.mxu0 0
    %1606 = vmatpush2.bf16.msra.mxu0 0
    %1607 = vmatprep.subr.bf16.mxu0 0
    %1608 = vmatpush2.bf16.msra.mxu0 0
    %1609 = vmatprep.subr.bf16.mxu0 0
    %1610 = vmatpush2.bf16.msra.mxu0 0
    %1611 = vmatprep.subr.bf16.mxu0 0
    %1612 = vmatpush2.bf16.msra.mxu0 0
    %1613 = vmatprep.mubr.bf16.mxu0 0
    %1614 = vmatmul.mubr.bf16.gmra.mxu0 %v1388
    %v1615 = vpop.f32.mrf.mxu0
    %v1616 = vadd.f32 0.0, %v1615
    %v1617 = vpop.f32.mrf.mxu0
    %v1618 = vadd.f32 0.0, %v1617
    %v1619 = vpop.f32.mrf.mxu0
    %v1620 = vpop.f32.mrf.mxu0
    %1621 = vdwg.mxu0
    %1622 = vmatprep.subr.bf16.mxu0 %v1548
    %1623 = vmatpush1.bf16.msra.mxu0 %v1547
    %1624 = vmatprep.subr.bf16.mxu0 %v1544
    %1625 = vmatpush1.bf16.msra.mxu0 %v1543
    %1626 = vmatprep.subr.bf16.mxu0 %v1540
    %1627 = vmatpush1.bf16.msra.mxu0 %v1539
    %1628 = vmatprep.subr.bf16.mxu0 %v1536
    %1629 = vmatpush1.bf16.msra.mxu0 %v1535
    %1630 = vmatprep.subr.bf16.mxu0 %v1532
    %1631 = vmatpush1.bf16.msra.mxu0 %v1531
    %1632 = vmatprep.subr.bf16.mxu0 %v1528
    %1633 = vmatpush1.bf16.msra.mxu0 %v1527
    %1634 = vmatprep.subr.bf16.mxu0 %v1524
    %1635 = vmatpush1.bf16.msra.mxu0 %v1523
    %1636 = vmatprep.subr.bf16.mxu0 %v1520
    %1637 = vmatpush1.bf16.msra.mxu0 %v1519
    %1638 = vmatprep.subr.bf16.mxu0 0
    %1639 = vmatpush2.bf16.msra.mxu0 0
    %1640 = vmatprep.subr.bf16.mxu0 0
    %1641 = vmatpush2.bf16.msra.mxu0 0
    %1642 = vmatprep.subr.bf16.mxu0 0
    %1643 = vmatpush2.bf16.msra.mxu0 0
    %1644 = vmatprep.subr.bf16.mxu0 0
    %1645 = vmatpush2.bf16.msra.mxu0 0
    %1646 = vmatprep.subr.bf16.mxu0 0
    %1647 = vmatpush2.bf16.msra.mxu0 0
    %1648 = vmatprep.subr.bf16.mxu0 0
    %1649 = vmatpush2.bf16.msra.mxu0 0
    %1650 = vmatprep.subr.bf16.mxu0 0
    %1651 = vmatpush2.bf16.msra.mxu0 0
    %1652 = vmatprep.subr.bf16.mxu0 0
    %1653 = vmatpush2.bf16.msra.mxu0 0
    %1654 = vmatprep.mubr.bf16.mxu0 0
    %1655 = vmatmul.mubr.bf16.gmra.mxu0 %v1388
    %v1656 = vpop.f32.mrf.mxu0
    %v1657 = vadd.f32 0.0, %v1656
    %v1658 = vpop.f32.mrf.mxu0
    %v1659 = vadd.f32 0.0, %v1658
    %v1660 = vpop.f32.mrf.mxu0
    %v1661 = vpop.f32.mrf.mxu0
    %1662 = vdwg.mxu0
    %v1663 = vadd.f32 %v1384, %v1616
    %v1664 = vadd.f32 %v1385, %v1618
    %v1665 = vadd.f32 %v1386, %v1657
    %v1666 = vadd.f32 %v1387, %v1659
    %v1667 = vxor.u32 %v1663, 2147483648
    %v1668 = vmul.f32 %v1667, 1.442695
    %v1669 = vpow.pop %v1668
    %v1670 = vadd.f32 %v1669, 1.0
    %v1671 = vrcp.pop %v1670
    %v1672 = vmul.f32 1.0, %v1671
    %v1673 = vxor.u32 %v1664, 2147483648
    %v1674 = vmul.f32 %v1673, 1.442695
    %v1675 = vpow.pop %v1674
    %v1676 = vadd.f32 %v1675, 1.0
    %v1677 = vrcp.pop %v1676
    %v1678 = vmul.f32 1.0, %v1677
    %v1679 = vtanh.pop %v1665
    %v1680 = vxor.u32 %v1666, 2147483648
    %v1681 = vmul.f32 %v1680, 1.442695
    %v1682 = vpow.pop %v1681
    %v1683 = vadd.f32 %v1682, 1.0
    %v1684 = vrcp.pop %v1683
    %v1685 = vmul.f32 1.0, %v1684
    %v1686 = vmul.f32 %v1678, %v1374
    %v1687 = vmul.f32 %v1672, %v1679
    %v1688 = vadd.f32 %v1686, %v1687
    %v1689 = vtanh.pop %v1688
    %v1690 = vmul.f32 %v1685, %v1689
    %1691 = vst [vmem:[#allocation3] sm:$0xff] %v1690
    %1692 = vst [vmem:[#allocation4] sm:$0xff] %v1688
    %v1693 = vld [vmem:[#allocation3] sm:$0xff]
    %v1694 = vld [vmem:[#allocation4] sm:$0xff]
    %s1695 = smul.u32 4, 4
    %s1696 = smul.addr %s1695, 4
    %s1697 = scalar_lea.vmem [#allocation2], %s1696
    %v1698 = vld [vmem:[%s1697] sm:$0xff]
    %v1699 = vld [vmem:[%s1697 + $0x8] sm:$0xff]
    %v1700 = vunpack.c.l.bf16 %v1698
    %v1701 = vunpack.c.h.bf16 %v1698
    %v1702 = vunpack.c.l.bf16 %v1699
    %v1703 = vunpack.c.h.bf16 %v1699
    %v1704 = vadd.f32 %v1700, %v407
    %v1705 = vadd.f32 %v1701, %v411
    %v1706 = vadd.f32 %v1702, %v415
    %v1707 = vadd.f32 %v1703, %v419
    %v1708 = vpack.c.bf16 %v1693, %v1693
    %v1709 = vld [vmem:[#allocation5] sm:$0xff]
    %v1710 = vld [vmem:[#allocation5 + $0x8] sm:$0xff]
    %v1711 = vld [vmem:[#allocation5 + $0x10] sm:$0xff]
    %v1712 = vld [vmem:[#allocation5 + $0x18] sm:$0xff]
    %v1713 = vld [vmem:[#allocation5 + $0x20] sm:$0xff]
    %v1714 = vld [vmem:[#allocation5 + $0x28] sm:$0xff]
    %v1715 = vld [vmem:[#allocation5 + $0x30] sm:$0xff]
    %v1716 = vld [vmem:[#allocation5 + $0x38] sm:$0xff]
    %v1717 = vld [vmem:[#allocation5 + $0x40] sm:$0xff]
    %v1718 = vld [vmem:[#allocation5 + $0x48] sm:$0xff]
    %v1719 = vld [vmem:[#allocation5 + $0x50] sm:$0xff]
    %v1720 = vld [vmem:[#allocation5 + $0x58] sm:$0xff]
    %v1721 = vld [vmem:[#allocation5 + $0x60] sm:$0xff]
    %v1722 = vld [vmem:[#allocation5 + $0x68] sm:$0xff]
    %v1723 = vld [vmem:[#allocation5 + $0x70] sm:$0xff]
    %v1724 = vld [vmem:[#allocation5 + $0x78] sm:$0xff]
    %v1725 = vld [vmem:[#allocation5 + $0x80] sm:$0xff]
    %v1726 = vld [vmem:[#allocation5 + $0x88] sm:$0xff]
    %v1727 = vld [vmem:[#allocation5 + $0x90] sm:$0xff]
    %v1728 = vld [vmem:[#allocation5 + $0x98] sm:$0xff]
    %v1729 = vld [vmem:[#allocation5 + $0xa0] sm:$0xff]
    %v1730 = vld [vmem:[#allocation5 + $0xa8] sm:$0xff]
    %v1731 = vld [vmem:[#allocation5 + $0xb0] sm:$0xff]
    %v1732 = vld [vmem:[#allocation5 + $0xb8] sm:$0xff]
    %v1733 = vld [vmem:[#allocation5 + $0xc0] sm:$0xff]
    %v1734 = vld [vmem:[#allocation5 + $0xc8] sm:$0xff]
    %v1735 = vld [vmem:[#allocation5 + $0xd0] sm:$0xff]
    %v1736 = vld [vmem:[#allocation5 + $0xd8] sm:$0xff]
    %v1737 = vld [vmem:[#allocation5 + $0xe0] sm:$0xff]
    %v1738 = vld [vmem:[#allocation5 + $0xe8] sm:$0xff]
    %v1739 = vld [vmem:[#allocation5 + $0xf0] sm:$0xff]
    %v1740 = vld [vmem:[#allocation5 + $0xf8] sm:$0xff]
    %v1773 = vunpack.c.l.b16 %v1709
    %v1774 = vunpack.c.h.b16 %v1709
    %v1775 = vunpack.c.l.b16 %v1710
    %v1776 = vunpack.c.h.b16 %v1710
    %v1777 = vunpack.c.l.b16 %v1711
    %v1778 = vunpack.c.h.b16 %v1711
    %v1779 = vunpack.c.l.b16 %v1712
    %v1780 = vunpack.c.h.b16 %v1712
    %v1781 = vunpack.c.l.b16 %v1713
    %v1782 = vunpack.c.h.b16 %v1713
    %v1783 = vunpack.c.l.b16 %v1714
    %v1784 = vunpack.c.h.b16 %v1714
    %v1785 = vunpack.c.l.b16 %v1715
    %v1786 = vunpack.c.h.b16 %v1715
    %v1787 = vunpack.c.l.b16 %v1716
    %v1788 = vunpack.c.h.b16 %v1716
    %v1789 = vunpack.c.l.b16 %v1717
    %v1790 = vunpack.c.h.b16 %v1717
    %v1791 = vunpack.c.l.b16 %v1718
    %v1792 = vunpack.c.h.b16 %v1718
    %v1793 = vunpack.c.l.b16 %v1719
    %v1794 = vunpack.c.h.b16 %v1719
    %v1795 = vunpack.c.l.b16 %v1720
    %v1796 = vunpack.c.h.b16 %v1720
    %v1797 = vunpack.c.l.b16 %v1721
    %v1798 = vunpack.c.h.b16 %v1721
    %v1799 = vunpack.c.l.b16 %v1722
    %v1800 = vunpack.c.h.b16 %v1722
    %v1801 = vunpack.c.l.b16 %v1723
    %v1802 = vunpack.c.h.b16 %v1723
    %v1803 = vunpack.c.l.b16 %v1724
    %v1804 = vunpack.c.h.b16 %v1724
    %v1805 = vunpack.c.l.b16 %v1725
    %v1806 = vunpack.c.h.b16 %v1725
    %v1807 = vunpack.c.l.b16 %v1726
    %v1808 = vunpack.c.h.b16 %v1726
    %v1809 = vunpack.c.l.b16 %v1727
    %v1810 = vunpack.c.h.b16 %v1727
    %v1811 = vunpack.c.l.b16 %v1728
    %v1812 = vunpack.c.h.b16 %v1728
    %v1813 = vunpack.c.l.b16 %v1729
    %v1814 = vunpack.c.h.b16 %v1729
    %v1815 = vunpack.c.l.b16 %v1730
    %v1816 = vunpack.c.h.b16 %v1730
    %v1817 = vunpack.c.l.b16 %v1731
    %v1818 = vunpack.c.h.b16 %v1731
    %v1819 = vunpack.c.l.b16 %v1732
    %v1820 = vunpack.c.h.b16 %v1732
    %v1821 = vunpack.c.l.b16 %v1733
    %v1822 = vunpack.c.h.b16 %v1733
    %v1823 = vunpack.c.l.b16 %v1734
    %v1824 = vunpack.c.h.b16 %v1734
    %v1825 = vunpack.c.l.b16 %v1735
    %v1826 = vunpack.c.h.b16 %v1735
    %v1827 = vunpack.c.l.b16 %v1736
    %v1828 = vunpack.c.h.b16 %v1736
    %v1829 = vunpack.c.l.b16 %v1737
    %v1830 = vunpack.c.h.b16 %v1737
    %v1831 = vunpack.c.l.b16 %v1738
    %v1832 = vunpack.c.h.b16 %v1738
    %v1833 = vunpack.c.l.b16 %v1739
    %v1834 = vunpack.c.h.b16 %v1739
    %v1835 = vunpack.c.l.b16 %v1740
    %v1836 = vunpack.c.h.b16 %v1740
    %v1837 = vpack.c.b16 %v1777, %v1773
    %v1838 = vpack.c.b16 %v1778, %v1774
    %v1839 = vpack.c.b16 %v1779, %v1775
    %v1840 = vpack.c.b16 %v1780, %v1776
    %v1841 = vpack.c.b16 %v1785, %v1781
    %v1842 = vpack.c.b16 %v1786, %v1782
    %v1843 = vpack.c.b16 %v1787, %v1783
    %v1844 = vpack.c.b16 %v1788, %v1784
    %v1845 = vpack.c.b16 %v1793, %v1789
    %v1846 = vpack.c.b16 %v1794, %v1790
    %v1847 = vpack.c.b16 %v1795, %v1791
    %v1848 = vpack.c.b16 %v1796, %v1792
    %v1849 = vpack.c.b16 %v1801, %v1797
    %v1850 = vpack.c.b16 %v1802, %v1798
    %v1851 = vpack.c.b16 %v1803, %v1799
    %v1852 = vpack.c.b16 %v1804, %v1800
    %v1853 = vpack.c.b16 %v1809, %v1805
    %v1854 = vpack.c.b16 %v1810, %v1806
    %v1855 = vpack.c.b16 %v1811, %v1807
    %v1856 = vpack.c.b16 %v1812, %v1808
    %v1857 = vpack.c.b16 %v1817, %v1813
    %v1858 = vpack.c.b16 %v1818, %v1814
    %v1859 = vpack.c.b16 %v1819, %v1815
    %v1860 = vpack.c.b16 %v1820, %v1816
    %v1861 = vpack.c.b16 %v1825, %v1821
    %v1862 = vpack.c.b16 %v1826, %v1822
    %v1863 = vpack.c.b16 %v1827, %v1823
    %v1864 = vpack.c.b16 %v1828, %v1824
    %v1865 = vpack.c.b16 %v1833, %v1829
    %v1866 = vpack.c.b16 %v1834, %v1830
    %v1867 = vpack.c.b16 %v1835, %v1831
    %v1868 = vpack.c.b16 %v1836, %v1832
    %1901 = vmatprep.subr.bf16.mxu0 %v1866
    %1902 = vmatpush1.bf16.msra.mxu0 %v1865
    %1903 = vmatprep.subr.bf16.mxu0 %v1862
    %1904 = vmatpush1.bf16.msra.mxu0 %v1861
    %1905 = vmatprep.subr.bf16.mxu0 %v1858
    %1906 = vmatpush1.bf16.msra.mxu0 %v1857
    %1907 = vmatprep.subr.bf16.mxu0 %v1854
    %1908 = vmatpush1.bf16.msra.mxu0 %v1853
    %1909 = vmatprep.subr.bf16.mxu0 %v1850
    %1910 = vmatpush1.bf16.msra.mxu0 %v1849
    %1911 = vmatprep.subr.bf16.mxu0 %v1846
    %1912 = vmatpush1.bf16.msra.mxu0 %v1845
    %1913 = vmatprep.subr.bf16.mxu0 %v1842
    %1914 = vmatpush1.bf16.msra.mxu0 %v1841
    %1915 = vmatprep.subr.bf16.mxu0 %v1838
    %1916 = vmatpush1.bf16.msra.mxu0 %v1837
    %1917 = vmatprep.subr.bf16.mxu0 0
    %1918 = vmatpush2.bf16.msra.mxu0 0
    %1919 = vmatprep.subr.bf16.mxu0 0
    %1920 = vmatpush2.bf16.msra.mxu0 0
    %1921 = vmatprep.subr.bf16.mxu0 0
    %1922 = vmatpush2.bf16.msra.mxu0 0
    %1923 = vmatprep.subr.bf16.mxu0 0
    %1924 = vmatpush2.bf16.msra.mxu0 0
    %1925 = vmatprep.subr.bf16.mxu0 0
    %1926 = vmatpush2.bf16.msra.mxu0 0
    %1927 = vmatprep.subr.bf16.mxu0 0
    %1928 = vmatpush2.bf16.msra.mxu0 0
    %1929 = vmatprep.subr.bf16.mxu0 0
    %1930 = vmatpush2.bf16.msra.mxu0 0
    %1931 = vmatprep.subr.bf16.mxu0 0
    %1932 = vmatpush2.bf16.msra.mxu0 0
    %1933 = vmatprep.mubr.bf16.mxu0 0
    %1934 = vmatmul.mubr.bf16.gmra.mxu0 %v1708
    %v1935 = vpop.f32.mrf.mxu0
    %v1936 = vadd.f32 0.0, %v1935
    %v1937 = vpop.f32.mrf.mxu0
    %v1938 = vadd.f32 0.0, %v1937
    %v1939 = vpop.f32.mrf.mxu0
    %v1940 = vpop.f32.mrf.mxu0
    %1941 = vdwg.mxu0
    %1942 = vmatprep.subr.bf16.mxu0 %v1868
    %1943 = vmatpush1.bf16.msra.mxu0 %v1867
    %1944 = vmatprep.subr.bf16.mxu0 %v1864
    %1945 = vmatpush1.bf16.msra.mxu0 %v1863
    %1946 = vmatprep.subr.bf16.mxu0 %v1860
    %1947 = vmatpush1.bf16.msra.mxu0 %v1859
    %1948 = vmatprep.subr.bf16.mxu0 %v1856
    %1949 = vmatpush1.bf16.msra.mxu0 %v1855
    %1950 = vmatprep.subr.bf16.mxu0 %v1852
    %1951 = vmatpush1.bf16.msra.mxu0 %v1851
    %1952 = vmatprep.subr.bf16.mxu0 %v1848
    %1953 = vmatpush1.bf16.msra.mxu0 %v1847
    %1954 = vmatprep.subr.bf16.mxu0 %v1844
    %1955 = vmatpush1.bf16.msra.mxu0 %v1843
    %1956 = vmatprep.subr.bf16.mxu0 %v1840
    %1957 = vmatpush1.bf16.msra.mxu0 %v1839
    %1958 = vmatprep.subr.bf16.mxu0 0
    %1959 = vmatpush2.bf16.msra.mxu0 0
    %1960 = vmatprep.subr.bf16.mxu0 0
    %1961 = vmatpush2.bf16.msra.mxu0 0
    %1962 = vmatprep.subr.bf16.mxu0 0
    %1963 = vmatpush2.bf16.msra.mxu0 0
    %1964 = vmatprep.subr.bf16.mxu0 0
    %1965 = vmatpush2.bf16.msra.mxu0 0
    %1966 = vmatprep.subr.bf16.mxu0 0
    %1967 = vmatpush2.bf16.msra.mxu0 0
    %1968 = vmatprep.subr.bf16.mxu0 0
    %1969 = vmatpush2.bf16.msra.mxu0 0
    %1970 = vmatprep.subr.bf16.mxu0 0
    %1971 = vmatpush2.bf16.msra.mxu0 0
    %1972 = vmatprep.subr.bf16.mxu0 0
    %1973 = vmatpush2.bf16.msra.mxu0 0
    %1974 = vmatprep.mubr.bf16.mxu0 0
    %1975 = vmatmul.mubr.bf16.gmra.mxu0 %v1708
    %v1976 = vpop.f32.mrf.mxu0
    %v1977 = vadd.f32 0.0, %v1976
    %v1978 = vpop.f32.mrf.mxu0
    %v1979 = vadd.f32 0.0, %v1978
    %v1980 = vpop.f32.mrf.mxu0
    %v1981 = vpop.f32.mrf.mxu0
    %1982 = vdwg.mxu0
    %v1983 = vadd.f32 %v1704, %v1936
    %v1984 = vadd.f32 %v1705, %v1938
    %v1985 = vadd.f32 %v1706, %v1977
    %v1986 = vadd.f32 %v1707, %v1979
    %v1987 = vxor.u32 %v1983, 2147483648
    %v1988 = vmul.f32 %v1987, 1.442695
    %v1989 = vpow.pop %v1988
    %v1990 = vadd.f32 %v1989, 1.0
    %v1991 = vrcp.pop %v1990
    %v1992 = vmul.f32 1.0, %v1991
    %v1993 = vxor.u32 %v1984, 2147483648
    %v1994 = vmul.f32 %v1993, 1.442695
    %v1995 = vpow.pop %v1994
    %v1996 = vadd.f32 %v1995, 1.0
    %v1997 = vrcp.pop %v1996
    %v1998 = vmul.f32 1.0, %v1997
    %v1999 = vtanh.pop %v1985
    %v2000 = vxor.u32 %v1986, 2147483648
    %v2001 = vmul.f32 %v2000, 1.442695
    %v2002 = vpow.pop %v2001
    %v2003 = vadd.f32 %v2002, 1.0
    %v2004 = vrcp.pop %v2003
    %v2005 = vmul.f32 1.0, %v2004
    %v2006 = vmul.f32 %v1998, %v1694
    %v2007 = vmul.f32 %v1992, %v1999
    %v2008 = vadd.f32 %v2006, %v2007
    %v2009 = vtanh.pop %v2008
    %v2010 = vmul.f32 %v2005, %v2009
    %2011 = vst [vmem:[#allocation3] sm:$0xff] %v2010
    %2012 = vst [vmem:[#allocation4] sm:$0xff] %v2008
    %v2013 = vld [vmem:[#allocation3] sm:$0xff]
    %v2014 = vld [vmem:[#allocation4] sm:$0xff]
    %s2015 = smul.u32 5, 4
    %s2016 = smul.addr %s2015, 4
    %s2017 = scalar_lea.vmem [#allocation2], %s2016
    %v2018 = vld [vmem:[%s2017] sm:$0xff]
    %v2019 = vld [vmem:[%s2017 + $0x8] sm:$0xff]
    %v2020 = vunpack.c.l.bf16 %v2018
    %v2021 = vunpack.c.h.bf16 %v2018
    %v2022 = vunpack.c.l.bf16 %v2019
    %v2023 = vunpack.c.h.bf16 %v2019
    %v2024 = vadd.f32 %v2020, %v407
    %v2025 = vadd.f32 %v2021, %v411
    %v2026 = vadd.f32 %v2022, %v415
    %v2027 = vadd.f32 %v2023, %v419
    %v2028 = vpack.c.bf16 %v2013, %v2013
    %v2029 = vld [vmem:[#allocation5] sm:$0xff]
    %v2030 = vld [vmem:[#allocation5 + $0x8] sm:$0xff]
    %v2031 = vld [vmem:[#allocation5 + $0x10] sm:$0xff]
    %v2032 = vld [vmem:[#allocation5 + $0x18] sm:$0xff]
    %v2033 = vld [vmem:[#allocation5 + $0x20] sm:$0xff]
    %v2034 = vld [vmem:[#allocation5 + $0x28] sm:$0xff]
    %v2035 = vld [vmem:[#allocation5 + $0x30] sm:$0xff]
    %v2036 = vld [vmem:[#allocation5 + $0x38] sm:$0xff]
    %v2037 = vld [vmem:[#allocation5 + $0x40] sm:$0xff]
    %v2038 = vld [vmem:[#allocation5 + $0x48] sm:$0xff]
    %v2039 = vld [vmem:[#allocation5 + $0x50] sm:$0xff]
    %v2040 = vld [vmem:[#allocation5 + $0x58] sm:$0xff]
    %v2041 = vld [vmem:[#allocation5 + $0x60] sm:$0xff]
    %v2042 = vld [vmem:[#allocation5 + $0x68] sm:$0xff]
    %v2043 = vld [vmem:[#allocation5 + $0x70] sm:$0xff]
    %v2044 = vld [vmem:[#allocation5 + $0x78] sm:$0xff]
    %v2045 = vld [vmem:[#allocation5 + $0x80] sm:$0xff]
    %v2046 = vld [vmem:[#allocation5 + $0x88] sm:$0xff]
    %v2047 = vld [vmem:[#allocation5 + $0x90] sm:$0xff]
    %v2048 = vld [vmem:[#allocation5 + $0x98] sm:$0xff]
    %v2049 = vld [vmem:[#allocation5 + $0xa0] sm:$0xff]
    %v2050 = vld [vmem:[#allocation5 + $0xa8] sm:$0xff]
    %v2051 = vld [vmem:[#allocation5 + $0xb0] sm:$0xff]
    %v2052 = vld [vmem:[#allocation5 + $0xb8] sm:$0xff]
    %v2053 = vld [vmem:[#allocation5 + $0xc0] sm:$0xff]
    %v2054 = vld [vmem:[#allocation5 + $0xc8] sm:$0xff]
    %v2055 = vld [vmem:[#allocation5 + $0xd0] sm:$0xff]
    %v2056 = vld [vmem:[#allocation5 + $0xd8] sm:$0xff]
    %v2057 = vld [vmem:[#allocation5 + $0xe0] sm:$0xff]
    %v2058 = vld [vmem:[#allocation5 + $0xe8] sm:$0xff]
    %v2059 = vld [vmem:[#allocation5 + $0xf0] sm:$0xff]
    %v2060 = vld [vmem:[#allocation5 + $0xf8] sm:$0xff]
    %v2093 = vunpack.c.l.b16 %v2029
    %v2094 = vunpack.c.h.b16 %v2029
    %v2095 = vunpack.c.l.b16 %v2030
    %v2096 = vunpack.c.h.b16 %v2030
    %v2097 = vunpack.c.l.b16 %v2031
    %v2098 = vunpack.c.h.b16 %v2031
    %v2099 = vunpack.c.l.b16 %v2032
    %v2100 = vunpack.c.h.b16 %v2032
    %v2101 = vunpack.c.l.b16 %v2033
    %v2102 = vunpack.c.h.b16 %v2033
    %v2103 = vunpack.c.l.b16 %v2034
    %v2104 = vunpack.c.h.b16 %v2034
    %v2105 = vunpack.c.l.b16 %v2035
    %v2106 = vunpack.c.h.b16 %v2035
    %v2107 = vunpack.c.l.b16 %v2036
    %v2108 = vunpack.c.h.b16 %v2036
    %v2109 = vunpack.c.l.b16 %v2037
    %v2110 = vunpack.c.h.b16 %v2037
    %v2111 = vunpack.c.l.b16 %v2038
    %v2112 = vunpack.c.h.b16 %v2038
    %v2113 = vunpack.c.l.b16 %v2039
    %v2114 = vunpack.c.h.b16 %v2039
    %v2115 = vunpack.c.l.b16 %v2040
    %v2116 = vunpack.c.h.b16 %v2040
    %v2117 = vunpack.c.l.b16 %v2041
    %v2118 = vunpack.c.h.b16 %v2041
    %v2119 = vunpack.c.l.b16 %v2042
    %v2120 = vunpack.c.h.b16 %v2042
    %v2121 = vunpack.c.l.b16 %v2043
    %v2122 = vunpack.c.h.b16 %v2043
    %v2123 = vunpack.c.l.b16 %v2044
    %v2124 = vunpack.c.h.b16 %v2044
    %v2125 = vunpack.c.l.b16 %v2045
    %v2126 = vunpack.c.h.b16 %v2045
    %v2127 = vunpack.c.l.b16 %v2046
    %v2128 = vunpack.c.h.b16 %v2046
    %v2129 = vunpack.c.l.b16 %v2047
    %v2130 = vunpack.c.h.b16 %v2047
    %v2131 = vunpack.c.l.b16 %v2048
    %v2132 = vunpack.c.h.b16 %v2048
    %v2133 = vunpack.c.l.b16 %v2049
    %v2134 = vunpack.c.h.b16 %v2049
    %v2135 = vunpack.c.l.b16 %v2050
    %v2136 = vunpack.c.h.b16 %v2050
    %v2137 = vunpack.c.l.b16 %v2051
    %v2138 = vunpack.c.h.b16 %v2051
    %v2139 = vunpack.c.l.b16 %v2052
    %v2140 = vunpack.c.h.b16 %v2052
    %v2141 = vunpack.c.l.b16 %v2053
    %v2142 = vunpack.c.h.b16 %v2053
    %v2143 = vunpack.c.l.b16 %v2054
    %v2144 = vunpack.c.h.b16 %v2054
    %v2145 = vunpack.c.l.b16 %v2055
    %v2146 = vunpack.c.h.b16 %v2055
    %v2147 = vunpack.c.l.b16 %v2056
    %v2148 = vunpack.c.h.b16 %v2056
    %v2149 = vunpack.c.l.b16 %v2057
    %v2150 = vunpack.c.h.b16 %v2057
    %v2151 = vunpack.c.l.b16 %v2058
    %v2152 = vunpack.c.h.b16 %v2058
    %v2153 = vunpack.c.l.b16 %v2059
    %v2154 = vunpack.c.h.b16 %v2059
    %v2155 = vunpack.c.l.b16 %v2060
    %v2156 = vunpack.c.h.b16 %v2060
    %v2157 = vpack.c.b16 %v2097, %v2093
    %v2158 = vpack.c.b16 %v2098, %v2094
    %v2159 = vpack.c.b16 %v2099, %v2095
    %v2160 = vpack.c.b16 %v2100, %v2096
    %v2161 = vpack.c.b16 %v2105, %v2101
    %v2162 = vpack.c.b16 %v2106, %v2102
    %v2163 = vpack.c.b16 %v2107, %v2103
    %v2164 = vpack.c.b16 %v2108, %v2104
    %v2165 = vpack.c.b16 %v2113, %v2109
    %v2166 = vpack.c.b16 %v2114, %v2110
    %v2167 = vpack.c.b16 %v2115, %v2111
    %v2168 = vpack.c.b16 %v2116, %v2112
    %v2169 = vpack.c.b16 %v2121, %v2117
    %v2170 = vpack.c.b16 %v2122, %v2118
    %v2171 = vpack.c.b16 %v2123, %v2119
    %v2172 = vpack.c.b16 %v2124, %v2120
    %v2173 = vpack.c.b16 %v2129, %v2125
    %v2174 = vpack.c.b16 %v2130, %v2126
    %v2175 = vpack.c.b16 %v2131, %v2127
    %v2176 = vpack.c.b16 %v2132, %v2128
    %v2177 = vpack.c.b16 %v2137, %v2133
    %v2178 = vpack.c.b16 %v2138, %v2134
    %v2179 = vpack.c.b16 %v2139, %v2135
    %v2180 = vpack.c.b16 %v2140, %v2136
    %v2181 = vpack.c.b16 %v2145, %v2141
    %v2182 = vpack.c.b16 %v2146, %v2142
    %v2183 = vpack.c.b16 %v2147, %v2143
    %v2184 = vpack.c.b16 %v2148, %v2144
    %v2185 = vpack.c.b16 %v2153, %v2149
    %v2186 = vpack.c.b16 %v2154, %v2150
    %v2187 = vpack.c.b16 %v2155, %v2151
    %v2188 = vpack.c.b16 %v2156, %v2152
    %2221 = vmatprep.subr.bf16.mxu0 %v2186
    %2222 = vmatpush1.bf16.msra.mxu0 %v2185
    %2223 = vmatprep.subr.bf16.mxu0 %v2182
    %2224 = vmatpush1.bf16.msra.mxu0 %v2181
    %2225 = vmatprep.subr.bf16.mxu0 %v2178
    %2226 = vmatpush1.bf16.msra.mxu0 %v2177
    %2227 = vmatprep.subr.bf16.mxu0 %v2174
    %2228 = vmatpush1.bf16.msra.mxu0 %v2173
    %2229 = vmatprep.subr.bf16.mxu0 %v2170
    %2230 = vmatpush1.bf16.msra.mxu0 %v2169
    %2231 = vmatprep.subr.bf16.mxu0 %v2166
    %2232 = vmatpush1.bf16.msra.mxu0 %v2165
    %2233 = vmatprep.subr.bf16.mxu0 %v2162
    %2234 = vmatpush1.bf16.msra.mxu0 %v2161
    %2235 = vmatprep.subr.bf16.mxu0 %v2158
    %2236 = vmatpush1.bf16.msra.mxu0 %v2157
    %2237 = vmatprep.subr.bf16.mxu0 0
    %2238 = vmatpush2.bf16.msra.mxu0 0
    %2239 = vmatprep.subr.bf16.mxu0 0
    %2240 = vmatpush2.bf16.msra.mxu0 0
    %2241 = vmatprep.subr.bf16.mxu0 0
    %2242 = vmatpush2.bf16.msra.mxu0 0
    %2243 = vmatprep.subr.bf16.mxu0 0
    %2244 = vmatpush2.bf16.msra.mxu0 0
    %2245 = vmatprep.subr.bf16.mxu0 0
    %2246 = vmatpush2.bf16.msra.mxu0 0
    %2247 = vmatprep.subr.bf16.mxu0 0
    %2248 = vmatpush2.bf16.msra.mxu0 0
    %2249 = vmatprep.subr.bf16.mxu0 0
    %2250 = vmatpush2.bf16.msra.mxu0 0
    %2251 = vmatprep.subr.bf16.mxu0 0
    %2252 = vmatpush2.bf16.msra.mxu0 0
    %2253 = vmatprep.mubr.bf16.mxu0 0
    %2254 = vmatmul.mubr.bf16.gmra.mxu0 %v2028
    %v2255 = vpop.f32.mrf.mxu0
    %v2256 = vadd.f32 0.0, %v2255
    %v2257 = vpop.f32.mrf.mxu0
    %v2258 = vadd.f32 0.0, %v2257
    %v2259 = vpop.f32.mrf.mxu0
    %v2260 = vpop.f32.mrf.mxu0
    %2261 = vdwg.mxu0
    %2262 = vmatprep.subr.bf16.mxu0 %v2188
    %2263 = vmatpush1.bf16.msra.mxu0 %v2187
    %2264 = vmatprep.subr.bf16.mxu0 %v2184
    %2265 = vmatpush1.bf16.msra.mxu0 %v2183
    %2266 = vmatprep.subr.bf16.mxu0 %v2180
    %2267 = vmatpush1.bf16.msra.mxu0 %v2179
    %2268 = vmatprep.subr.bf16.mxu0 %v2176
    %2269 = vmatpush1.bf16.msra.mxu0 %v2175
    %2270 = vmatprep.subr.bf16.mxu0 %v2172
    %2271 = vmatpush1.bf16.msra.mxu0 %v2171
    %2272 = vmatprep.subr.bf16.mxu0 %v2168
    %2273 = vmatpush1.bf16.msra.mxu0 %v2167
    %2274 = vmatprep.subr.bf16.mxu0 %v2164
    %2275 = vmatpush1.bf16.msra.mxu0 %v2163
    %2276 = vmatprep.subr.bf16.mxu0 %v2160
    %2277 = vmatpush1.bf16.msra.mxu0 %v2159
    %2278 = vmatprep.subr.bf16.mxu0 0
    %2279 = vmatpush2.bf16.msra.mxu0 0
    %2280 = vmatprep.subr.bf16.mxu0 0
    %2281 = vmatpush2.bf16.msra.mxu0 0
    %2282 = vmatprep.subr.bf16.mxu0 0
    %2283 = vmatpush2.bf16.msra.mxu0 0
    %2284 = vmatprep.subr.bf16.mxu0 0
    %2285 = vmatpush2.bf16.msra.mxu0 0
    %2286 = vmatprep.subr.bf16.mxu0 0
    %2287 = vmatpush2.bf16.msra.mxu0 0
    %2288 = vmatprep.subr.bf16.mxu0 0
    %2289 = vmatpush2.bf16.msra.mxu0 0
    %2290 = vmatprep.subr.bf16.mxu0 0
    %2291 = vmatpush2.bf16.msra.mxu0 0
    %2292 = vmatprep.subr.bf16.mxu0 0
    %2293 = vmatpush2.bf16.msra.mxu0 0
    %2294 = vmatprep.mubr.bf16.mxu0 0
    %2295 = vmatmul.mubr.bf16.gmra.mxu0 %v2028
    %v2296 = vpop.f32.mrf.mxu0
    %v2297 = vadd.f32 0.0, %v2296
    %v2298 = vpop.f32.mrf.mxu0
    %v2299 = vadd.f32 0.0, %v2298
    %v2300 = vpop.f32.mrf.mxu0
    %v2301 = vpop.f32.mrf.mxu0
    %2302 = vdwg.mxu0
    %v2303 = vadd.f32 %v2024, %v2256
    %v2304 = vadd.f32 %v2025, %v2258
    %v2305 = vadd.f32 %v2026, %v2297
    %v2306 = vadd.f32 %v2027, %v2299
    %v2307 = vxor.u32 %v2303, 2147483648
    %v2308 = vmul.f32 %v2307, 1.442695
    %v2309 = vpow.pop %v2308
    %v2310 = vadd.f32 %v2309, 1.0
    %v2311 = vrcp.pop %v2310
    %v2312 = vmul.f32 1.0, %v2311
    %v2313 = vxor.u32 %v2304, 2147483648
    %v2314 = vmul.f32 %v2313, 1.442695
    %v2315 = vpow.pop %v2314
    %v2316 = vadd.f32 %v2315, 1.0
    %v2317 = vrcp.pop %v2316
    %v2318 = vmul.f32 1.0, %v2317
    %v2319 = vtanh.pop %v2305
    %v2320 = vxor.u32 %v2306, 2147483648
    %v2321 = vmul.f32 %v2320, 1.442695
    %v2322 = vpow.pop %v2321
    %v2323 = vadd.f32 %v2322, 1.0
    %v2324 = vrcp.pop %v2323
    %v2325 = vmul.f32 1.0, %v2324
    %v2326 = vmul.f32 %v2318, %v2014
    %v2327 = vmul.f32 %v2312, %v2319
    %v2328 = vadd.f32 %v2326, %v2327
    %v2329 = vtanh.pop %v2328
    %v2330 = vmul.f32 %v2325, %v2329
    %2331 = vst [vmem:[#allocation3] sm:$0xff] %v2330
    %2332 = vst [vmem:[#allocation4] sm:$0xff] %v2328
    %v2333 = vld [vmem:[#allocation3] sm:$0xff]
    %v2334 = vld [vmem:[#allocation4] sm:$0xff]
    %s2335 = smul.u32 6, 4
    %s2336 = smul.addr %s2335, 4
    %s2337 = scalar_lea.vmem [#allocation2], %s2336
    %v2338 = vld [vmem:[%s2337] sm:$0xff]
    %v2339 = vld [vmem:[%s2337 + $0x8] sm:$0xff]
    %v2340 = vunpack.c.l.bf16 %v2338
    %v2341 = vunpack.c.h.bf16 %v2338
    %v2342 = vunpack.c.l.bf16 %v2339
    %v2343 = vunpack.c.h.bf16 %v2339
    %v2344 = vadd.f32 %v2340, %v407
    %v2345 = vadd.f32 %v2341, %v411
    %v2346 = vadd.f32 %v2342, %v415
    %v2347 = vadd.f32 %v2343, %v419
    %v2348 = vpack.c.bf16 %v2333, %v2333
    %v2349 = vld [vmem:[#allocation5] sm:$0xff]
    %v2350 = vld [vmem:[#allocation5 + $0x8] sm:$0xff]
    %v2351 = vld [vmem:[#allocation5 + $0x10] sm:$0xff]
    %v2352 = vld [vmem:[#allocation5 + $0x18] sm:$0xff]
    %v2353 = vld [vmem:[#allocation5 + $0x20] sm:$0xff]
    %v2354 = vld [vmem:[#allocation5 + $0x28] sm:$0xff]
    %v2355 = vld [vmem:[#allocation5 + $0x30] sm:$0xff]
    %v2356 = vld [vmem:[#allocation5 + $0x38] sm:$0xff]
    %v2357 = vld [vmem:[#allocation5 + $0x40] sm:$0xff]
    %v2358 = vld [vmem:[#allocation5 + $0x48] sm:$0xff]
    %v2359 = vld [vmem:[#allocation5 + $0x50] sm:$0xff]
    %v2360 = vld [vmem:[#allocation5 + $0x58] sm:$0xff]
    %v2361 = vld [vmem:[#allocation5 + $0x60] sm:$0xff]
    %v2362 = vld [vmem:[#allocation5 + $0x68] sm:$0xff]
    %v2363 = vld [vmem:[#allocation5 + $0x70] sm:$0xff]
    %v2364 = vld [vmem:[#allocation5 + $0x78] sm:$0xff]
    %v2365 = vld [vmem:[#allocation5 + $0x80] sm:$0xff]
    %v2366 = vld [vmem:[#allocation5 + $0x88] sm:$0xff]
    %v2367 = vld [vmem:[#allocation5 + $0x90] sm:$0xff]
    %v2368 = vld [vmem:[#allocation5 + $0x98] sm:$0xff]
    %v2369 = vld [vmem:[#allocation5 + $0xa0] sm:$0xff]
    %v2370 = vld [vmem:[#allocation5 + $0xa8] sm:$0xff]
    %v2371 = vld [vmem:[#allocation5 + $0xb0] sm:$0xff]
    %v2372 = vld [vmem:[#allocation5 + $0xb8] sm:$0xff]
    %v2373 = vld [vmem:[#allocation5 + $0xc0] sm:$0xff]
    %v2374 = vld [vmem:[#allocation5 + $0xc8] sm:$0xff]
    %v2375 = vld [vmem:[#allocation5 + $0xd0] sm:$0xff]
    %v2376 = vld [vmem:[#allocation5 + $0xd8] sm:$0xff]
    %v2377 = vld [vmem:[#allocation5 + $0xe0] sm:$0xff]
    %v2378 = vld [vmem:[#allocation5 + $0xe8] sm:$0xff]
    %v2379 = vld [vmem:[#allocation5 + $0xf0] sm:$0xff]
    %v2380 = vld [vmem:[#allocation5 + $0xf8] sm:$0xff]
    %v2413 = vunpack.c.l.b16 %v2349
    %v2414 = vunpack.c.h.b16 %v2349
    %v2415 = vunpack.c.l.b16 %v2350
    %v2416 = vunpack.c.h.b16 %v2350
    %v2417 = vunpack.c.l.b16 %v2351
    %v2418 = vunpack.c.h.b16 %v2351
    %v2419 = vunpack.c.l.b16 %v2352
    %v2420 = vunpack.c.h.b16 %v2352
    %v2421 = vunpack.c.l.b16 %v2353
    %v2422 = vunpack.c.h.b16 %v2353
    %v2423 = vunpack.c.l.b16 %v2354
    %v2424 = vunpack.c.h.b16 %v2354
    %v2425 = vunpack.c.l.b16 %v2355
    %v2426 = vunpack.c.h.b16 %v2355
    %v2427 = vunpack.c.l.b16 %v2356
    %v2428 = vunpack.c.h.b16 %v2356
    %v2429 = vunpack.c.l.b16 %v2357
    %v2430 = vunpack.c.h.b16 %v2357
    %v2431 = vunpack.c.l.b16 %v2358
    %v2432 = vunpack.c.h.b16 %v2358
    %v2433 = vunpack.c.l.b16 %v2359
    %v2434 = vunpack.c.h.b16 %v2359
    %v2435 = vunpack.c.l.b16 %v2360
    %v2436 = vunpack.c.h.b16 %v2360
    %v2437 = vunpack.c.l.b16 %v2361
    %v2438 = vunpack.c.h.b16 %v2361
    %v2439 = vunpack.c.l.b16 %v2362
    %v2440 = vunpack.c.h.b16 %v2362
    %v2441 = vunpack.c.l.b16 %v2363
    %v2442 = vunpack.c.h.b16 %v2363
    %v2443 = vunpack.c.l.b16 %v2364
    %v2444 = vunpack.c.h.b16 %v2364
    %v2445 = vunpack.c.l.b16 %v2365
    %v2446 = vunpack.c.h.b16 %v2365
    %v2447 = vunpack.c.l.b16 %v2366
    %v2448 = vunpack.c.h.b16 %v2366
    %v2449 = vunpack.c.l.b16 %v2367
    %v2450 = vunpack.c.h.b16 %v2367
    %v2451 = vunpack.c.l.b16 %v2368
    %v2452 = vunpack.c.h.b16 %v2368
    %v2453 = vunpack.c.l.b16 %v2369
    %v2454 = vunpack.c.h.b16 %v2369
    %v2455 = vunpack.c.l.b16 %v2370
    %v2456 = vunpack.c.h.b16 %v2370
    %v2457 = vunpack.c.l.b16 %v2371
    %v2458 = vunpack.c.h.b16 %v2371
    %v2459 = vunpack.c.l.b16 %v2372
    %v2460 = vunpack.c.h.b16 %v2372
    %v2461 = vunpack.c.l.b16 %v2373
    %v2462 = vunpack.c.h.b16 %v2373
    %v2463 = vunpack.c.l.b16 %v2374
    %v2464 = vunpack.c.h.b16 %v2374
    %v2465 = vunpack.c.l.b16 %v2375
    %v2466 = vunpack.c.h.b16 %v2375
    %v2467 = vunpack.c.l.b16 %v2376
    %v2468 = vunpack.c.h.b16 %v2376
    %v2469 = vunpack.c.l.b16 %v2377
    %v2470 = vunpack.c.h.b16 %v2377
    %v2471 = vunpack.c.l.b16 %v2378
    %v2472 = vunpack.c.h.b16 %v2378
    %v2473 = vunpack.c.l.b16 %v2379
    %v2474 = vunpack.c.h.b16 %v2379
    %v2475 = vunpack.c.l.b16 %v2380
    %v2476 = vunpack.c.h.b16 %v2380
    %v2477 = vpack.c.b16 %v2417, %v2413
    %v2478 = vpack.c.b16 %v2418, %v2414
    %v2479 = vpack.c.b16 %v2419, %v2415
    %v2480 = vpack.c.b16 %v2420, %v2416
    %v2481 = vpack.c.b16 %v2425, %v2421
    %v2482 = vpack.c.b16 %v2426, %v2422
    %v2483 = vpack.c.b16 %v2427, %v2423
    %v2484 = vpack.c.b16 %v2428, %v2424
    %v2485 = vpack.c.b16 %v2433, %v2429
    %v2486 = vpack.c.b16 %v2434, %v2430
    %v2487 = vpack.c.b16 %v2435, %v2431
    %v2488 = vpack.c.b16 %v2436, %v2432
    %v2489 = vpack.c.b16 %v2441, %v2437
    %v2490 = vpack.c.b16 %v2442, %v2438
    %v2491 = vpack.c.b16 %v2443, %v2439
    %v2492 = vpack.c.b16 %v2444, %v2440
    %v2493 = vpack.c.b16 %v2449, %v2445
    %v2494 = vpack.c.b16 %v2450, %v2446
    %v2495 = vpack.c.b16 %v2451, %v2447
    %v2496 = vpack.c.b16 %v2452, %v2448
    %v2497 = vpack.c.b16 %v2457, %v2453
    %v2498 = vpack.c.b16 %v2458, %v2454
    %v2499 = vpack.c.b16 %v2459, %v2455
    %v2500 = vpack.c.b16 %v2460, %v2456
    %v2501 = vpack.c.b16 %v2465, %v2461
    %v2502 = vpack.c.b16 %v2466, %v2462
    %v2503 = vpack.c.b16 %v2467, %v2463
    %v2504 = vpack.c.b16 %v2468, %v2464
    %v2505 = vpack.c.b16 %v2473, %v2469
    %v2506 = vpack.c.b16 %v2474, %v2470
    %v2507 = vpack.c.b16 %v2475, %v2471
    %v2508 = vpack.c.b16 %v2476, %v2472
    %2541 = vmatprep.subr.bf16.mxu0 %v2506
    %2542 = vmatpush1.bf16.msra.mxu0 %v2505
    %2543 = vmatprep.subr.bf16.mxu0 %v2502
    %2544 = vmatpush1.bf16.msra.mxu0 %v2501
    %2545 = vmatprep.subr.bf16.mxu0 %v2498
    %2546 = vmatpush1.bf16.msra.mxu0 %v2497
    %2547 = vmatprep.subr.bf16.mxu0 %v2494
    %2548 = vmatpush1.bf16.msra.mxu0 %v2493
    %2549 = vmatprep.subr.bf16.mxu0 %v2490
    %2550 = vmatpush1.bf16.msra.mxu0 %v2489
    %2551 = vmatprep.subr.bf16.mxu0 %v2486
    %2552 = vmatpush1.bf16.msra.mxu0 %v2485
    %2553 = vmatprep.subr.bf16.mxu0 %v2482
    %2554 = vmatpush1.bf16.msra.mxu0 %v2481
    %2555 = vmatprep.subr.bf16.mxu0 %v2478
    %2556 = vmatpush1.bf16.msra.mxu0 %v2477
    %2557 = vmatprep.subr.bf16.mxu0 0
    %2558 = vmatpush2.bf16.msra.mxu0 0
    %2559 = vmatprep.subr.bf16.mxu0 0
    %2560 = vmatpush2.bf16.msra.mxu0 0
    %2561 = vmatprep.subr.bf16.mxu0 0
    %2562 = vmatpush2.bf16.msra.mxu0 0
    %2563 = vmatprep.subr.bf16.mxu0 0
    %2564 = vmatpush2.bf16.msra.mxu0 0
    %2565 = vmatprep.subr.bf16.mxu0 0
    %2566 = vmatpush2.bf16.msra.mxu0 0
    %2567 = vmatprep.subr.bf16.mxu0 0
    %2568 = vmatpush2.bf16.msra.mxu0 0
    %2569 = vmatprep.subr.bf16.mxu0 0
    %2570 = vmatpush2.bf16.msra.mxu0 0
    %2571 = vmatprep.subr.bf16.mxu0 0
    %2572 = vmatpush2.bf16.msra.mxu0 0
    %2573 = vmatprep.mubr.bf16.mxu0 0
    %2574 = vmatmul.mubr.bf16.gmra.mxu0 %v2348
    %v2575 = vpop.f32.mrf.mxu0
    %v2576 = vadd.f32 0.0, %v2575
    %v2577 = vpop.f32.mrf.mxu0
    %v2578 = vadd.f32 0.0, %v2577
    %v2579 = vpop.f32.mrf.mxu0
    %v2580 = vpop.f32.mrf.mxu0
    %2581 = vdwg.mxu0
    %2582 = vmatprep.subr.bf16.mxu0 %v2508
    %2583 = vmatpush1.bf16.msra.mxu0 %v2507
    %2584 = vmatprep.subr.bf16.mxu0 %v2504
    %2585 = vmatpush1.bf16.msra.mxu0 %v2503
    %2586 = vmatprep.subr.bf16.mxu0 %v2500
    %2587 = vmatpush1.bf16.msra.mxu0 %v2499
    %2588 = vmatprep.subr.bf16.mxu0 %v2496
    %2589 = vmatpush1.bf16.msra.mxu0 %v2495
    %2590 = vmatprep.subr.bf16.mxu0 %v2492
    %2591 = vmatpush1.bf16.msra.mxu0 %v2491
    %2592 = vmatprep.subr.bf16.mxu0 %v2488
    %2593 = vmatpush1.bf16.msra.mxu0 %v2487
    %2594 = vmatprep.subr.bf16.mxu0 %v2484
    %2595 = vmatpush1.bf16.msra.mxu0 %v2483
    %2596 = vmatprep.subr.bf16.mxu0 %v2480
    %2597 = vmatpush1.bf16.msra.mxu0 %v2479
    %2598 = vmatprep.subr.bf16.mxu0 0
    %2599 = vmatpush2.bf16.msra.mxu0 0
    %2600 = vmatprep.subr.bf16.mxu0 0
    %2601 = vmatpush2.bf16.msra.mxu0 0
    %2602 = vmatprep.subr.bf16.mxu0 0
    %2603 = vmatpush2.bf16.msra.mxu0 0
    %2604 = vmatprep.subr.bf16.mxu0 0
    %2605 = vmatpush2.bf16.msra.mxu0 0
    %2606 = vmatprep.subr.bf16.mxu0 0
    %2607 = vmatpush2.bf16.msra.mxu0 0
    %2608 = vmatprep.subr.bf16.mxu0 0
    %2609 = vmatpush2.bf16.msra.mxu0 0
    %2610 = vmatprep.subr.bf16.mxu0 0
    %2611 = vmatpush2.bf16.msra.mxu0 0
    %2612 = vmatprep.subr.bf16.mxu0 0
    %2613 = vmatpush2.bf16.msra.mxu0 0
    %2614 = vmatprep.mubr.bf16.mxu0 0
    %2615 = vmatmul.mubr.bf16.gmra.mxu0 %v2348
    %v2616 = vpop.f32.mrf.mxu0
    %v2617 = vadd.f32 0.0, %v2616
    %v2618 = vpop.f32.mrf.mxu0
    %v2619 = vadd.f32 0.0, %v2618
    %v2620 = vpop.f32.mrf.mxu0
    %v2621 = vpop.f32.mrf.mxu0
    %2622 = vdwg.mxu0
    %v2623 = vadd.f32 %v2344, %v2576
    %v2624 = vadd.f32 %v2345, %v2578
    %v2625 = vadd.f32 %v2346, %v2617
    %v2626 = vadd.f32 %v2347, %v2619
    %v2627 = vxor.u32 %v2623, 2147483648
    %v2628 = vmul.f32 %v2627, 1.442695
    %v2629 = vpow.pop %v2628
    %v2630 = vadd.f32 %v2629, 1.0
    %v2631 = vrcp.pop %v2630
    %v2632 = vmul.f32 1.0, %v2631
    %v2633 = vxor.u32 %v2624, 2147483648
    %v2634 = vmul.f32 %v2633, 1.442695
    %v2635 = vpow.pop %v2634
    %v2636 = vadd.f32 %v2635, 1.0
    %v2637 = vrcp.pop %v2636
    %v2638 = vmul.f32 1.0, %v2637
    %v2639 = vtanh.pop %v2625
    %v2640 = vxor.u32 %v2626, 2147483648
    %v2641 = vmul.f32 %v2640, 1.442695
    %v2642 = vpow.pop %v2641
    %v2643 = vadd.f32 %v2642, 1.0
    %v2644 = vrcp.pop %v2643
    %v2645 = vmul.f32 1.0, %v2644
    %v2646 = vmul.f32 %v2638, %v2334
    %v2647 = vmul.f32 %v2632, %v2639
    %v2648 = vadd.f32 %v2646, %v2647
    %v2649 = vtanh.pop %v2648
    %v2650 = vmul.f32 %v2645, %v2649
    %2651 = vst [vmem:[#allocation3] sm:$0xff] %v2650
    %2652 = vst [vmem:[#allocation4] sm:$0xff] %v2648
    %v2653 = vld [vmem:[#allocation3] sm:$0xff]
    %v2654 = vld [vmem:[#allocation4] sm:$0xff]
    %s2655 = smul.u32 7, 4
    %s2656 = smul.addr %s2655, 4
    %s2657 = scalar_lea.vmem [#allocation2], %s2656
    %v2658 = vld [vmem:[%s2657] sm:$0xff]
    %v2659 = vld [vmem:[%s2657 + $0x8] sm:$0xff]
    %v2660 = vunpack.c.l.bf16 %v2658
    %v2661 = vunpack.c.h.bf16 %v2658
    %v2662 = vunpack.c.l.bf16 %v2659
    %v2663 = vunpack.c.h.bf16 %v2659
    %v2664 = vadd.f32 %v2660, %v407
    %v2665 = vadd.f32 %v2661, %v411
    %v2666 = vadd.f32 %v2662, %v415
    %v2667 = vadd.f32 %v2663, %v419
    %v2668 = vpack.c.bf16 %v2653, %v2653
    %v2669 = vld [vmem:[#allocation5] sm:$0xff]
    %v2670 = vld [vmem:[#allocation5 + $0x8] sm:$0xff]
    %v2671 = vld [vmem:[#allocation5 + $0x10] sm:$0xff]
    %v2672 = vld [vmem:[#allocation5 + $0x18] sm:$0xff]
    %v2673 = vld [vmem:[#allocation5 + $0x20] sm:$0xff]
    %v2674 = vld [vmem:[#allocation5 + $0x28] sm:$0xff]
    %v2675 = vld [vmem:[#allocation5 + $0x30] sm:$0xff]
    %v2676 = vld [vmem:[#allocation5 + $0x38] sm:$0xff]
    %v2677 = vld [vmem:[#allocation5 + $0x40] sm:$0xff]
    %v2678 = vld [vmem:[#allocation5 + $0x48] sm:$0xff]
    %v2679 = vld [vmem:[#allocation5 + $0x50] sm:$0xff]
    %v2680 = vld [vmem:[#allocation5 + $0x58] sm:$0xff]
    %v2681 = vld [vmem:[#allocation5 + $0x60] sm:$0xff]
    %v2682 = vld [vmem:[#allocation5 + $0x68] sm:$0xff]
    %v2683 = vld [vmem:[#allocation5 + $0x70] sm:$0xff]
    %v2684 = vld [vmem:[#allocation5 + $0x78] sm:$0xff]
    %v2685 = vld [vmem:[#allocation5 + $0x80] sm:$0xff]
    %v2686 = vld [vmem:[#allocation5 + $0x88] sm:$0xff]
    %v2687 = vld [vmem:[#allocation5 + $0x90] sm:$0xff]
    %v2688 = vld [vmem:[#allocation5 + $0x98] sm:$0xff]
    %v2689 = vld [vmem:[#allocation5 + $0xa0] sm:$0xff]
    %v2690 = vld [vmem:[#allocation5 + $0xa8] sm:$0xff]
    %v2691 = vld [vmem:[#allocation5 + $0xb0] sm:$0xff]
    %v2692 = vld [vmem:[#allocation5 + $0xb8] sm:$0xff]
    %v2693 = vld [vmem:[#allocation5 + $0xc0] sm:$0xff]
    %v2694 = vld [vmem:[#allocation5 + $0xc8] sm:$0xff]
    %v2695 = vld [vmem:[#allocation5 + $0xd0] sm:$0xff]
    %v2696 = vld [vmem:[#allocation5 + $0xd8] sm:$0xff]
    %v2697 = vld [vmem:[#allocation5 + $0xe0] sm:$0xff]
    %v2698 = vld [vmem:[#allocation5 + $0xe8] sm:$0xff]
    %v2699 = vld [vmem:[#allocation5 + $0xf0] sm:$0xff]
    %v2700 = vld [vmem:[#allocation5 + $0xf8] sm:$0xff]
    %v2733 = vunpack.c.l.b16 %v2669
    %v2734 = vunpack.c.h.b16 %v2669
    %v2735 = vunpack.c.l.b16 %v2670
    %v2736 = vunpack.c.h.b16 %v2670
    %v2737 = vunpack.c.l.b16 %v2671
    %v2738 = vunpack.c.h.b16 %v2671
    %v2739 = vunpack.c.l.b16 %v2672
    %v2740 = vunpack.c.h.b16 %v2672
    %v2741 = vunpack.c.l.b16 %v2673
    %v2742 = vunpack.c.h.b16 %v2673
    %v2743 = vunpack.c.l.b16 %v2674
    %v2744 = vunpack.c.h.b16 %v2674
    %v2745 = vunpack.c.l.b16 %v2675
    %v2746 = vunpack.c.h.b16 %v2675
    %v2747 = vunpack.c.l.b16 %v2676
    %v2748 = vunpack.c.h.b16 %v2676
    %v2749 = vunpack.c.l.b16 %v2677
    %v2750 = vunpack.c.h.b16 %v2677
    %v2751 = vunpack.c.l.b16 %v2678
    %v2752 = vunpack.c.h.b16 %v2678
    %v2753 = vunpack.c.l.b16 %v2679
    %v2754 = vunpack.c.h.b16 %v2679
    %v2755 = vunpack.c.l.b16 %v2680
    %v2756 = vunpack.c.h.b16 %v2680
    %v2757 = vunpack.c.l.b16 %v2681
    %v2758 = vunpack.c.h.b16 %v2681
    %v2759 = vunpack.c.l.b16 %v2682
    %v2760 = vunpack.c.h.b16 %v2682
    %v2761 = vunpack.c.l.b16 %v2683
    %v2762 = vunpack.c.h.b16 %v2683
    %v2763 = vunpack.c.l.b16 %v2684
    %v2764 = vunpack.c.h.b16 %v2684
    %v2765 = vunpack.c.l.b16 %v2685
    %v2766 = vunpack.c.h.b16 %v2685
    %v2767 = vunpack.c.l.b16 %v2686
    %v2768 = vunpack.c.h.b16 %v2686
    %v2769 = vunpack.c.l.b16 %v2687
    %v2770 = vunpack.c.h.b16 %v2687
    %v2771 = vunpack.c.l.b16 %v2688
    %v2772 = vunpack.c.h.b16 %v2688
    %v2773 = vunpack.c.l.b16 %v2689
    %v2774 = vunpack.c.h.b16 %v2689
    %v2775 = vunpack.c.l.b16 %v2690
    %v2776 = vunpack.c.h.b16 %v2690
    %v2777 = vunpack.c.l.b16 %v2691
    %v2778 = vunpack.c.h.b16 %v2691
    %v2779 = vunpack.c.l.b16 %v2692
    %v2780 = vunpack.c.h.b16 %v2692
    %v2781 = vunpack.c.l.b16 %v2693
    %v2782 = vunpack.c.h.b16 %v2693
    %v2783 = vunpack.c.l.b16 %v2694
    %v2784 = vunpack.c.h.b16 %v2694
    %v2785 = vunpack.c.l.b16 %v2695
    %v2786 = vunpack.c.h.b16 %v2695
    %v2787 = vunpack.c.l.b16 %v2696
    %v2788 = vunpack.c.h.b16 %v2696
    %v2789 = vunpack.c.l.b16 %v2697
    %v2790 = vunpack.c.h.b16 %v2697
    %v2791 = vunpack.c.l.b16 %v2698
    %v2792 = vunpack.c.h.b16 %v2698
    %v2793 = vunpack.c.l.b16 %v2699
    %v2794 = vunpack.c.h.b16 %v2699
    %v2795 = vunpack.c.l.b16 %v2700
    %v2796 = vunpack.c.h.b16 %v2700
    %v2797 = vpack.c.b16 %v2737, %v2733
    %v2798 = vpack.c.b16 %v2738, %v2734
    %v2799 = vpack.c.b16 %v2739, %v2735
    %v2800 = vpack.c.b16 %v2740, %v2736
    %v2801 = vpack.c.b16 %v2745, %v2741
    %v2802 = vpack.c.b16 %v2746, %v2742
    %v2803 = vpack.c.b16 %v2747, %v2743
    %v2804 = vpack.c.b16 %v2748, %v2744
    %v2805 = vpack.c.b16 %v2753, %v2749
    %v2806 = vpack.c.b16 %v2754, %v2750
    %v2807 = vpack.c.b16 %v2755, %v2751
    %v2808 = vpack.c.b16 %v2756, %v2752
    %v2809 = vpack.c.b16 %v2761, %v2757
    %v2810 = vpack.c.b16 %v2762, %v2758
    %v2811 = vpack.c.b16 %v2763, %v2759
    %v2812 = vpack.c.b16 %v2764, %v2760
    %v2813 = vpack.c.b16 %v2769, %v2765
    %v2814 = vpack.c.b16 %v2770, %v2766
    %v2815 = vpack.c.b16 %v2771, %v2767
    %v2816 = vpack.c.b16 %v2772, %v2768
    %v2817 = vpack.c.b16 %v2777, %v2773
    %v2818 = vpack.c.b16 %v2778, %v2774
    %v2819 = vpack.c.b16 %v2779, %v2775
    %v2820 = vpack.c.b16 %v2780, %v2776
    %v2821 = vpack.c.b16 %v2785, %v2781
    %v2822 = vpack.c.b16 %v2786, %v2782
    %v2823 = vpack.c.b16 %v2787, %v2783
    %v2824 = vpack.c.b16 %v2788, %v2784
    %v2825 = vpack.c.b16 %v2793, %v2789
    %v2826 = vpack.c.b16 %v2794, %v2790
    %v2827 = vpack.c.b16 %v2795, %v2791
    %v2828 = vpack.c.b16 %v2796, %v2792
    %2861 = vmatprep.subr.bf16.mxu0 %v2826
    %2862 = vmatpush1.bf16.msra.mxu0 %v2825
    %2863 = vmatprep.subr.bf16.mxu0 %v2822
    %2864 = vmatpush1.bf16.msra.mxu0 %v2821
    %2865 = vmatprep.subr.bf16.mxu0 %v2818
    %2866 = vmatpush1.bf16.msra.mxu0 %v2817
    %2867 = vmatprep.subr.bf16.mxu0 %v2814
    %2868 = vmatpush1.bf16.msra.mxu0 %v2813
    %2869 = vmatprep.subr.bf16.mxu0 %v2810
    %2870 = vmatpush1.bf16.msra.mxu0 %v2809
    %2871 = vmatprep.subr.bf16.mxu0 %v2806
    %2872 = vmatpush1.bf16.msra.mxu0 %v2805
    %2873 = vmatprep.subr.bf16.mxu0 %v2802
    %2874 = vmatpush1.bf16.msra.mxu0 %v2801
    %2875 = vmatprep.subr.bf16.mxu0 %v2798
    %2876 = vmatpush1.bf16.msra.mxu0 %v2797
    %2877 = vmatprep.subr.bf16.mxu0 0
    %2878 = vmatpush2.bf16.msra.mxu0 0
    %2879 = vmatprep.subr.bf16.mxu0 0
    %2880 = vmatpush2.bf16.msra.mxu0 0
    %2881 = vmatprep.subr.bf16.mxu0 0
    %2882 = vmatpush2.bf16.msra.mxu0 0
    %2883 = vmatprep.subr.bf16.mxu0 0
    %2884 = vmatpush2.bf16.msra.mxu0 0
    %2885 = vmatprep.subr.bf16.mxu0 0
    %2886 = vmatpush2.bf16.msra.mxu0 0
    %2887 = vmatprep.subr.bf16.mxu0 0
    %2888 = vmatpush2.bf16.msra.mxu0 0
    %2889 = vmatprep.subr.bf16.mxu0 0
    %2890 = vmatpush2.bf16.msra.mxu0 0
    %2891 = vmatprep.subr.bf16.mxu0 0
    %2892 = vmatpush2.bf16.msra.mxu0 0
    %2893 = vmatprep.mubr.bf16.mxu0 0
    %2894 = vmatmul.mubr.bf16.gmra.mxu0 %v2668
    %v2895 = vpop.f32.mrf.mxu0
    %v2896 = vadd.f32 0.0, %v2895
    %v2897 = vpop.f32.mrf.mxu0
    %v2898 = vadd.f32 0.0, %v2897
    %v2899 = vpop.f32.mrf.mxu0
    %v2900 = vpop.f32.mrf.mxu0
    %2901 = vdwg.mxu0
    %2902 = vmatprep.subr.bf16.mxu0 %v2828
    %2903 = vmatpush1.bf16.msra.mxu0 %v2827
    %2904 = vmatprep.subr.bf16.mxu0 %v2824
    %2905 = vmatpush1.bf16.msra.mxu0 %v2823
    %2906 = vmatprep.subr.bf16.mxu0 %v2820
    %2907 = vmatpush1.bf16.msra.mxu0 %v2819
    %2908 = vmatprep.subr.bf16.mxu0 %v2816
    %2909 = vmatpush1.bf16.msra.mxu0 %v2815
    %2910 = vmatprep.subr.bf16.mxu0 %v2812
    %2911 = vmatpush1.bf16.msra.mxu0 %v2811
    %2912 = vmatprep.subr.bf16.mxu0 %v2808
    %2913 = vmatpush1.bf16.msra.mxu0 %v2807
    %2914 = vmatprep.subr.bf16.mxu0 %v2804
    %2915 = vmatpush1.bf16.msra.mxu0 %v2803
    %2916 = vmatprep.subr.bf16.mxu0 %v2800
    %2917 = vmatpush1.bf16.msra.mxu0 %v2799
    %2918 = vmatprep.subr.bf16.mxu0 0
    %2919 = vmatpush2.bf16.msra.mxu0 0
    %2920 = vmatprep.subr.bf16.mxu0 0
    %2921 = vmatpush2.bf16.msra.mxu0 0
    %2922 = vmatprep.subr.bf16.mxu0 0
    %2923 = vmatpush2.bf16.msra.mxu0 0
    %2924 = vmatprep.subr.bf16.mxu0 0
    %2925 = vmatpush2.bf16.msra.mxu0 0
    %2926 = vmatprep.subr.bf16.mxu0 0
    %2927 = vmatpush2.bf16.msra.mxu0 0
    %2928 = vmatprep.subr.bf16.mxu0 0
    %2929 = vmatpush2.bf16.msra.mxu0 0
    %2930 = vmatprep.subr.bf16.mxu0 0
    %2931 = vmatpush2.bf16.msra.mxu0 0
    %2932 = vmatprep.subr.bf16.mxu0 0
    %2933 = vmatpush2.bf16.msra.mxu0 0
    %2934 = vmatprep.mubr.bf16.mxu0 0
    %2935 = vmatmul.mubr.bf16.gmra.mxu0 %v2668
    %v2936 = vpop.f32.mrf.mxu0
    %v2937 = vadd.f32 0.0, %v2936
    %v2938 = vpop.f32.mrf.mxu0
    %v2939 = vadd.f32 0.0, %v2938
    %v2940 = vpop.f32.mrf.mxu0
    %v2941 = vpop.f32.mrf.mxu0
    %2942 = vdwg.mxu0
    %v2943 = vadd.f32 %v2664, %v2896
    %v2944 = vadd.f32 %v2665, %v2898
    %v2945 = vadd.f32 %v2666, %v2937
    %v2946 = vadd.f32 %v2667, %v2939
    %v2947 = vxor.u32 %v2943, 2147483648
    %v2948 = vmul.f32 %v2947, 1.442695
    %v2949 = vpow.pop %v2948
    %v2950 = vadd.f32 %v2949, 1.0
    %v2951 = vrcp.pop %v2950
    %v2952 = vmul.f32 1.0, %v2951
    %v2953 = vxor.u32 %v2944, 2147483648
    %v2954 = vmul.f32 %v2953, 1.442695
    %v2955 = vpow.pop %v2954
    %v2956 = vadd.f32 %v2955, 1.0
    %v2957 = vrcp.pop %v2956
    %v2958 = vmul.f32 1.0, %v2957
    %v2959 = vtanh.pop %v2945
    %v2960 = vxor.u32 %v2946, 2147483648
    %v2961 = vmul.f32 %v2960, 1.442695
    %v2962 = vpow.pop %v2961
    %v2963 = vadd.f32 %v2962, 1.0
    %v2964 = vrcp.pop %v2963
    %v2965 = vmul.f32 1.0, %v2964
    %v2966 = vmul.f32 %v2958, %v2654
    %v2967 = vmul.f32 %v2952, %v2959
    %v2968 = vadd.f32 %v2966, %v2967
    %v2969 = vtanh.pop %v2968
    %v2970 = vmul.f32 %v2965, %v2969
    %2971 = vst [vmem:[#allocation3] sm:$0xff] %v2970
    %2972 = vst [vmem:[#allocation4] sm:$0xff] %v2968
    // Predicated region
    $region34: #{tpu_custom_call.1} parent=1 // pred_check
      %p2973 = pneg %p38
    $region35: #{tpu_custom_call.1} parent=1 // pred_check_branch
      %2975 = sbr.rel (%p2973) target = $region37
    $region36: #{tpu_custom_call.1} parent=1 // pred_region
      %v2976 = vld [vmem:[#allocation3] sm:$0xff]
      %v2977 = vld [vmem:[%s4] sm:$0xff]
      %v2978 = vld [vmem:[%s4 + $0x8] sm:$0xff]
      %v2979 = vld [vmem:[%s4 + $0x10] sm:$0xff]
      %v2980 = vld [vmem:[%s4 + $0x18] sm:$0xff]
      %v2981 = vld [vmem:[%s4 + $0x20] sm:$0xff]
      %v2982 = vld [vmem:[%s4 + $0x28] sm:$0xff]
      %v2983 = vld [vmem:[%s4 + $0x30] sm:$0xff]
      %v2984 = vld [vmem:[%s4 + $0x38] sm:$0xff]
      %v2985 = vld [vmem:[%s4 + $0x40] sm:$0xff]
      %v2986 = vld [vmem:[%s4 + $0x48] sm:$0xff]
      %v2987 = vld [vmem:[%s4 + $0x50] sm:$0xff]
      %v2988 = vld [vmem:[%s4 + $0x58] sm:$0xff]
      %v2989 = vld [vmem:[%s4 + $0x60] sm:$0xff]
      %v2990 = vld [vmem:[%s4 + $0x68] sm:$0xff]
      %v2991 = vld [vmem:[%s4 + $0x70] sm:$0xff]
      %v2992 = vld [vmem:[%s4 + $0x78] sm:$0xff]
      %v2993 = vld [vmem:[%s5] sm:$0x1]
      %v2995 = vlaneseq
      %v2996 = vshrl.u32 %v2995, 7
      %v2997 = vsub.s32 0, %v2996
      %v2998 = vrot.slane %v2993, %v2997
      %3000 = vmatprep.subr.mxu0 0.0
      %3001 = vmatpush1.msra.mxu0 %v2992
      %3002 = vmatprep.subr.mxu0 0.0
      %3003 = vmatpush1.msra.mxu0 %v2991
      %3004 = vmatprep.subr.mxu0 0.0
      %3005 = vmatpush1.msra.mxu0 %v2990
      %3006 = vmatprep.subr.mxu0 0.0
      %3007 = vmatpush1.msra.mxu0 %v2989
      %3008 = vmatprep.subr.mxu0 0.0
      %3009 = vmatpush1.msra.mxu0 %v2988
      %3010 = vmatprep.subr.mxu0 0.0
      %3011 = vmatpush1.msra.mxu0 %v2987
      %3012 = vmatprep.subr.mxu0 0.0
      %3013 = vmatpush1.msra.mxu0 %v2986
      %3014 = vmatprep.subr.mxu0 0.0
      %3015 = vmatpush1.msra.mxu0 %v2985
      %3016 = vmatprep.subr.mxu0 0.0
      %3017 = vmatpush1.msra.mxu0 %v2984
      %3018 = vmatprep.subr.mxu0 0.0
      %3019 = vmatpush1.msra.mxu0 %v2983
      %3020 = vmatprep.subr.mxu0 0.0
      %3021 = vmatpush1.msra.mxu0 %v2982
      %3022 = vmatprep.subr.mxu0 0.0
      %3023 = vmatpush1.msra.mxu0 %v2981
      %3024 = vmatprep.subr.mxu0 0.0
      %3025 = vmatpush1.msra.mxu0 %v2980
      %3026 = vmatprep.subr.mxu0 0.0
      %3027 = vmatpush1.msra.mxu0 %v2979
      %3028 = vmatprep.subr.mxu0 0.0
      %3029 = vmatpush1.msra.mxu0 %v2978
      %3030 = vmatprep.subr.mxu0 0.0
      %3031 = vmatpush1.msra.mxu0 %v2977
      %3032 = vmatprep.subr.mxu0 0.0
      %3033 = vmatpush2.msra.mxu0 0.0
      %3034 = vmatprep.subr.mxu0 0.0
      %3035 = vmatpush2.msra.mxu0 0.0
      %3036 = vmatprep.subr.mxu0 0.0
      %3037 = vmatpush2.msra.mxu0 0.0
      %3038 = vmatprep.subr.mxu0 0.0
      %3039 = vmatpush2.msra.mxu0 0.0
      %3040 = vmatprep.subr.mxu0 0.0
      %3041 = vmatpush2.msra.mxu0 0.0
      %3042 = vmatprep.subr.mxu0 0.0
      %3043 = vmatpush2.msra.mxu0 0.0
      %3044 = vmatprep.subr.mxu0 0.0
      %3045 = vmatpush2.msra.mxu0 0.0
      %3046 = vmatprep.subr.mxu0 0.0
      %3047 = vmatpush2.msra.mxu0 0.0
      %3048 = vmatprep.subr.mxu0 0.0
      %3049 = vmatpush2.msra.mxu0 0.0
      %3050 = vmatprep.subr.mxu0 0.0
      %3051 = vmatpush2.msra.mxu0 0.0
      %3052 = vmatprep.subr.mxu0 0.0
      %3053 = vmatpush2.msra.mxu0 0.0
      %3054 = vmatprep.subr.mxu0 0.0
      %3055 = vmatpush2.msra.mxu0 0.0
      %3056 = vmatprep.subr.mxu0 0.0
      %3057 = vmatpush2.msra.mxu0 0.0
      %3058 = vmatprep.subr.mxu0 0.0
      %3059 = vmatpush2.msra.mxu0 0.0
      %3060 = vmatprep.subr.mxu0 0.0
      %3061 = vmatpush2.msra.mxu0 0.0
      %3062 = vmatprep.subr.mxu0 0.0
      %3063 = vmatpush2.msra.mxu0 0.0
      %3064 = vmatprep.mubr.f32.mxu0 0.0
      %3065 = vmatmul.mubr.f32.gmra.mxu0 %v2976
      %v3066 = vpop.f32.mrf.mxu0
      %v3067 = vadd.f32 %v2998, %v3066
      %v3068 = vpop.f32.mrf.mxu0
      %3069 = vdwg.mxu0
      %vm3070 = vcmask 15360
      %3071 = vst.msk [vmem:[%s6] sm:$0xff] %vm3070, %v3067
    $region37: #{tpu_custom_call.1} parent=1 // pred_fallthru
      _
    // Predicated region
    $region38: #{tpu_custom_call.1} parent=1 // pred_check
      _
    $region39: #{tpu_custom_call.1} parent=1 // pred_check_branch
      %3073 = sbr.rel (0) target = $region41
    $region40: #{tpu_custom_call.1} parent=1 // pred_region
      _
    $region41: #{tpu_custom_call.1} parent=1 // pred_fallthru
      _
    // Predicated region
    $region42: #{tpu_custom_call.1} parent=1 // pred_check
      _
    $region43: #{tpu_custom_call.1} parent=1 // pred_check_branch
      %3075 = sbr.rel (0) target = $region45
    $region44: #{tpu_custom_call.1} parent=1 // pred_region
      _
    $region45: #{tpu_custom_call.1} parent=1 // pred_fallthru
      _
    %3076 = vsyncpa [#allocation6], 1

</llo_original>
